<compile_context>
chip_gen: v7x
topology: tpu7x:2x2x1
jax: 0.10.0
libtpu: 0.0.40
codegen_flags: <defaults>
</compile_context>

<pallas_src>
import math
from functools import partial

import jax
import jax.numpy as jnp
from jax.experimental import pallas as pl
from jax.experimental.pallas import tpu as pltpu

# ---- scaled-down DistilBERT config (synthetic, deterministic) ----
VOCAB      = 64
MAX_POS    = 16
HIDDEN     = 32
N_HEADS    = 4
HEAD_DIM   = HIDDEN // N_HEADS
FFN_DIM    = 64
N_LAYERS   = 2
EMBED_DIM  = 16      # CLIP text-projection output dim
LN_EPS     = 1e-12   # DistilBERT LayerNorm eps
MASK_MIN   = float(jnp.finfo(jnp.float32).min)   # HF masking value
ATTN_SCALE = 1.0 / math.sqrt(HEAD_DIM)

# ---- packed-slab layout constants ----
# Per-layer weight slab: (W_ROWS, W_COLS); matrices placed side-by-side on the lane dim.
W_ROWS   = max(HIDDEN, FFN_DIM)                       # 64
_QKV_C0  = 0                                          # qkv_w  (H, 3H)   cols [0, 96)
_OW_C0   = 3 * HIDDEN                                 # o_w    (H, H)    cols [96, 128)
_F1_C0   = 4 * HIDDEN                                 # ffn1_w (H, FFN)  cols [128, 192)
_F2_C0   = 4 * HIDDEN + FFN_DIM                       # ffn2_w (FFN, H)  cols [192, 224)
W_COLS   = 256                                        # pad to a multiple of 128 lanes

# Per-layer bias/LN slab: (8, 128); one vector per row.
B_ROWS, B_COLS = 8, 128
# rows: 0 qkv_b | 1 o_b | 2 sa_ln_g | 3 sa_ln_b | 4 f1_b | 5 f2_b | 6 out_ln_g | 7 out_ln_b

# Misc slab: (MISC_ROWS, 128)
MISC_POS_ROW = 0                                      # pos_emb (MAX_POS, H)
MISC_EG_ROW  = MAX_POS                                # emb_ln gamma
MISC_EB_ROW  = MAX_POS + 1                            # emb_ln beta
MISC_PB_ROW  = MAX_POS + 2                            # proj bias (padded to 128 lanes)
MISC_PW_ROW  = ((MAX_POS + 3 + 7) // 8) * 8           # proj weight (H, 128-padded)
MISC_ROWS    = MISC_PW_ROW + HIDDEN
MISC_COLS    = 128
OUT_PAD      = 128                                    # lane-dense output width


# ---------------- in-kernel helpers ----------------

def _layernorm(h, g, b):
    """torch.nn.LayerNorm semantics: biased variance, eps=1e-12, stats in f32."""
    mean = jnp.mean(h, axis=-1, keepdims=True)
    var = jnp.mean(jnp.square(h - mean), axis=-1, keepdims=True)
    return (h - mean) * jax.lax.rsqrt(var + LN_EPS) * g + b


def _gelu(x):
    # TODO(synk): HF DistilBERT uses exact erf-GELU; tanh approximation kept for guaranteed
    # Mosaic (EUP tanh) lowering; max abs deviation ~1e-3 at these magnitudes.
    return jax.nn.gelu(x, approximate=True)


# ---------------- fused forward kernel ----------------

def _text_encoder_kernel(word_ref, mask_ref, wslab_ref, bslab_ref, misc_ref, out_ref,
                         *, num_layers):
    BT, S, H = word_ref.shape
    BTS = BT * S

    # ---- embeddings: word + positional (in-kernel), then embedding LayerNorm ----
    pos = misc_ref[MISC_POS_ROW:MISC_POS_ROW + S, 0:H]                       # (S, H)
    x = (word_ref[...] + pos[None, :, :]).reshape(BTS, H)
    eg = misc_ref[MISC_EG_ROW:MISC_EG_ROW + 1, 0:H]
    eb = misc_ref[MISC_EB_ROW:MISC_EB_ROW + 1, 0:H]
    x = _layernorm(x, eg, eb)                                                # (BTS, H)

    # ---- additive attention-mask bias, hoisted once for all layers/heads ----
    mask = mask_ref[...].reshape(BT, S)
    bias = jnp.where(mask > 0, jnp.float32(0.0), jnp.float32(MASK_MIN))      # (BT, S)
    # head-major batched bias: flat index = head * BT + batch
    bias_hb = jnp.broadcast_to(bias.reshape(1, BT, 1, S),
                               (N_HEADS, BT, S, S)).reshape(N_HEADS * BT, S, S)

    def split_heads(t2d):
        # (BTS, H) lane-major heads -> (N_HEADS*BT, S, HEAD_DIM) head-major batch
        return jnp.concatenate(
            [t2d[:, h * HEAD_DIM:(h + 1) * HEAD_DIM].reshape(BT, S, HEAD_DIM)
             for h in range(N_HEADS)], axis=0)

    # TODO(synk): for deeper models replace this static unroll with a layer grid axis
    # (streamed, double-buffered weights); at N_LAYERS=2 all weights stay VMEM-resident.
    for li in range(num_layers):
        qkv_w = wslab_ref[li, 0:HIDDEN, _QKV_C0:_QKV_C0 + 3 * HIDDEN]        # (H, 3H)
        o_w   = wslab_ref[li, 0:HIDDEN, _OW_C0:_OW_C0 + HIDDEN]              # (H, H)
        f1_w  = wslab_ref[li, 0:HIDDEN, _F1_C0:_F1_C0 + FFN_DIM]             # (H, FFN)
        f2_w  = wslab_ref[li, 0:FFN_DIM, _F2_C0:_F2_C0 + HIDDEN]             # (FFN, H)

        qkv_b = bslab_ref[li, 0:1, 0:3 * HIDDEN]
        o_b   = bslab_ref[li, 1:2, 0:HIDDEN]
        sa_g  = bslab_ref[li, 2:3, 0:HIDDEN]
        sa_b  = bslab_ref[li, 3:4, 0:HIDDEN]
        f1_b  = bslab_ref[li, 4:5, 0:FFN_DIM]
        f2_b  = bslab_ref[li, 5:6, 0:HIDDEN]
        og    = bslab_ref[li, 6:7, 0:HIDDEN]
        ob    = bslab_ref[li, 7:8, 0:HIDDEN]

        # ---- multi-head self-attention: ONE fused QKV matmul, heads batched ----
        qkv = jnp.dot(x, qkv_w, preferred_element_type=jnp.float32) + qkv_b  # (BTS, 3H)
        qh = split_heads(qkv[:, 0:HIDDEN] * ATTN_SCALE)                      # (NH*BT, S, D)
        kh = split_heads(qkv[:, HIDDEN:2 * HIDDEN])
        vh = split_heads(qkv[:, 2 * HIDDEN:3 * HIDDEN])

        scores = jnp.einsum("bqd,bkd->bqk", qh, kh,
                            preferred_element_type=jnp.float32) + bias_hb    # (NH*BT, S, S)
        smax = jnp.max(scores, axis=-1, keepdims=True)
        p = jnp.exp(scores - smax)
        wts = p * pl.reciprocal(jnp.sum(p, axis=-1, keepdims=True), approx=True)
        ctx = jnp.einsum("bqk,bkd->bqd", wts, vh,
                         preferred_element_type=jnp.float32)                 # (NH*BT, S, D)

        # merge heads back onto lanes (cheap placement), then ONE output-projection matmul
        ctx_cat = jnp.concatenate(
            [ctx[h * BT:(h + 1) * BT].reshape(BTS, HEAD_DIM) for h in range(N_HEADS)],
            axis=-1)                                                         # (BTS, H)
        attn = jnp.dot(ctx_cat, o_w, preferred_element_type=jnp.float32) + o_b
        x = _layernorm(attn + x, sa_g, sa_b)

        # ---- FFN ----
        h1 = _gelu(jnp.dot(x, f1_w, preferred_element_type=jnp.float32) + f1_b)
        h2 = jnp.dot(h1, f2_w, preferred_element_type=jnp.float32) + f2_b
        x = _layernorm(h2 + x, og, ob)

    # ---- CLS rows (token 0 of each sequence) -> text projection (lane-dense 128 store) ----
    cls = x.reshape(BT, S, H)[:, 0:1, :].reshape(BT, H)                      # (BT, H)
    proj_w = misc_ref[MISC_PW_ROW:MISC_PW_ROW + HIDDEN, :]                   # (H, 128) zero-padded
    proj_b = misc_ref[MISC_PB_ROW:MISC_PB_ROW + 1, :]                        # (1, 128) zero-padded
    out = jnp.dot(cls, proj_w, preferred_element_type=jnp.float32) + proj_b  # (BT, 128)
    out_ref[...] = out.reshape(BT, 1, OUT_PAD)


# ---------------- host-side weight packing (done once, outside the jitted forward) ----------------

def pack_params(params):
    nl = len(params["layers"])
    wslab = jnp.zeros((nl, W_ROWS, W_COLS), jnp.float32)
    bslab = jnp.zeros((nl, B_ROWS, B_COLS), jnp.float32)
    for li, lyr in enumerate(params["layers"]):
        wslab = wslab.at[li, 0:HIDDEN, _QKV_C0:_QKV_C0 + 3 * HIDDEN].set(lyr["qkv_w"])
        wslab = wslab.at[li, 0:HIDDEN, _OW_C0:_OW_C0 + HIDDEN].set(lyr["o_w"])
        wslab = wslab.at[li, 0:HIDDEN, _F1_C0:_F1_C0 + FFN_DIM].set(lyr["ffn1_w"])
        wslab = wslab.at[li, 0:FFN_DIM, _F2_C0:_F2_C0 + HIDDEN].set(lyr["ffn2_w"])
        bslab = bslab.at[li, 0, 0:3 * HIDDEN].set(lyr["qkv_b"])
        bslab = bslab.at[li, 1, 0:HIDDEN].set(lyr["o_b"])
        bslab = bslab.at[li, 2, 0:HIDDEN].set(lyr["sa_ln_g"])
        bslab = bslab.at[li, 3, 0:HIDDEN].set(lyr["sa_ln_b"])
        bslab = bslab.at[li, 4, 0:FFN_DIM].set(lyr["ffn1_b"])
        bslab = bslab.at[li, 5, 0:HIDDEN].set(lyr["ffn2_b"])
        bslab = bslab.at[li, 6, 0:HIDDEN].set(lyr["out_ln_g"])
        bslab = bslab.at[li, 7, 0:HIDDEN].set(lyr["out_ln_b"])
    misc = jnp.zeros((MISC_ROWS, MISC_COLS), jnp.float32)
    misc = misc.at[MISC_POS_ROW:MISC_POS_ROW + MAX_POS, 0:HIDDEN].set(params["pos_emb"])
    misc = misc.at[MISC_EG_ROW, 0:HIDDEN].set(params["emb_ln_g"])
    misc = misc.at[MISC_EB_ROW, 0:HIDDEN].set(params["emb_ln_b"])
    misc = misc.at[MISC_PB_ROW, 0:EMBED_DIM].set(params["proj_b"])
    misc = misc.at[MISC_PW_ROW:MISC_PW_ROW + HIDDEN, 0:EMBED_DIM].set(params["proj_w"])
    return wslab, bslab, misc


# ---------------- wrapper ----------------

def text_encoder_forward(word_emb, wslab, bslab, misc, input_ids, attention_mask,
                         *, batch_tile=2):
    """TextEncoder.forward: DistilBERT backbone + CLS + linear projection."""
    B, S = input_ids.shape
    assert B % batch_tile == 0 and S <= MAX_POS
    nl = wslab.shape[0]

    # Only the embedding gather stays in XLA; everything downstream is one fused pallas_call.
    word = jnp.take(word_emb, input_ids, axis=0).astype(jnp.float32)          # (B, S, H)
    mask3 = attention_mask.astype(jnp.int32).reshape(B, 1, S)                 # (B, 1, S)

    BT = batch_tile   # for real workloads pick BT so BT*S >= 128 to fill the MXU's M dim
    out = pl.pallas_call(
        partial(_text_encoder_kernel, num_layers=nl),
        grid=(B // BT,),
        out_shape=jax.ShapeDtypeStruct((B, 1, OUT_PAD), jnp.float32),
        in_specs=[
            pl.BlockSpec((BT, S, HIDDEN), lambda i: (i, 0, 0)),   # activations: tiled on batch
            pl.BlockSpec((BT, 1, S), lambda i: (i, 0, 0)),        # int mask: tiled on batch
            pl.BlockSpec(wslab.shape, lambda i: (0, 0, 0)),       # weight slab: one DMA, resident
            pl.BlockSpec(bslab.shape, lambda i: (0, 0, 0)),       # bias/LN slab: one DMA, resident
            pl.BlockSpec(misc.shape, lambda i: (0, 0)),           # pos/emb-LN/proj slab
        ],
        out_specs=pl.BlockSpec((BT, 1, OUT_PAD), lambda i: (i, 0, 0)),
        compiler_params=pltpu.CompilerParams(
            # batch tiles are independent -> "parallel" lets v7x's 2 TensorCores split them
            dimension_semantics=("parallel",)),
    )(word, mask3, wslab, bslab, misc)

    return out.reshape(B, OUT_PAD)[:, :EMBED_DIM]


# ---------------- deterministic parameter init ----------------

def init_params(key):
    def w(k, shape):
        return (0.02 * jax.random.normal(k, shape)).astype(jnp.float32)

    keys = jax.random.split(key, 3 + N_LAYERS)
    params = {
        "word_emb": w(keys[0], (VOCAB, HIDDEN)),
        "pos_emb":  w(keys[1], (MAX_POS, HIDDEN)),
        "emb_ln_g": jnp.ones((HIDDEN,), jnp.float32),
        "emb_ln_b": jnp.zeros((HIDDEN,), jnp.float32),
        "proj_w":   w(keys[2], (HIDDEN, EMBED_DIM)),
        "proj_b":   jnp.zeros((EMBED_DIM,), jnp.float32),
        "layers":   [],
    }
    for li in range(N_LAYERS):
        lk = jax.random.split(keys[3 + li], 4)
        zeros_h = jnp.zeros((HIDDEN,), jnp.float32)
        params["layers"].append({
            # q/k/v projections fused into a single (HIDDEN, 3*HIDDEN) weight -> one MXU pass
            "qkv_w": w(lk[0], (HIDDEN, 3 * HIDDEN)),
            "qkv_b": jnp.zeros((3 * HIDDEN,), jnp.float32),
            "o_w": w(lk[1], (HIDDEN, HIDDEN)), "o_b": zeros_h,
            "sa_ln_g": jnp.ones((HIDDEN,), jnp.float32), "sa_ln_b": zeros_h,
            "ffn1_w": w(lk[2], (HIDDEN, FFN_DIM)),
            "ffn1_b": jnp.zeros((FFN_DIM,), jnp.float32),
            "ffn2_w": w(lk[3], (FFN_DIM, HIDDEN)), "ffn2_b": zeros_h,
            "out_ln_g": jnp.ones((HIDDEN,), jnp.float32), "out_ln_b": zeros_h,
        })
    return params


if __name__ == "__main__":
    key = jax.random.PRNGKey(0)
    pkey, ikey = jax.random.split(key)
    params = init_params(pkey)
    wslab, bslab, misc = pack_params(params)          # pack once, outside the jitted forward

    B, S = 4, 8
    input_ids = jax.random.randint(ikey, (B, S), 0, VOCAB, dtype=jnp.int32)
    lengths = jnp.array([S, 5, 3, S], dtype=jnp.int32)
    attention_mask = (jnp.arange(S)[None, :] < lengths[:, None]).astype(jnp.int32)

    fwd = jax.jit(text_encoder_forward, static_argnames=("batch_tile",))
    emb = fwd(params["word_emb"], wslab, bslab, misc, input_ids, attention_mask, batch_tile=2)
    jax.block_until_ready(emb)
    assert emb.shape == (B, EMBED_DIM) and emb.dtype == jnp.float32
    assert bool(jnp.all(jnp.isfinite(emb)))
    print("KERNEL_OK")
</pallas_src>

<mosaic_0001>
module attributes {stable_mosaic.version = 11 : i64} {
  func.func @_text_encoder_kernel(%arg0: i32, %arg1: memref<2x8x32xf32, #tpu.memory_space<vmem>>, %arg2: memref<2x1x8xi32, #tpu.memory_space<vmem>>, %arg3: memref<2x64x256xf32, #tpu.memory_space<vmem>>, %arg4: memref<2x8x128xf32, #tpu.memory_space<vmem>>, %arg5: memref<56x128xf32, #tpu.memory_space<vmem>>, %arg6: memref<2x1x128xf32, #tpu.memory_space<vmem>>) attributes {dimension_semantics = [#tpu.dimension_semantics<parallel>], iteration_bounds = array<i64: 2>, scalar_prefetch = 0 : i64, scratch_operands = 0 : i64, tpu.core_type = #tpu.core_type<tc>, window_params = [{transform_indices = @transform_0, window_bounds = array<i64: 2, 8, 32>}, {transform_indices = @transform_1, window_bounds = array<i64: 2, 1, 8>}, {pipeline_mode = #tpu.pipeline_mode<synchronous>, transform_indices = @transform_2, window_bounds = array<i64: 2, 64, 256>}, {pipeline_mode = #tpu.pipeline_mode<synchronous>, transform_indices = @transform_3, window_bounds = array<i64: 2, 8, 128>}, {pipeline_mode = #tpu.pipeline_mode<synchronous>, transform_indices = @transform_4, window_bounds = array<i64: 56, 128>}, {transform_indices = @transform_5, window_bounds = array<i64: 2, 1, 128>}]} {
    %c0 = arith.constant 0 : index
    %c0_0 = arith.constant 0 : index
    %0 = vector.load %arg5[%c0, %c0_0] : memref<56x128xf32, #tpu.memory_space<vmem>>, vector<8x32xf32>
    %c0_1 = arith.constant 0 : index
    %c0_2 = arith.constant 0 : index
    %c0_3 = arith.constant 0 : index
    %1 = vector.load %arg1[%c0_1, %c0_2, %c0_3] : memref<2x8x32xf32, #tpu.memory_space<vmem>>, vector<2x8x32xf32>
    %2 = vector.shape_cast %0 : vector<8x32xf32> to vector<1x8x32xf32>
    %3 = vector.broadcast %2 : vector<1x8x32xf32> to vector<2x8x32xf32>
    %4 = arith.addf %1, %3 : vector<2x8x32xf32>
    %5 = vector.shape_cast %4 : vector<2x8x32xf32> to vector<16x32xf32>
    %c16 = arith.constant 16 : index
    %c0_4 = arith.constant 0 : index
    %6 = vector.load %arg5[%c16, %c0_4] : memref<56x128xf32, #tpu.memory_space<vmem>>, vector<1x32xf32>
    %c17 = arith.constant 17 : index
    %c0_5 = arith.constant 0 : index
    %7 = vector.load %arg5[%c17, %c0_5] : memref<56x128xf32, #tpu.memory_space<vmem>>, vector<1x32xf32>
    %cst = arith.constant dense<0.000000e+00> : vector<16xf32>
    %8 = vector.multi_reduction <add>, %5, %cst [1] : vector<16x32xf32> to vector<16xf32>
    %9 = vector.shape_cast %8 : vector<16xf32> to vector<16x1xf32>
    %cst_6 = arith.constant 3.200000e+01 : f32
    %10 = vector.broadcast %cst_6 : f32 to vector<16x1xf32>
    %11 = arith.divf %9, %10 : vector<16x1xf32>
    %12 = vector.broadcast %11 : vector<16x1xf32> to vector<16x32xf32>
    %13 = arith.subf %5, %12 : vector<16x32xf32>
    %14 = arith.mulf %13, %13 : vector<16x32xf32>
    %cst_7 = arith.constant dense<0.000000e+00> : vector<16xf32>
    %15 = vector.multi_reduction <add>, %14, %cst_7 [1] : vector<16x32xf32> to vector<16xf32>
    %16 = vector.shape_cast %15 : vector<16xf32> to vector<16x1xf32>
    %cst_8 = arith.constant 3.200000e+01 : f32
    %17 = vector.broadcast %cst_8 : f32 to vector<16x1xf32>
    %18 = arith.divf %16, %17 : vector<16x1xf32>
    %19 = vector.broadcast %11 : vector<16x1xf32> to vector<16x32xf32>
    %20 = arith.subf %5, %19 : vector<16x32xf32>
    %cst_9 = arith.constant 9.99999996E-13 : f32
    %21 = vector.broadcast %cst_9 : f32 to vector<16x1xf32>
    %22 = arith.addf %18, %21 : vector<16x1xf32>
    %23 = math.rsqrt %22 : vector<16x1xf32>
    %24 = vector.broadcast %23 : vector<16x1xf32> to vector<16x32xf32>
    %25 = arith.mulf %20, %24 : vector<16x32xf32>
    %26 = vector.broadcast %6 : vector<1x32xf32> to vector<16x32xf32>
    %27 = arith.mulf %25, %26 : vector<16x32xf32>
    %28 = vector.broadcast %7 : vector<1x32xf32> to vector<16x32xf32>
    %29 = arith.addf %27, %28 : vector<16x32xf32>
    %c0_10 = arith.constant 0 : index
    %c0_11 = arith.constant 0 : index
    %c0_12 = arith.constant 0 : index
    %30 = vector.load %arg2[%c0_10, %c0_11, %c0_12] : memref<2x1x8xi32, #tpu.memory_space<vmem>>, vector<2x1x8xi32>
    %31 = vector.shape_cast %30 : vector<2x1x8xi32> to vector<2x8xi32>
    %c0_i32 = arith.constant 0 : i32
    %32 = vector.broadcast %c0_i32 : i32 to vector<2x8xi32>
    %33 = arith.cmpi sgt, %31, %32 : vector<2x8xi32>
    %cst_13 = arith.constant 0.000000e+00 : f32
    %cst_14 = arith.constant -3.40282347E+38 : f32
    %34 = vector.broadcast %cst_13 : f32 to vector<2x8xf32>
    %35 = vector.broadcast %cst_14 : f32 to vector<2x8xf32>
    %36 = arith.select %33, %34, %35 : vector<2x8xi1>, vector<2x8xf32>
    %37 = vector.shape_cast %36 : vector<2x8xf32> to vector<1x2x1x8xf32>
    %38 = vector.shape_cast %37 : vector<1x2x1x8xf32> to vector<1x2x1x8xf32>
    %39 = vector.broadcast %38 : vector<1x2x1x8xf32> to vector<4x2x8x8xf32>
    %40 = vector.shape_cast %39 : vector<4x2x8x8xf32> to vector<8x8x8xf32>
    %c0_15 = arith.constant 0 : index
    %c0_16 = arith.constant 0 : index
    %c0_17 = arith.constant 0 : index
    %41 = vector.load %arg3[%c0_15, %c0_16, %c0_17] : memref<2x64x256xf32, #tpu.memory_space<vmem>>, vector<1x32x96xf32>
    %42 = vector.shape_cast %41 : vector<1x32x96xf32> to vector<32x96xf32>
    %c0_18 = arith.constant 0 : index
    %c0_19 = arith.constant 0 : index
    %c96 = arith.constant 96 : index
    %43 = vector.load %arg3[%c0_18, %c0_19, %c96] : memref<2x64x256xf32, #tpu.memory_space<vmem>>, vector<1x32x32xf32>
    %44 = vector.shape_cast %43 : vector<1x32x32xf32> to vector<32x32xf32>
    %c0_20 = arith.constant 0 : index
    %c0_21 = arith.constant 0 : index
    %c128 = arith.constant 128 : index
    %45 = vector.load %arg3[%c0_20, %c0_21, %c128] : memref<2x64x256xf32, #tpu.memory_space<vmem>>, vector<1x32x64xf32>
    %46 = vector.shape_cast %45 : vector<1x32x64xf32> to vector<32x64xf32>
    %c0_22 = arith.constant 0 : index
    %c0_23 = arith.constant 0 : index
    %c192 = arith.constant 192 : index
    %47 = vector.load %arg3[%c0_22, %c0_23, %c192] : memref<2x64x256xf32, #tpu.memory_space<vmem>>, vector<1x64x32xf32>
    %48 = vector.shape_cast %47 : vector<1x64x32xf32> to vector<64x32xf32>
    %c0_24 = arith.constant 0 : index
    %c0_25 = arith.constant 0 : index
    %c0_26 = arith.constant 0 : index
    %49 = vector.load %arg4[%c0_24, %c0_25, %c0_26] : memref<2x8x128xf32, #tpu.memory_space<vmem>>, vector<1x1x96xf32>
    %50 = vector.shape_cast %49 : vector<1x1x96xf32> to vector<1x96xf32>
    %c0_27 = arith.constant 0 : index
    %c1 = arith.constant 1 : index
    %c0_28 = arith.constant 0 : index
    %51 = vector.load %arg4[%c0_27, %c1, %c0_28] : memref<2x8x128xf32, #tpu.memory_space<vmem>>, vector<1x1x32xf32>
    %52 = vector.shape_cast %51 : vector<1x1x32xf32> to vector<1x32xf32>
    %c0_29 = arith.constant 0 : index
    %c2 = arith.constant 2 : index
    %c0_30 = arith.constant 0 : index
    %53 = vector.load %arg4[%c0_29, %c2, %c0_30] : memref<2x8x128xf32, #tpu.memory_space<vmem>>, vector<1x1x32xf32>
    %54 = vector.shape_cast %53 : vector<1x1x32xf32> to vector<1x32xf32>
    %c0_31 = arith.constant 0 : index
    %c3 = arith.constant 3 : index
    %c0_32 = arith.constant 0 : index
    %55 = vector.load %arg4[%c0_31, %c3, %c0_32] : memref<2x8x128xf32, #tpu.memory_space<vmem>>, vector<1x1x32xf32>
    %56 = vector.shape_cast %55 : vector<1x1x32xf32> to vector<1x32xf32>
    %c0_33 = arith.constant 0 : index
    %c4 = arith.constant 4 : index
    %c0_34 = arith.constant 0 : index
    %57 = vector.load %arg4[%c0_33, %c4, %c0_34] : memref<2x8x128xf32, #tpu.memory_space<vmem>>, vector<1x1x64xf32>
    %58 = vector.shape_cast %57 : vector<1x1x64xf32> to vector<1x64xf32>
    %c0_35 = arith.constant 0 : index
    %c5 = arith.constant 5 : index
    %c0_36 = arith.constant 0 : index
    %59 = vector.load %arg4[%c0_35, %c5, %c0_36] : memref<2x8x128xf32, #tpu.memory_space<vmem>>, vector<1x1x32xf32>
    %60 = vector.shape_cast %59 : vector<1x1x32xf32> to vector<1x32xf32>
    %c0_37 = arith.constant 0 : index
    %c6 = arith.constant 6 : index
    %c0_38 = arith.constant 0 : index
    %61 = vector.load %arg4[%c0_37, %c6, %c0_38] : memref<2x8x128xf32, #tpu.memory_space<vmem>>, vector<1x1x32xf32>
    %62 = vector.shape_cast %61 : vector<1x1x32xf32> to vector<1x32xf32>
    %c0_39 = arith.constant 0 : index
    %c7 = arith.constant 7 : index
    %c0_40 = arith.constant 0 : index
    %63 = vector.load %arg4[%c0_39, %c7, %c0_40] : memref<2x8x128xf32, #tpu.memory_space<vmem>>, vector<1x1x32xf32>
    %64 = vector.shape_cast %63 : vector<1x1x32xf32> to vector<1x32xf32>
    %cst_41 = arith.constant dense<0.000000e+00> : vector<16x96xf32>
    %65 = tpu.matmul %29, %42, %cst_41 {dimension_numbers = #tpu.dot_dimension_numbers<[1], [0], [0], [1], [0, 0, 1, 1], [], []>} : vector<16x32xf32>, vector<32x96xf32>, vector<16x96xf32> -> vector<16x96xf32>
    %66 = vector.broadcast %50 : vector<1x96xf32> to vector<16x96xf32>
    %67 = arith.addf %65, %66 : vector<16x96xf32>
    %68 = vector.extract_strided_slice %67 {offsets = [0, 0], sizes = [16, 32], strides = [1, 1]} : vector<16x96xf32> to vector<16x32xf32>
    %cst_42 = arith.constant 0.353553385 : f32
    %69 = vector.broadcast %cst_42 : f32 to vector<16x32xf32>
    %70 = arith.mulf %68, %69 : vector<16x32xf32>
    %71 = vector.extract_strided_slice %70 {offsets = [0, 0], sizes = [16, 8], strides = [1, 1]} : vector<16x32xf32> to vector<16x8xf32>
    %72 = vector.shape_cast %71 : vector<16x8xf32> to vector<2x8x8xf32>
    %73 = vector.extract_strided_slice %70 {offsets = [0, 8], sizes = [16, 8], strides = [1, 1]} : vector<16x32xf32> to vector<16x8xf32>
    %74 = vector.shape_cast %73 : vector<16x8xf32> to vector<2x8x8xf32>
    %75 = vector.extract_strided_slice %70 {offsets = [0, 16], sizes = [16, 8], strides = [1, 1]} : vector<16x32xf32> to vector<16x8xf32>
    %76 = vector.shape_cast %75 : vector<16x8xf32> to vector<2x8x8xf32>
    %77 = vector.extract_strided_slice %70 {offsets = [0, 24], sizes = [16, 8], strides = [1, 1]} : vector<16x32xf32> to vector<16x8xf32>
    %78 = vector.shape_cast %77 : vector<16x8xf32> to vector<2x8x8xf32>
    %79 = tpu.concatenate %72, %74, %76, %78 in 0 : vector<2x8x8xf32>, vector<2x8x8xf32>, vector<2x8x8xf32>, vector<2x8x8xf32> -> vector<8x8x8xf32>
    %80 = vector.extract_strided_slice %67 {offsets = [0, 32], sizes = [16, 32], strides = [1, 1]} : vector<16x96xf32> to vector<16x32xf32>
    %81 = vector.extract_strided_slice %80 {offsets = [0, 0], sizes = [16, 8], strides = [1, 1]} : vector<16x32xf32> to vector<16x8xf32>
    %82 = vector.shape_cast %81 : vector<16x8xf32> to vector<2x8x8xf32>
    %83 = vector.extract_strided_slice %80 {offsets = [0, 8], sizes = [16, 8], strides = [1, 1]} : vector<16x32xf32> to vector<16x8xf32>
    %84 = vector.shape_cast %83 : vector<16x8xf32> to vector<2x8x8xf32>
    %85 = vector.extract_strided_slice %80 {offsets = [0, 16], sizes = [16, 8], strides = [1, 1]} : vector<16x32xf32> to vector<16x8xf32>
    %86 = vector.shape_cast %85 : vector<16x8xf32> to vector<2x8x8xf32>
    %87 = vector.extract_strided_slice %80 {offsets = [0, 24], sizes = [16, 8], strides = [1, 1]} : vector<16x32xf32> to vector<16x8xf32>
    %88 = vector.shape_cast %87 : vector<16x8xf32> to vector<2x8x8xf32>
    %89 = tpu.concatenate %82, %84, %86, %88 in 0 : vector<2x8x8xf32>, vector<2x8x8xf32>, vector<2x8x8xf32>, vector<2x8x8xf32> -> vector<8x8x8xf32>
    %90 = vector.extract_strided_slice %67 {offsets = [0, 64], sizes = [16, 32], strides = [1, 1]} : vector<16x96xf32> to vector<16x32xf32>
    %91 = vector.extract_strided_slice %90 {offsets = [0, 0], sizes = [16, 8], strides = [1, 1]} : vector<16x32xf32> to vector<16x8xf32>
    %92 = vector.shape_cast %91 : vector<16x8xf32> to vector<2x8x8xf32>
    %93 = vector.extract_strided_slice %90 {offsets = [0, 8], sizes = [16, 8], strides = [1, 1]} : vector<16x32xf32> to vector<16x8xf32>
    %94 = vector.shape_cast %93 : vector<16x8xf32> to vector<2x8x8xf32>
    %95 = vector.extract_strided_slice %90 {offsets = [0, 16], sizes = [16, 8], strides = [1, 1]} : vector<16x32xf32> to vector<16x8xf32>
    %96 = vector.shape_cast %95 : vector<16x8xf32> to vector<2x8x8xf32>
    %97 = vector.extract_strided_slice %90 {offsets = [0, 24], sizes = [16, 8], strides = [1, 1]} : vector<16x32xf32> to vector<16x8xf32>
    %98 = vector.shape_cast %97 : vector<16x8xf32> to vector<2x8x8xf32>
    %99 = tpu.concatenate %92, %94, %96, %98 in 0 : vector<2x8x8xf32>, vector<2x8x8xf32>, vector<2x8x8xf32>, vector<2x8x8xf32> -> vector<8x8x8xf32>
    "tpu.trace_start"() <{level = 10 : i32, message = "bqd,bkd->bqk"}> : () -> ()
    %cst_43 = arith.constant dense<0.000000e+00> : vector<8x8x8xf32>
    %100 = tpu.matmul %79, %89, %cst_43 {dimension_numbers = #tpu.dot_dimension_numbers<[2], [2], [1], [1], [0, 0, 0, 1, 1, 1], [0], [0]>} : vector<8x8x8xf32>, vector<8x8x8xf32>, vector<8x8x8xf32> -> vector<8x8x8xf32>
    "tpu.trace_stop"() : () -> ()
    %101 = arith.addf %100, %40 : vector<8x8x8xf32>
    %cst_44 = arith.constant dense<0xFF800000> : vector<8x8xf32>
    %102 = vector.multi_reduction <maximumf>, %101, %cst_44 [2] : vector<8x8x8xf32> to vector<8x8xf32>
    %103 = vector.shape_cast %102 : vector<8x8xf32> to vector<8x8x1xf32>
    %104 = vector.broadcast %103 : vector<8x8x1xf32> to vector<8x8x8xf32>
    %105 = arith.subf %101, %104 : vector<8x8x8xf32>
    %106 = math.exp %105 : vector<8x8x8xf32>
    %cst_45 = arith.constant dense<0.000000e+00> : vector<8x8xf32>
    %107 = vector.multi_reduction <add>, %106, %cst_45 [2] : vector<8x8x8xf32> to vector<8x8xf32>
    %108 = vector.shape_cast %107 : vector<8x8xf32> to vector<8x8x1xf32>
    %109 = tpu.reciprocal %108 {approx = true} : vector<8x8x1xf32> -> vector<8x8x1xf32>
    %110 = vector.broadcast %109 : vector<8x8x1xf32> to vector<8x8x8xf32>
    %111 = arith.mulf %106, %110 : vector<8x8x8xf32>
    "tpu.trace_start"() <{level = 10 : i32, message = "bqk,bkd->bqd"}> : () -> ()
    %cst_46 = arith.constant dense<0.000000e+00> : vector<8x8x8xf32>
    %112 = tpu.matmul %111, %99, %cst_46 {dimension_numbers = #tpu.dot_dimension_numbers<[2], [1], [1], [2], [0, 0, 0, 1, 1, 2], [0], [0]>} : vector<8x8x8xf32>, vector<8x8x8xf32>, vector<8x8x8xf32> -> vector<8x8x8xf32>
    "tpu.trace_stop"() : () -> ()
    %113 = vector.extract_strided_slice %112 {offsets = [0, 0, 0], sizes = [2, 8, 8], strides = [1, 1, 1]} : vector<8x8x8xf32> to vector<2x8x8xf32>
    %114 = vector.shape_cast %113 : vector<2x8x8xf32> to vector<16x8xf32>
    %115 = vector.extract_strided_slice %112 {offsets = [2, 0, 0], sizes = [2, 8, 8], strides = [1, 1, 1]} : vector<8x8x8xf32> to vector<2x8x8xf32>
    %116 = vector.shape_cast %115 : vector<2x8x8xf32> to vector<16x8xf32>
    %117 = vector.extract_strided_slice %112 {offsets = [4, 0, 0], sizes = [2, 8, 8], strides = [1, 1, 1]} : vector<8x8x8xf32> to vector<2x8x8xf32>
    %118 = vector.shape_cast %117 : vector<2x8x8xf32> to vector<16x8xf32>
    %119 = vector.extract_strided_slice %112 {offsets = [6, 0, 0], sizes = [2, 8, 8], strides = [1, 1, 1]} : vector<8x8x8xf32> to vector<2x8x8xf32>
    %120 = vector.shape_cast %119 : vector<2x8x8xf32> to vector<16x8xf32>
    %121 = tpu.concatenate %114, %116, %118, %120 in 1 : vector<16x8xf32>, vector<16x8xf32>, vector<16x8xf32>, vector<16x8xf32> -> vector<16x32xf32>
    %cst_47 = arith.constant dense<0.000000e+00> : vector<16x32xf32>
    %122 = tpu.matmul %121, %44, %cst_47 {dimension_numbers = #tpu.dot_dimension_numbers<[1], [0], [0], [1], [0, 0, 1, 1], [], []>} : vector<16x32xf32>, vector<32x32xf32>, vector<16x32xf32> -> vector<16x32xf32>
    %123 = vector.broadcast %52 : vector<1x32xf32> to vector<16x32xf32>
    %124 = arith.addf %122, %123 : vector<16x32xf32>
    %125 = arith.addf %124, %29 : vector<16x32xf32>
    %cst_48 = arith.constant dense<0.000000e+00> : vector<16xf32>
    %126 = vector.multi_reduction <add>, %125, %cst_48 [1] : vector<16x32xf32> to vector<16xf32>
    %127 = vector.shape_cast %126 : vector<16xf32> to vector<16x1xf32>
    %cst_49 = arith.constant 3.200000e+01 : f32
    %128 = vector.broadcast %cst_49 : f32 to vector<16x1xf32>
    %129 = arith.divf %127, %128 : vector<16x1xf32>
    %130 = vector.broadcast %129 : vector<16x1xf32> to vector<16x32xf32>
    %131 = arith.subf %125, %130 : vector<16x32xf32>
    %132 = arith.mulf %131, %131 : vector<16x32xf32>
    %cst_50 = arith.constant dense<0.000000e+00> : vector<16xf32>
    %133 = vector.multi_reduction <add>, %132, %cst_50 [1] : vector<16x32xf32> to vector<16xf32>
    %134 = vector.shape_cast %133 : vector<16xf32> to vector<16x1xf32>
    %cst_51 = arith.constant 3.200000e+01 : f32
    %135 = vector.broadcast %cst_51 : f32 to vector<16x1xf32>
    %136 = arith.divf %134, %135 : vector<16x1xf32>
    %137 = vector.broadcast %129 : vector<16x1xf32> to vector<16x32xf32>
    %138 = arith.subf %125, %137 : vector<16x32xf32>
    %cst_52 = arith.constant 9.99999996E-13 : f32
    %139 = vector.broadcast %cst_52 : f32 to vector<16x1xf32>
    %140 = arith.addf %136, %139 : vector<16x1xf32>
    %141 = math.rsqrt %140 : vector<16x1xf32>
    %142 = vector.broadcast %141 : vector<16x1xf32> to vector<16x32xf32>
    %143 = arith.mulf %138, %142 : vector<16x32xf32>
    %144 = vector.broadcast %54 : vector<1x32xf32> to vector<16x32xf32>
    %145 = arith.mulf %143, %144 : vector<16x32xf32>
    %146 = vector.broadcast %56 : vector<1x32xf32> to vector<16x32xf32>
    %147 = arith.addf %145, %146 : vector<16x32xf32>
    %cst_53 = arith.constant dense<0.000000e+00> : vector<16x64xf32>
    %148 = tpu.matmul %147, %46, %cst_53 {dimension_numbers = #tpu.dot_dimension_numbers<[1], [0], [0], [1], [0, 0, 1, 1], [], []>} : vector<16x32xf32>, vector<32x64xf32>, vector<16x64xf32> -> vector<16x64xf32>
    %149 = vector.broadcast %58 : vector<1x64xf32> to vector<16x64xf32>
    %150 = arith.addf %148, %149 : vector<16x64xf32>
    %151 = arith.mulf %150, %150 : vector<16x64xf32>
    %152 = arith.mulf %150, %151 : vector<16x64xf32>
    %cst_54 = arith.constant 4.471500e-02 : f32
    %153 = vector.broadcast %cst_54 : f32 to vector<16x64xf32>
    %154 = arith.mulf %153, %152 : vector<16x64xf32>
    %155 = arith.addf %150, %154 : vector<16x64xf32>
    %cst_55 = arith.constant 0.797884583 : f32
    %156 = vector.broadcast %cst_55 : f32 to vector<16x64xf32>
    %157 = arith.mulf %156, %155 : vector<16x64xf32>
    %158 = math.tanh %157 : vector<16x64xf32>
    %cst_56 = arith.constant 1.000000e+00 : f32
    %159 = vector.broadcast %cst_56 : f32 to vector<16x64xf32>
    %160 = arith.addf %159, %158 : vector<16x64xf32>
    %cst_57 = arith.constant 5.000000e-01 : f32
    %161 = vector.broadcast %cst_57 : f32 to vector<16x64xf32>
    %162 = arith.mulf %161, %160 : vector<16x64xf32>
    %163 = arith.mulf %150, %162 : vector<16x64xf32>
    %cst_58 = arith.constant dense<0.000000e+00> : vector<16x32xf32>
    %164 = tpu.matmul %163, %48, %cst_58 {dimension_numbers = #tpu.dot_dimension_numbers<[1], [0], [0], [1], [0, 0, 1, 1], [], []>} : vector<16x64xf32>, vector<64x32xf32>, vector<16x32xf32> -> vector<16x32xf32>
    %165 = vector.broadcast %60 : vector<1x32xf32> to vector<16x32xf32>
    %166 = arith.addf %164, %165 : vector<16x32xf32>
    %167 = arith.addf %166, %147 : vector<16x32xf32>
    %cst_59 = arith.constant dense<0.000000e+00> : vector<16xf32>
    %168 = vector.multi_reduction <add>, %167, %cst_59 [1] : vector<16x32xf32> to vector<16xf32>
    %169 = vector.shape_cast %168 : vector<16xf32> to vector<16x1xf32>
    %cst_60 = arith.constant 3.200000e+01 : f32
    %170 = vector.broadcast %cst_60 : f32 to vector<16x1xf32>
    %171 = arith.divf %169, %170 : vector<16x1xf32>
    %172 = vector.broadcast %171 : vector<16x1xf32> to vector<16x32xf32>
    %173 = arith.subf %167, %172 : vector<16x32xf32>
    %174 = arith.mulf %173, %173 : vector<16x32xf32>
    %cst_61 = arith.constant dense<0.000000e+00> : vector<16xf32>
    %175 = vector.multi_reduction <add>, %174, %cst_61 [1] : vector<16x32xf32> to vector<16xf32>
    %176 = vector.shape_cast %175 : vector<16xf32> to vector<16x1xf32>
    %cst_62 = arith.constant 3.200000e+01 : f32
    %177 = vector.broadcast %cst_62 : f32 to vector<16x1xf32>
    %178 = arith.divf %176, %177 : vector<16x1xf32>
    %179 = vector.broadcast %171 : vector<16x1xf32> to vector<16x32xf32>
    %180 = arith.subf %167, %179 : vector<16x32xf32>
    %cst_63 = arith.constant 9.99999996E-13 : f32
    %181 = vector.broadcast %cst_63 : f32 to vector<16x1xf32>
    %182 = arith.addf %178, %181 : vector<16x1xf32>
    %183 = math.rsqrt %182 : vector<16x1xf32>
    %184 = vector.broadcast %183 : vector<16x1xf32> to vector<16x32xf32>
    %185 = arith.mulf %180, %184 : vector<16x32xf32>
    %186 = vector.broadcast %62 : vector<1x32xf32> to vector<16x32xf32>
    %187 = arith.mulf %185, %186 : vector<16x32xf32>
    %188 = vector.broadcast %64 : vector<1x32xf32> to vector<16x32xf32>
    %189 = arith.addf %187, %188 : vector<16x32xf32>
    %c1_64 = arith.constant 1 : index
    %c0_65 = arith.constant 0 : index
    %c0_66 = arith.constant 0 : index
    %190 = vector.load %arg3[%c1_64, %c0_65, %c0_66] : memref<2x64x256xf32, #tpu.memory_space<vmem>>, vector<1x32x96xf32>
    %191 = vector.shape_cast %190 : vector<1x32x96xf32> to vector<32x96xf32>
    %c1_67 = arith.constant 1 : index
    %c0_68 = arith.constant 0 : index
    %c96_69 = arith.constant 96 : index
    %192 = vector.load %arg3[%c1_67, %c0_68, %c96_69] : memref<2x64x256xf32, #tpu.memory_space<vmem>>, vector<1x32x32xf32>
    %193 = vector.shape_cast %192 : vector<1x32x32xf32> to vector<32x32xf32>
    %c1_70 = arith.constant 1 : index
    %c0_71 = arith.constant 0 : index
    %c128_72 = arith.constant 128 : index
    %194 = vector.load %arg3[%c1_70, %c0_71, %c128_72] : memref<2x64x256xf32, #tpu.memory_space<vmem>>, vector<1x32x64xf32>
    %195 = vector.shape_cast %194 : vector<1x32x64xf32> to vector<32x64xf32>
    %c1_73 = arith.constant 1 : index
    %c0_74 = arith.constant 0 : index
    %c192_75 = arith.constant 192 : index
    %196 = vector.load %arg3[%c1_73, %c0_74, %c192_75] : memref<2x64x256xf32, #tpu.memory_space<vmem>>, vector<1x64x32xf32>
    %197 = vector.shape_cast %196 : vector<1x64x32xf32> to vector<64x32xf32>
    %c1_76 = arith.constant 1 : index
    %c0_77 = arith.constant 0 : index
    %c0_78 = arith.constant 0 : index
    %198 = vector.load %arg4[%c1_76, %c0_77, %c0_78] : memref<2x8x128xf32, #tpu.memory_space<vmem>>, vector<1x1x96xf32>
    %199 = vector.shape_cast %198 : vector<1x1x96xf32> to vector<1x96xf32>
    %c1_79 = arith.constant 1 : index
    %c1_80 = arith.constant 1 : index
    %c0_81 = arith.constant 0 : index
    %200 = vector.load %arg4[%c1_79, %c1_80, %c0_81] : memref<2x8x128xf32, #tpu.memory_space<vmem>>, vector<1x1x32xf32>
    %201 = vector.shape_cast %200 : vector<1x1x32xf32> to vector<1x32xf32>
    %c1_82 = arith.constant 1 : index
    %c2_83 = arith.constant 2 : index
    %c0_84 = arith.constant 0 : index
    %202 = vector.load %arg4[%c1_82, %c2_83, %c0_84] : memref<2x8x128xf32, #tpu.memory_space<vmem>>, vector<1x1x32xf32>
    %203 = vector.shape_cast %202 : vector<1x1x32xf32> to vector<1x32xf32>
    %c1_85 = arith.constant 1 : index
    %c3_86 = arith.constant 3 : index
    %c0_87 = arith.constant 0 : index
    %204 = vector.load %arg4[%c1_85, %c3_86, %c0_87] : memref<2x8x128xf32, #tpu.memory_space<vmem>>, vector<1x1x32xf32>
    %205 = vector.shape_cast %204 : vector<1x1x32xf32> to vector<1x32xf32>
    %c1_88 = arith.constant 1 : index
    %c4_89 = arith.constant 4 : index
    %c0_90 = arith.constant 0 : index
    %206 = vector.load %arg4[%c1_88, %c4_89, %c0_90] : memref<2x8x128xf32, #tpu.memory_space<vmem>>, vector<1x1x64xf32>
    %207 = vector.shape_cast %206 : vector<1x1x64xf32> to vector<1x64xf32>
    %c1_91 = arith.constant 1 : index
    %c5_92 = arith.constant 5 : index
    %c0_93 = arith.constant 0 : index
    %208 = vector.load %arg4[%c1_91, %c5_92, %c0_93] : memref<2x8x128xf32, #tpu.memory_space<vmem>>, vector<1x1x32xf32>
    %209 = vector.shape_cast %208 : vector<1x1x32xf32> to vector<1x32xf32>
    %c1_94 = arith.constant 1 : index
    %c6_95 = arith.constant 6 : index
    %c0_96 = arith.constant 0 : index
    %210 = vector.load %arg4[%c1_94, %c6_95, %c0_96] : memref<2x8x128xf32, #tpu.memory_space<vmem>>, vector<1x1x32xf32>
    %211 = vector.shape_cast %210 : vector<1x1x32xf32> to vector<1x32xf32>
    %c1_97 = arith.constant 1 : index
    %c7_98 = arith.constant 7 : index
    %c0_99 = arith.constant 0 : index
    %212 = vector.load %arg4[%c1_97, %c7_98, %c0_99] : memref<2x8x128xf32, #tpu.memory_space<vmem>>, vector<1x1x32xf32>
    %213 = vector.shape_cast %212 : vector<1x1x32xf32> to vector<1x32xf32>
    %cst_100 = arith.constant dense<0.000000e+00> : vector<16x96xf32>
    %214 = tpu.matmul %189, %191, %cst_100 {dimension_numbers = #tpu.dot_dimension_numbers<[1], [0], [0], [1], [0, 0, 1, 1], [], []>} : vector<16x32xf32>, vector<32x96xf32>, vector<16x96xf32> -> vector<16x96xf32>
    %215 = vector.broadcast %199 : vector<1x96xf32> to vector<16x96xf32>
    %216 = arith.addf %214, %215 : vector<16x96xf32>
    %217 = vector.extract_strided_slice %216 {offsets = [0, 0], sizes = [16, 32], strides = [1, 1]} : vector<16x96xf32> to vector<16x32xf32>
    %cst_101 = arith.constant 0.353553385 : f32
    %218 = vector.broadcast %cst_101 : f32 to vector<16x32xf32>
    %219 = arith.mulf %217, %218 : vector<16x32xf32>
    %220 = vector.extract_strided_slice %219 {offsets = [0, 0], sizes = [16, 8], strides = [1, 1]} : vector<16x32xf32> to vector<16x8xf32>
    %221 = vector.shape_cast %220 : vector<16x8xf32> to vector<2x8x8xf32>
    %222 = vector.extract_strided_slice %219 {offsets = [0, 8], sizes = [16, 8], strides = [1, 1]} : vector<16x32xf32> to vector<16x8xf32>
    %223 = vector.shape_cast %222 : vector<16x8xf32> to vector<2x8x8xf32>
    %224 = vector.extract_strided_slice %219 {offsets = [0, 16], sizes = [16, 8], strides = [1, 1]} : vector<16x32xf32> to vector<16x8xf32>
    %225 = vector.shape_cast %224 : vector<16x8xf32> to vector<2x8x8xf32>
    %226 = vector.extract_strided_slice %219 {offsets = [0, 24], sizes = [16, 8], strides = [1, 1]} : vector<16x32xf32> to vector<16x8xf32>
    %227 = vector.shape_cast %226 : vector<16x8xf32> to vector<2x8x8xf32>
    %228 = tpu.concatenate %221, %223, %225, %227 in 0 : vector<2x8x8xf32>, vector<2x8x8xf32>, vector<2x8x8xf32>, vector<2x8x8xf32> -> vector<8x8x8xf32>
    %229 = vector.extract_strided_slice %216 {offsets = [0, 32], sizes = [16, 32], strides = [1, 1]} : vector<16x96xf32> to vector<16x32xf32>
    %230 = vector.extract_strided_slice %229 {offsets = [0, 0], sizes = [16, 8], strides = [1, 1]} : vector<16x32xf32> to vector<16x8xf32>
    %231 = vector.shape_cast %230 : vector<16x8xf32> to vector<2x8x8xf32>
    %232 = vector.extract_strided_slice %229 {offsets = [0, 8], sizes = [16, 8], strides = [1, 1]} : vector<16x32xf32> to vector<16x8xf32>
    %233 = vector.shape_cast %232 : vector<16x8xf32> to vector<2x8x8xf32>
    %234 = vector.extract_strided_slice %229 {offsets = [0, 16], sizes = [16, 8], strides = [1, 1]} : vector<16x32xf32> to vector<16x8xf32>
    %235 = vector.shape_cast %234 : vector<16x8xf32> to vector<2x8x8xf32>
    %236 = vector.extract_strided_slice %229 {offsets = [0, 24], sizes = [16, 8], strides = [1, 1]} : vector<16x32xf32> to vector<16x8xf32>
    %237 = vector.shape_cast %236 : vector<16x8xf32> to vector<2x8x8xf32>
    %238 = tpu.concatenate %231, %233, %235, %237 in 0 : vector<2x8x8xf32>, vector<2x8x8xf32>, vector<2x8x8xf32>, vector<2x8x8xf32> -> vector<8x8x8xf32>
    %239 = vector.extract_strided_slice %216 {offsets = [0, 64], sizes = [16, 32], strides = [1, 1]} : vector<16x96xf32> to vector<16x32xf32>
    %240 = vector.extract_strided_slice %239 {offsets = [0, 0], sizes = [16, 8], strides = [1, 1]} : vector<16x32xf32> to vector<16x8xf32>
    %241 = vector.shape_cast %240 : vector<16x8xf32> to vector<2x8x8xf32>
    %242 = vector.extract_strided_slice %239 {offsets = [0, 8], sizes = [16, 8], strides = [1, 1]} : vector<16x32xf32> to vector<16x8xf32>
    %243 = vector.shape_cast %242 : vector<16x8xf32> to vector<2x8x8xf32>
    %244 = vector.extract_strided_slice %239 {offsets = [0, 16], sizes = [16, 8], strides = [1, 1]} : vector<16x32xf32> to vector<16x8xf32>
    %245 = vector.shape_cast %244 : vector<16x8xf32> to vector<2x8x8xf32>
    %246 = vector.extract_strided_slice %239 {offsets = [0, 24], sizes = [16, 8], strides = [1, 1]} : vector<16x32xf32> to vector<16x8xf32>
    %247 = vector.shape_cast %246 : vector<16x8xf32> to vector<2x8x8xf32>
    %248 = tpu.concatenate %241, %243, %245, %247 in 0 : vector<2x8x8xf32>, vector<2x8x8xf32>, vector<2x8x8xf32>, vector<2x8x8xf32> -> vector<8x8x8xf32>
    "tpu.trace_start"() <{level = 10 : i32, message = "bqd,bkd->bqk"}> : () -> ()
    %cst_102 = arith.constant dense<0.000000e+00> : vector<8x8x8xf32>
    %249 = tpu.matmul %228, %238, %cst_102 {dimension_numbers = #tpu.dot_dimension_numbers<[2], [2], [1], [1], [0, 0, 0, 1, 1, 1], [0], [0]>} : vector<8x8x8xf32>, vector<8x8x8xf32>, vector<8x8x8xf32> -> vector<8x8x8xf32>
    "tpu.trace_stop"() : () -> ()
    %250 = arith.addf %249, %40 : vector<8x8x8xf32>
    %cst_103 = arith.constant dense<0xFF800000> : vector<8x8xf32>
    %251 = vector.multi_reduction <maximumf>, %250, %cst_103 [2] : vector<8x8x8xf32> to vector<8x8xf32>
    %252 = vector.shape_cast %251 : vector<8x8xf32> to vector<8x8x1xf32>
    %253 = vector.broadcast %252 : vector<8x8x1xf32> to vector<8x8x8xf32>
    %254 = arith.subf %250, %253 : vector<8x8x8xf32>
    %255 = math.exp %254 : vector<8x8x8xf32>
    %cst_104 = arith.constant dense<0.000000e+00> : vector<8x8xf32>
    %256 = vector.multi_reduction <add>, %255, %cst_104 [2] : vector<8x8x8xf32> to vector<8x8xf32>
    %257 = vector.shape_cast %256 : vector<8x8xf32> to vector<8x8x1xf32>
    %258 = tpu.reciprocal %257 {approx = true} : vector<8x8x1xf32> -> vector<8x8x1xf32>
    %259 = vector.broadcast %258 : vector<8x8x1xf32> to vector<8x8x8xf32>
    %260 = arith.mulf %255, %259 : vector<8x8x8xf32>
    "tpu.trace_start"() <{level = 10 : i32, message = "bqk,bkd->bqd"}> : () -> ()
    %cst_105 = arith.constant dense<0.000000e+00> : vector<8x8x8xf32>
    %261 = tpu.matmul %260, %248, %cst_105 {dimension_numbers = #tpu.dot_dimension_numbers<[2], [1], [1], [2], [0, 0, 0, 1, 1, 2], [0], [0]>} : vector<8x8x8xf32>, vector<8x8x8xf32>, vector<8x8x8xf32> -> vector<8x8x8xf32>
    "tpu.trace_stop"() : () -> ()
    %262 = vector.extract_strided_slice %261 {offsets = [0, 0, 0], sizes = [2, 8, 8], strides = [1, 1, 1]} : vector<8x8x8xf32> to vector<2x8x8xf32>
    %263 = vector.shape_cast %262 : vector<2x8x8xf32> to vector<16x8xf32>
    %264 = vector.extract_strided_slice %261 {offsets = [2, 0, 0], sizes = [2, 8, 8], strides = [1, 1, 1]} : vector<8x8x8xf32> to vector<2x8x8xf32>
    %265 = vector.shape_cast %264 : vector<2x8x8xf32> to vector<16x8xf32>
    %266 = vector.extract_strided_slice %261 {offsets = [4, 0, 0], sizes = [2, 8, 8], strides = [1, 1, 1]} : vector<8x8x8xf32> to vector<2x8x8xf32>
    %267 = vector.shape_cast %266 : vector<2x8x8xf32> to vector<16x8xf32>
    %268 = vector.extract_strided_slice %261 {offsets = [6, 0, 0], sizes = [2, 8, 8], strides = [1, 1, 1]} : vector<8x8x8xf32> to vector<2x8x8xf32>
    %269 = vector.shape_cast %268 : vector<2x8x8xf32> to vector<16x8xf32>
    %270 = tpu.concatenate %263, %265, %267, %269 in 1 : vector<16x8xf32>, vector<16x8xf32>, vector<16x8xf32>, vector<16x8xf32> -> vector<16x32xf32>
    %cst_106 = arith.constant dense<0.000000e+00> : vector<16x32xf32>
    %271 = tpu.matmul %270, %193, %cst_106 {dimension_numbers = #tpu.dot_dimension_numbers<[1], [0], [0], [1], [0, 0, 1, 1], [], []>} : vector<16x32xf32>, vector<32x32xf32>, vector<16x32xf32> -> vector<16x32xf32>
    %272 = vector.broadcast %201 : vector<1x32xf32> to vector<16x32xf32>
    %273 = arith.addf %271, %272 : vector<16x32xf32>
    %274 = arith.addf %273, %189 : vector<16x32xf32>
    %cst_107 = arith.constant dense<0.000000e+00> : vector<16xf32>
    %275 = vector.multi_reduction <add>, %274, %cst_107 [1] : vector<16x32xf32> to vector<16xf32>
    %276 = vector.shape_cast %275 : vector<16xf32> to vector<16x1xf32>
    %cst_108 = arith.constant 3.200000e+01 : f32
    %277 = vector.broadcast %cst_108 : f32 to vector<16x1xf32>
    %278 = arith.divf %276, %277 : vector<16x1xf32>
    %279 = vector.broadcast %278 : vector<16x1xf32> to vector<16x32xf32>
    %280 = arith.subf %274, %279 : vector<16x32xf32>
    %281 = arith.mulf %280, %280 : vector<16x32xf32>
    %cst_109 = arith.constant dense<0.000000e+00> : vector<16xf32>
    %282 = vector.multi_reduction <add>, %281, %cst_109 [1] : vector<16x32xf32> to vector<16xf32>
    %283 = vector.shape_cast %282 : vector<16xf32> to vector<16x1xf32>
    %cst_110 = arith.constant 3.200000e+01 : f32
    %284 = vector.broadcast %cst_110 : f32 to vector<16x1xf32>
    %285 = arith.divf %283, %284 : vector<16x1xf32>
    %286 = vector.broadcast %278 : vector<16x1xf32> to vector<16x32xf32>
    %287 = arith.subf %274, %286 : vector<16x32xf32>
    %cst_111 = arith.constant 9.99999996E-13 : f32
    %288 = vector.broadcast %cst_111 : f32 to vector<16x1xf32>
    %289 = arith.addf %285, %288 : vector<16x1xf32>
    %290 = math.rsqrt %289 : vector<16x1xf32>
    %291 = vector.broadcast %290 : vector<16x1xf32> to vector<16x32xf32>
    %292 = arith.mulf %287, %291 : vector<16x32xf32>
    %293 = vector.broadcast %203 : vector<1x32xf32> to vector<16x32xf32>
    %294 = arith.mulf %292, %293 : vector<16x32xf32>
    %295 = vector.broadcast %205 : vector<1x32xf32> to vector<16x32xf32>
    %296 = arith.addf %294, %295 : vector<16x32xf32>
    %cst_112 = arith.constant dense<0.000000e+00> : vector<16x64xf32>
    %297 = tpu.matmul %296, %195, %cst_112 {dimension_numbers = #tpu.dot_dimension_numbers<[1], [0], [0], [1], [0, 0, 1, 1], [], []>} : vector<16x32xf32>, vector<32x64xf32>, vector<16x64xf32> -> vector<16x64xf32>
    %298 = vector.broadcast %207 : vector<1x64xf32> to vector<16x64xf32>
    %299 = arith.addf %297, %298 : vector<16x64xf32>
    %300 = arith.mulf %299, %299 : vector<16x64xf32>
    %301 = arith.mulf %299, %300 : vector<16x64xf32>
    %cst_113 = arith.constant 4.471500e-02 : f32
    %302 = vector.broadcast %cst_113 : f32 to vector<16x64xf32>
    %303 = arith.mulf %302, %301 : vector<16x64xf32>
    %304 = arith.addf %299, %303 : vector<16x64xf32>
    %cst_114 = arith.constant 0.797884583 : f32
    %305 = vector.broadcast %cst_114 : f32 to vector<16x64xf32>
    %306 = arith.mulf %305, %304 : vector<16x64xf32>
    %307 = math.tanh %306 : vector<16x64xf32>
    %cst_115 = arith.constant 1.000000e+00 : f32
    %308 = vector.broadcast %cst_115 : f32 to vector<16x64xf32>
    %309 = arith.addf %308, %307 : vector<16x64xf32>
    %cst_116 = arith.constant 5.000000e-01 : f32
    %310 = vector.broadcast %cst_116 : f32 to vector<16x64xf32>
    %311 = arith.mulf %310, %309 : vector<16x64xf32>
    %312 = arith.mulf %299, %311 : vector<16x64xf32>
    %cst_117 = arith.constant dense<0.000000e+00> : vector<16x32xf32>
    %313 = tpu.matmul %312, %197, %cst_117 {dimension_numbers = #tpu.dot_dimension_numbers<[1], [0], [0], [1], [0, 0, 1, 1], [], []>} : vector<16x64xf32>, vector<64x32xf32>, vector<16x32xf32> -> vector<16x32xf32>
    %314 = vector.broadcast %209 : vector<1x32xf32> to vector<16x32xf32>
    %315 = arith.addf %313, %314 : vector<16x32xf32>
    %316 = arith.addf %315, %296 : vector<16x32xf32>
    %cst_118 = arith.constant dense<0.000000e+00> : vector<16xf32>
    %317 = vector.multi_reduction <add>, %316, %cst_118 [1] : vector<16x32xf32> to vector<16xf32>
    %318 = vector.shape_cast %317 : vector<16xf32> to vector<16x1xf32>
    %cst_119 = arith.constant 3.200000e+01 : f32
    %319 = vector.broadcast %cst_119 : f32 to vector<16x1xf32>
    %320 = arith.divf %318, %319 : vector<16x1xf32>
    %321 = vector.broadcast %320 : vector<16x1xf32> to vector<16x32xf32>
    %322 = arith.subf %316, %321 : vector<16x32xf32>
    %323 = arith.mulf %322, %322 : vector<16x32xf32>
    %cst_120 = arith.constant dense<0.000000e+00> : vector<16xf32>
    %324 = vector.multi_reduction <add>, %323, %cst_120 [1] : vector<16x32xf32> to vector<16xf32>
    %325 = vector.shape_cast %324 : vector<16xf32> to vector<16x1xf32>
    %cst_121 = arith.constant 3.200000e+01 : f32
    %326 = vector.broadcast %cst_121 : f32 to vector<16x1xf32>
    %327 = arith.divf %325, %326 : vector<16x1xf32>
    %328 = vector.broadcast %320 : vector<16x1xf32> to vector<16x32xf32>
    %329 = arith.subf %316, %328 : vector<16x32xf32>
    %cst_122 = arith.constant 9.99999996E-13 : f32
    %330 = vector.broadcast %cst_122 : f32 to vector<16x1xf32>
    %331 = arith.addf %327, %330 : vector<16x1xf32>
    %332 = math.rsqrt %331 : vector<16x1xf32>
    %333 = vector.broadcast %332 : vector<16x1xf32> to vector<16x32xf32>
    %334 = arith.mulf %329, %333 : vector<16x32xf32>
    %335 = vector.broadcast %211 : vector<1x32xf32> to vector<16x32xf32>
    %336 = arith.mulf %334, %335 : vector<16x32xf32>
    %337 = vector.broadcast %213 : vector<1x32xf32> to vector<16x32xf32>
    %338 = arith.addf %336, %337 : vector<16x32xf32>
    %339 = vector.shape_cast %338 : vector<16x32xf32> to vector<2x8x32xf32>
    %340 = vector.extract_strided_slice %339 {offsets = [0, 0, 0], sizes = [2, 1, 32], strides = [1, 1, 1]} : vector<2x8x32xf32> to vector<2x1x32xf32>
    %341 = vector.shape_cast %340 : vector<2x1x32xf32> to vector<2x32xf32>
    %c24 = arith.constant 24 : index
    %c0_123 = arith.constant 0 : index
    %342 = vector.load %arg5[%c24, %c0_123] : memref<56x128xf32, #tpu.memory_space<vmem>>, vector<32x128xf32>
    %c18 = arith.constant 18 : index
    %c0_124 = arith.constant 0 : index
    %343 = vector.load %arg5[%c18, %c0_124] : memref<56x128xf32, #tpu.memory_space<vmem>>, vector<1x128xf32>
    %cst_125 = arith.constant dense<0.000000e+00> : vector<2x128xf32>
    %344 = tpu.matmul %341, %342, %cst_125 {dimension_numbers = #tpu.dot_dimension_numbers<[1], [0], [0], [1], [0, 0, 1, 1], [], []>} : vector<2x32xf32>, vector<32x128xf32>, vector<2x128xf32> -> vector<2x128xf32>
    %345 = vector.broadcast %343 : vector<1x128xf32> to vector<2x128xf32>
    %346 = arith.addf %344, %345 : vector<2x128xf32>
    %347 = vector.shape_cast %346 : vector<2x128xf32> to vector<2x1x128xf32>
    %c0_126 = arith.constant 0 : index
    %c0_127 = arith.constant 0 : index
    %c0_128 = arith.constant 0 : index
    %348 = vector.load %arg6[%c0_126, %c0_127, %c0_128] : memref<2x1x128xf32, #tpu.memory_space<vmem>>, vector<2x1x128xf32>
    tpu.vector_store %arg6[%c0_126, %c0_127, %c0_128], %347 {strides = array<i32>} : memref<2x1x128xf32, #tpu.memory_space<vmem>>, vector<2x1x128xf32>,
    return
  }
  func.func @transform_0(%arg0: i32) -> (i32, i32, i32) {
    %c0_i32 = arith.constant 0 : i32
    %c0_i32_0 = arith.constant 0 : i32
    %c0_i32_1 = arith.constant 0 : i32
    return %arg0, %c0_i32, %c0_i32_0 : i32, i32, i32
  }
  func.func @transform_1(%arg0: i32) -> (i32, i32, i32) {
    %c0_i32 = arith.constant 0 : i32
    %c0_i32_0 = arith.constant 0 : i32
    %c0_i32_1 = arith.constant 0 : i32
    return %arg0, %c0_i32, %c0_i32_0 : i32, i32, i32
  }
  func.func @transform_2(%arg0: i32) -> (i32, i32, i32) {
    %c0_i32 = arith.constant 0 : i32
    %c0_i32_0 = arith.constant 0 : i32
    %c0_i32_1 = arith.constant 0 : i32
    %c0_i32_2 = arith.constant 0 : i32
    return %c0_i32, %c0_i32_0, %c0_i32_1 : i32, i32, i32
  }
  func.func @transform_3(%arg0: i32) -> (i32, i32, i32) {
    %c0_i32 = arith.constant 0 : i32
    %c0_i32_0 = arith.constant 0 : i32
    %c0_i32_1 = arith.constant 0 : i32
    %c0_i32_2 = arith.constant 0 : i32
    return %c0_i32, %c0_i32_0, %c0_i32_1 : i32, i32, i32
  }
  func.func @transform_4(%arg0: i32) -> (i32, i32) {
    %c0_i32 = arith.constant 0 : i32
    %c0_i32_0 = arith.constant 0 : i32
    %c0_i32_1 = arith.constant 0 : i32
    return %c0_i32, %c0_i32_0 : i32, i32
  }
  func.func @transform_5(%arg0: i32) -> (i32, i32, i32) {
    %c0_i32 = arith.constant 0 : i32
    %c0_i32_0 = arith.constant 0 : i32
    %c0_i32_1 = arith.constant 0 : i32
    return %arg0, %c0_i32, %c0_i32_0 : i32, i32, i32
  }
}

</mosaic_0001>

<llo_original>
// kernel: text_encoder_forward.1
$region0: #{text_encoder_forward.1}
  #allocation0 [shape = 'u32[]', space=smem, size = 0x4, offset = 0x4, fixed_abs, tag = 'smem constant byte address 0x4 - core index']
  #allocation1 [shape = 'u32[144,128]{1,0:T(1,128)}', space=vmem, size = 0x12000, scoped, tag = 'internal scratch']
  %s0 = inlined_call_operand.vmem [shape: f32[4,8,32], index: 0, kind: input, shape index: {}]
  %s1 = inlined_call_operand.vmem [shape: s32[4,1,8], index: 1, kind: input, shape index: {}]
  %s2 = inlined_call_operand.vmem [shape: f32[2,64,256], index: 2, kind: input, shape index: {}]
  %s3 = inlined_call_operand.vmem [shape: f32[2,8,128], index: 3, kind: input, shape index: {}]
  %s4 = inlined_call_operand.vmem [shape: f32[56,128], index: 4, kind: input, shape index: {}]
  %s5 = inlined_call_operand.hbm [shape: f32[4,1,128], index: 5, kind: output, shape index: {}]
  %s6 = sld [smem:[#allocation0]]
  $region53: #{text_encoder_forward.1} parent=0
    _
  %s8 = ssub.s32 1, %s6
  %s9 = scalar_select 0, %s8, %s6
  $region1: #{text_encoder_forward.1} parent=0
    #allocation2 [shape = 'u8[2048]{0}', space=vmem, size = 0x800, scoped, tag = 'output window, operand 0']
    #allocation3 [shape = 's32[2]{0}', space=sflag, size = 0x8, scoped, tag = 'scoped memory for text_encoder_forward.1']
    %10 = vsyncpa [#allocation3], 0
    %s11 = scalar_lea.sflag [#allocation3], 1
    %12 = vsyncpa %s11, 0
    loop: start=0, step=1, limit=4
    $region2: #{text_encoder_forward.1} parent=1 // loop_pre_header
      _
    $region3: #{text_encoder_forward.1} parent=1 // loop_header
      %s14 = sphi 0, %s18
      %p15 = scmp.ge.s32.totalorder %s14, 4
      %s24 = sphi 0, %s26
      %s27 = sphi 0, %s24
      %s28 = sphi 0, %s27
      %s44 = sphi 0, %s28
      %s50 = sphi 0, %s52
      %s53 = sphi 0, %s50
      %s54 = sphi 0, %s53
      %s70 = sphi 0, %s54
      %s74 = sphi 0, %s74
      %s76 = sphi 0, %s74
      %s77 = sphi 0, %s76
      %s91 = sphi 0, %s77
      %s95 = sphi 0, %s95
      %s97 = sphi 0, %s95
      %s98 = sphi 0, %s97
      %s112 = sphi 0, %s98
      %s116 = sphi 0, %s116
      %s118 = sphi 0, %s116
      %s119 = sphi 0, %s118
      %s133 = sphi 0, %s119
      %s139 = sphi 0, %s141
      %s142 = sphi 0, %s139
      %s143 = sphi 0, %s142
      %s159 = sphi 0, %s143
    $region4: #{text_encoder_forward.1} parent=1 // loop_header_branch
      %17 = sbr.rel (%p15) target = $region8
    $region5: #{text_encoder_forward.1} parent=1 // loop_body
      %s19 = ssub.s32 %s14, 1
      %s20 = ssub.s32 %s14, 2
      %s21 = sadd.s32 %s14, 1
      %s22 = ssub.s32 %s14, %s21
      %p23 = scmp.eq.s32.totalorder %s22, 0
      %s25 = sadd.s32 %s24, 1
      %s26 = scalar_select %p23, %s24, %s25
      %p29 = pneg %p23
      %p30 = scmp.eq.s32.totalorder %s14, 1
      %p31 = por %p29, %p30
      %p32 = scmp.ne.s32.totalorder %s24, %s27
      %p33 = scmp.eq.s32.totalorder %s14, 0
      %p34 = por %p32, %p33
      %p35 = scmp.ne.s32.totalorder %s24, %s27
      %p36 = scmp.eq.s32.totalorder %s19, 1
      %p37 = por %p35, %p36
      %p38 = scmp.ne.s32.totalorder %s27, %s28
      %p39 = scmp.eq.s32.totalorder %s19, 0
      %p40 = por %p38, %p39
      %p41 = scmp.ne.s32.totalorder %s27, %s28
      %p42 = scmp.eq.s32.totalorder %s20, 1
      %p43 = por %p41, %p42
      %p45 = scmp.ne.s32.totalorder %s28, %s44
      %p46 = scmp.eq.s32.totalorder %s20, 0
      %p47 = por %p45, %p46
      %s48 = ssub.s32 %s14, %s21
      %p49 = scmp.eq.s32.totalorder %s48, 0
      %s51 = sadd.s32 %s50, 1
      %s52 = scalar_select %p49, %s50, %s51
      %p55 = pneg %p49
      %p56 = scmp.eq.s32.totalorder %s14, 1
      %p57 = por %p55, %p56
      %p58 = scmp.ne.s32.totalorder %s50, %s53
      %p59 = scmp.eq.s32.totalorder %s14, 0
      %p60 = por %p58, %p59
      %p61 = scmp.ne.s32.totalorder %s50, %s53
      %p62 = scmp.eq.s32.totalorder %s19, 1
      %p63 = por %p61, %p62
      %p64 = scmp.ne.s32.totalorder %s53, %s54
      %p65 = scmp.eq.s32.totalorder %s19, 0
      %p66 = por %p64, %p65
      %p67 = scmp.ne.s32.totalorder %s53, %s54
      %p68 = scmp.eq.s32.totalorder %s20, 1
      %p69 = por %p67, %p68
      %p71 = scmp.ne.s32.totalorder %s54, %s70
      %p72 = scmp.eq.s32.totalorder %s20, 0
      %p73 = por %p71, %p72
      %s75 = sadd.s32 %s74, 1
      %p78 = scmp.eq.s32.totalorder %s14, 1
      %p79 = scmp.ne.s32.totalorder %s74, %s76
      %p80 = scmp.eq.s32.totalorder %s14, 0
      %p81 = por %p79, %p80
      %p82 = scmp.ne.s32.totalorder %s74, %s76
      %p83 = scmp.eq.s32.totalorder %s19, 1
      %p84 = por %p82, %p83
      %p85 = scmp.ne.s32.totalorder %s76, %s77
      %p86 = scmp.eq.s32.totalorder %s19, 0
      %p87 = por %p85, %p86
      %p88 = scmp.ne.s32.totalorder %s76, %s77
      %p89 = scmp.eq.s32.totalorder %s20, 1
      %p90 = por %p88, %p89
      %p92 = scmp.ne.s32.totalorder %s77, %s91
      %p93 = scmp.eq.s32.totalorder %s20, 0
      %p94 = por %p92, %p93
      %s96 = sadd.s32 %s95, 1
      %p99 = scmp.eq.s32.totalorder %s14, 1
      %p100 = scmp.ne.s32.totalorder %s95, %s97
      %p101 = scmp.eq.s32.totalorder %s14, 0
      %p102 = por %p100, %p101
      %p103 = scmp.ne.s32.totalorder %s95, %s97
      %p104 = scmp.eq.s32.totalorder %s19, 1
      %p105 = por %p103, %p104
      %p106 = scmp.ne.s32.totalorder %s97, %s98
      %p107 = scmp.eq.s32.totalorder %s19, 0
      %p108 = por %p106, %p107
      %p109 = scmp.ne.s32.totalorder %s97, %s98
      %p110 = scmp.eq.s32.totalorder %s20, 1
      %p111 = por %p109, %p110
      %p113 = scmp.ne.s32.totalorder %s98, %s112
      %p114 = scmp.eq.s32.totalorder %s20, 0
      %p115 = por %p113, %p114
      %s117 = sadd.s32 %s116, 1
      %p120 = scmp.eq.s32.totalorder %s14, 1
      %p121 = scmp.ne.s32.totalorder %s116, %s118
      %p122 = scmp.eq.s32.totalorder %s14, 0
      %p123 = por %p121, %p122
      %p124 = scmp.ne.s32.totalorder %s116, %s118
      %p125 = scmp.eq.s32.totalorder %s19, 1
      %p126 = por %p124, %p125
      %p127 = scmp.ne.s32.totalorder %s118, %s119
      %p128 = scmp.eq.s32.totalorder %s19, 0
      %p129 = por %p127, %p128
      %p130 = scmp.ne.s32.totalorder %s118, %s119
      %p131 = scmp.eq.s32.totalorder %s20, 1
      %p132 = por %p130, %p131
      %p134 = scmp.ne.s32.totalorder %s119, %s133
      %p135 = scmp.eq.s32.totalorder %s20, 0
      %p136 = por %p134, %p135
      %s137 = ssub.s32 %s14, %s21
      %p138 = scmp.eq.s32.totalorder %s137, 0
      %s140 = sadd.s32 %s139, 1
      %s141 = scalar_select %p138, %s139, %s140
      %p144 = pneg %p138
      %p145 = scmp.eq.s32.totalorder %s14, 1
      %p146 = por %p144, %p145
      %p147 = scmp.ne.s32.totalorder %s139, %s142
      %p148 = scmp.eq.s32.totalorder %s14, 0
      %p149 = por %p147, %p148
      %p150 = scmp.ne.s32.totalorder %s139, %s142
      %p151 = scmp.eq.s32.totalorder %s19, 1
      %p152 = por %p150, %p151
      %p153 = scmp.ne.s32.totalorder %s142, %s143
      %p154 = scmp.eq.s32.totalorder %s19, 0
      %p155 = por %p153, %p154
      %p156 = scmp.ne.s32.totalorder %s142, %s143
      %p157 = scmp.eq.s32.totalorder %s20, 1
      %p158 = por %p156, %p157
      %p160 = scmp.ne.s32.totalorder %s143, %s159
      %p161 = scmp.eq.s32.totalorder %s20, 0
      %p162 = por %p160, %p161
      %p163 = scmp.le.s32.totalorder 1, %s14
      %p164 = scmp.lt.s32.totalorder %s14, 3
      %p165 = pnand %p163, %p164
      %p166 = pneg %p165
      // Predicated region
      $region9: #{text_encoder_forward.1} parent=5 // pred_check
        _
      $region10: #{text_encoder_forward.1} parent=5 // pred_check_branch
        %168 = sbr.rel (%p165) target = $region12
      $region11: #{text_encoder_forward.1} parent=5 // pred_region
        %s169 = ssub.s32 %s14, 1
        // Predicated region
        $region13: #{text_encoder_forward.1} parent=11 // pred_check
          %p170 = pneg %p87
        $region14: #{text_encoder_forward.1} parent=11 // pred_check_branch
          %172 = sbr.rel (%p170) target = $region16
        $region15: #{text_encoder_forward.1} parent=11 // pred_region
          _
        $region16: #{text_encoder_forward.1} parent=11 // pred_fallthru
          _
        // Predicated region
        $region17: #{text_encoder_forward.1} parent=11 // pred_check
          %p173 = pneg %p108
        $region18: #{text_encoder_forward.1} parent=11 // pred_check_branch
          %175 = sbr.rel (%p173) target = $region20
        $region19: #{text_encoder_forward.1} parent=11 // pred_region
          _
        $region20: #{text_encoder_forward.1} parent=11 // pred_fallthru
          _
        // Predicated region
        $region21: #{text_encoder_forward.1} parent=11 // pred_check
          %p176 = pneg %p129
        $region22: #{text_encoder_forward.1} parent=11 // pred_check_branch
          %178 = sbr.rel (%p176) target = $region24
        $region23: #{text_encoder_forward.1} parent=11 // pred_region
          _
        $region24: #{text_encoder_forward.1} parent=11 // pred_fallthru
          _
      $region12: #{text_encoder_forward.1} parent=5 // pred_fallthru
        _
      %p179 = scmp.lt.s32.totalorder %s14, 2
      // Predicated region
      $region25: #{text_encoder_forward.1} parent=5 // pred_check
        %p180 = pneg %p179
      $region26: #{text_encoder_forward.1} parent=5 // pred_check_branch
        %182 = sbr.rel (%p180) target = $region28
      $region27: #{text_encoder_forward.1} parent=5 // pred_region
        // Predicated region
        $region29: #{text_encoder_forward.1} parent=27 // pred_check
          %p183 = pneg %p34
        $region30: #{text_encoder_forward.1} parent=27 // pred_check_branch
          %185 = sbr.rel (%p183) target = $region32
        $region31: #{text_encoder_forward.1} parent=27 // pred_region
          %s186 = smul.u32 2, %s14
          %p187 = scmp.lt.s32.totalorder %s186, 3
          %s188 = scalar_select %p187, %s186, 3
          %s189 = smul.addr %s188, 8
          %s190 = scalar_lea.vmem %s0, %s189
          %s191 = smul.u32 2, %s14
        $region32: #{text_encoder_forward.1} parent=27 // pred_fallthru
          _
        // Predicated region
        $region33: #{text_encoder_forward.1} parent=27 // pred_check
          %p192 = pneg %p60
        $region34: #{text_encoder_forward.1} parent=27 // pred_check_branch
          %194 = sbr.rel (%p192) target = $region36
        $region35: #{text_encoder_forward.1} parent=27 // pred_region
          %s195 = smul.u32 2, %s14
          %p196 = scmp.lt.s32.totalorder %s195, 3
          %s197 = scalar_select %p196, %s195, 3
          %s198 = scalar_lea.vmem %s1, %s197
          %s199 = smul.u32 2, %s14
        $region36: #{text_encoder_forward.1} parent=27 // pred_fallthru
          _
      $region28: #{text_encoder_forward.1} parent=5 // pred_fallthru
        _
      %p200 = scmp.le.s32.totalorder 1, %s14
      %p201 = scmp.lt.s32.totalorder %s14, 3
      %p202 = pnand %p200, %p201
      %p203 = pneg %p202
      // Predicated region
      $region37: #{text_encoder_forward.1} parent=5 // pred_check
        _
      $region38: #{text_encoder_forward.1} parent=5 // pred_check_branch
        %205 = sbr.rel (%p202) target = $region40
      $region39: #{text_encoder_forward.1} parent=5 // pred_region
        %s206 = ssub.s32 %s14, 1
        %s207 = smul.u32 2, %s19
        %p208 = scmp.lt.s32.totalorder %s207, 3
        %s209 = scalar_select %p208, %s207, 3
        %s210 = smul.addr %s209, 8
        %s211 = scalar_lea.vmem %s0, %s210
        %p212 = pneg %p40
        %p213 = pneg %p37
        %s214 = smul.u32 2, %s19
        %p215 = scmp.lt.s32.totalorder %s214, 3
        %s216 = scalar_select %p215, %s214, 3
        %s217 = scalar_lea.vmem %s1, %s216
        %p218 = pneg %p66
        %p219 = pneg %p63
        %p220 = pneg %p87
        %p221 = pneg %p84
        %p222 = pneg %p108
        %p223 = pneg %p105
        %p224 = pneg %p129
        %p225 = pneg %p126
        %p226 = pneg %p155
        %p227 = pneg %p152
        %s228 = sand.u32 %s142, 1
        %s229 = scalar_lea.sflag [#allocation3], %s228
        %s230 = sand.u32 %s142, 1
        %s231 = smul.addr %s230, 2
        %s232 = scalar_lea.vmem [#allocation2], %s231
        %s233 = smul.u32 2, %s19
        %p234 = scmp.lt.s32.totalorder %s233, 3
        %s235 = scalar_select %p234, %s233, 3
        %s236 = smul.addr %s235, 8
        %s237 = scalar_lea.vmem %s0, %s236
        %s238 = smul.u32 2, %s19
        %s239 = smul.u32 2, %s19
        %p240 = scmp.lt.s32.totalorder %s239, 3
        %s241 = scalar_select %p240, %s239, 3
        %s242 = scalar_lea.vmem %s1, %s241
        %s243 = smul.u32 2, %s19
        %s244 = smul.u32 2, %s19
        %v245 = vld [vmem:[%s4] sm:$0xff]
        %v246 = vld [vmem:[%s237] sm:$0xff]
        %v247 = vld [vmem:[%s237 + $0x8] sm:$0xff]
        %v248 = vadd.f32 %v246, %v245
        %v249 = vadd.f32 %v247, %v245
        %v250 = vld [vmem:[%s4 + $0x10] sm:$0x1]
        %v251 = vld [vmem:[%s4 + $0x11] sm:$0x1]
        %vm252 = vcmask 261120
        %v253 = vsel %vm252, %v248, 0.0
        %254 = vadd.xlane.f32.xlu0 %v253
        %v255 = vpop.xlane.xlu0 %254
        %v256 = vsel %vm252, %v249, 0.0
        %257 = vadd.xlane.f32.xlu0 %v256
        %v258 = vpop.xlane.xlu0 %257
        %v259 = vrcp.pop 32.0
        %v260 = vmul.f32 %v255, %v259
        %v261 = vmul.f32 %v258, %v259
        %v262 = vsub.f32 %v248, %v260
        %v263 = vsub.f32 %v249, %v261
        %v264 = vmul.f32 %v262, %v262
        %v265 = vmul.f32 %v263, %v263
        %v266 = vsel %vm252, %v264, 0.0
        %267 = vadd.xlane.f32.xlu0 %v266
        %v268 = vpop.xlane.xlu0 %267
        %v269 = vsel %vm252, %v265, 0.0
        %270 = vadd.xlane.f32.xlu0 %v269
        %v271 = vpop.xlane.xlu0 %270
        %v272 = vmul.f32 %v268, %v259
        %v273 = vmul.f32 %v271, %v259
        %v274 = vadd.f32 %v272, 1e-12
        %v275 = vadd.f32 %v273, 1e-12
        %v276 = vrsqrt.pop %v274
        %v277 = vrsqrt.pop %v275
        %v278 = vmul.f32 %v262, %v276
        %v279 = vmul.f32 %v263, %v277
        %v280 = vlaneseq
        %v281 = vshrl.u32 %v280, 7
        %v282 = vsub.s32 0, %v281
        %v283 = vrot.slane %v250, %v282
        %v284 = vmul.f32 %v278, %v283
        %v285 = vmul.f32 %v279, %v283
        %v286 = vlaneseq
        %v287 = vshrl.u32 %v286, 7
        %v288 = vsub.s32 0, %v287
        %v289 = vrot.slane %v251, %v288
        %v290 = vadd.f32 %v284, %v289
        %v291 = vadd.f32 %v285, %v289
        %v292 = vld [vmem:[%s242] sm:$0x1]
        %v293 = vld [vmem:[%s242 + $0x1] sm:$0x1]
        %vm294 = vcmp.gt.s32.totalorder %v292, 0
        %vm295 = vcmp.gt.s32.totalorder %v293, 0
        %v296 = vsel %vm294, 0.0, -3.4028235e+38
        %v297 = vsel %vm295, 0.0, -3.4028235e+38
        %v300 = vlaneseq
        %v301 = vshrl.u32 %v300, 7
        %v302 = vsub.s32 0, %v301
        %v303 = vrot.slane %v296, %v302
        %v304 = vlaneseq
        %v305 = vshrl.u32 %v304, 7
        %v306 = vsub.s32 0, %v305
        %v307 = vrot.slane %v297, %v306
        %v310 = vld [vmem:[%s2] sm:$0xff]
        %v311 = vld [vmem:[%s2 + $0x10] sm:$0xff]
        %v312 = vld [vmem:[%s2 + $0x20] sm:$0xff]
        %v313 = vld [vmem:[%s2 + $0x30] sm:$0xff]
        %v314 = vld [vmem:[%s2 + $0x8] sm:$0xff]
        %v315 = vld [vmem:[%s2 + $0x18] sm:$0xff]
        %v316 = vld [vmem:[%s2 + $0x28] sm:$0xff]
        %v317 = vld [vmem:[%s2 + $0x38] sm:$0xff]
        %v318 = vld [vmem:[%s2 + $0x48] sm:$0xff]
        %v319 = vld [vmem:[%s2 + $0x58] sm:$0xff]
        %v320 = vld [vmem:[%s2 + $0x68] sm:$0xff]
        %v321 = vld [vmem:[%s2 + $0x78] sm:$0xff]
        %v322 = vld [vmem:[%s3] sm:$0x1]
        %v323 = vld [vmem:[%s3 + $0x1] sm:$0x1]
        %v324 = vld [vmem:[%s3 + $0x2] sm:$0x1]
        %v325 = vld [vmem:[%s3 + $0x3] sm:$0x1]
        %v326 = vld [vmem:[%s3 + $0x4] sm:$0x1]
        %v327 = vld [vmem:[%s3 + $0x5] sm:$0x1]
        %v328 = vld [vmem:[%s3 + $0x6] sm:$0x1]
        %v329 = vld [vmem:[%s3 + $0x7] sm:$0x1]
        %v330 = vlaneseq
        %v331 = vshrl.u32 %v330, 7
        %v332 = vsub.s32 0, %v331
        %v333 = vrot.slane %v322, %v332
        %v335 = vsel %vm252, %v290, 0
        %v338 = vsel %vm252, %v291, 0
        %340 = vmatprep.subr.mxu0 0.0
        %341 = vmatpush1.msra.mxu0 %v310
        %342 = vmatprep.subr.mxu0 0.0
        %343 = vmatpush1.msra.mxu0 %v311
        %344 = vmatprep.subr.mxu0 0.0
        %345 = vmatpush1.msra.mxu0 %v312
        %346 = vmatprep.subr.mxu0 0.0
        %347 = vmatpush1.msra.mxu0 %v313
        %348 = vmatprep.subr.mxu0 0.0
        %349 = vmatpush1.msra.mxu0 0.0
        %350 = vmatprep.subr.mxu0 0.0
        %351 = vmatpush1.msra.mxu0 0.0
        %352 = vmatprep.subr.mxu0 0.0
        %353 = vmatpush1.msra.mxu0 0.0
        %354 = vmatprep.subr.mxu0 0.0
        %355 = vmatpush1.msra.mxu0 0.0
        %356 = vmatprep.subr.mxu0 0.0
        %357 = vmatpush1.msra.mxu0 0.0
        %358 = vmatprep.subr.mxu0 0.0
        %359 = vmatpush1.msra.mxu0 0.0
        %360 = vmatprep.subr.mxu0 0.0
        %361 = vmatpush1.msra.mxu0 0.0
        %362 = vmatprep.subr.mxu0 0.0
        %363 = vmatpush1.msra.mxu0 0.0
        %364 = vmatprep.subr.mxu0 0.0
        %365 = vmatpush1.msra.mxu0 0.0
        %366 = vmatprep.subr.mxu0 0.0
        %367 = vmatpush1.msra.mxu0 0.0
        %368 = vmatprep.subr.mxu0 0.0
        %369 = vmatpush1.msra.mxu0 0.0
        %370 = vmatprep.subr.mxu0 0.0
        %371 = vmatpush1.msra.mxu0 0.0
        %372 = vmatprep.subr.mxu0 0.0
        %373 = vmatpush1.msra.mxu0 0.0
        %374 = vmatprep.subr.mxu0 0.0
        %375 = vmatpush1.msra.mxu0 0.0
        %376 = vmatprep.subr.mxu0 0.0
        %377 = vmatpush1.msra.mxu0 0.0
        %378 = vmatprep.subr.mxu0 0.0
        %379 = vmatpush1.msra.mxu0 0.0
        %380 = vmatprep.subr.mxu0 0.0
        %381 = vmatpush1.msra.mxu0 0.0
        %382 = vmatprep.subr.mxu0 0.0
        %383 = vmatpush1.msra.mxu0 0.0
        %384 = vmatprep.subr.mxu0 0.0
        %385 = vmatpush1.msra.mxu0 0.0
        %386 = vmatprep.subr.mxu0 0.0
        %387 = vmatpush1.msra.mxu0 0.0
        %388 = vmatprep.subr.mxu0 0.0
        %389 = vmatpush1.msra.mxu0 0.0
        %390 = vmatprep.subr.mxu0 0.0
        %391 = vmatpush1.msra.mxu0 0.0
        %392 = vmatprep.subr.mxu0 0.0
        %393 = vmatpush1.msra.mxu0 0.0
        %394 = vmatprep.subr.mxu0 0.0
        %395 = vmatpush1.msra.mxu0 0.0
        %396 = vmatprep.subr.mxu0 0.0
        %397 = vmatpush1.msra.mxu0 0.0
        %398 = vmatprep.subr.mxu0 0.0
        %399 = vmatpush1.msra.mxu0 0.0
        %400 = vmatprep.subr.mxu0 0.0
        %401 = vmatpush1.msra.mxu0 0.0
        %402 = vmatprep.subr.mxu0 0.0
        %403 = vmatpush1.msra.mxu0 0.0
        %404 = vmatprep.mubr.f32.mxu0 0.0
        %405 = vmatmul.mubr.f32.gmra.mrb[0].mxu0 %v335
        %v406 = vpop.f32.mrb[0].mxu0
        %v407 = vadd.f32 %v333, %v406
        %v408 = vpop.f32.mrb[0].mxu0
        %409 = vmatprep.mubr.f32.mxu0 0.0
        %410 = vmatmul.mubr.f32.gmra.mrb[0].mxu0 %v338
        %v411 = vpop.f32.mrb[0].mxu0
        %v412 = vadd.f32 %v333, %v411
        %v413 = vpop.f32.mrb[0].mxu0
        %414 = vdwg.mxu0
        %v415 = vmul.f32 %v407, 0.35355338
        %v416 = vmul.f32 %v412, 0.35355338
        %419 = vrot.lane.b32.xlu0 %v415, 120
        %v420 = vpop.permute.xlu0 %419
        %421 = vrot.lane.b32.xlu0 %v416, 120
        %v422 = vpop.permute.xlu0 %421
        %423 = vrot.lane.b32.xlu0 %v415, 112
        %v424 = vpop.permute.xlu0 %423
        %425 = vrot.lane.b32.xlu0 %v416, 112
        %v426 = vpop.permute.xlu0 %425
        %427 = vrot.lane.b32.xlu0 %v415, 104
        %v428 = vpop.permute.xlu0 %427
        %429 = vrot.lane.b32.xlu0 %v416, 104
        %v430 = vpop.permute.xlu0 %429
        %433 = vrot.lane.b32.xlu0 %v407, 120
        %v434 = vpop.permute.xlu0 %433
        %435 = vrot.lane.b32.xlu0 %v412, 120
        %v436 = vpop.permute.xlu0 %435
        %437 = vrot.lane.b32.xlu0 %v407, 112
        %v438 = vpop.permute.xlu0 %437
        %439 = vrot.lane.b32.xlu0 %v412, 112
        %v440 = vpop.permute.xlu0 %439
        %441 = vrot.lane.b32.xlu0 %v407, 104
        %v442 = vpop.permute.xlu0 %441
        %443 = vrot.lane.b32.xlu0 %v412, 104
        %v444 = vpop.permute.xlu0 %443
        %445 = vrot.lane.b32.xlu0 %v407, 96
        %v446 = vpop.permute.xlu0 %445
        %vm447 = vcmask 64512
        %v448 = vsel %vm447, %v415, 0
        %v450 = vsel %vm447, %v446, 0
        %452 = vmatprep.subr.mxu0 0.0
        %453 = vmatpush1.xpose.msra.mxu0 %v450
        %454 = vmatprep.subr.mxu0 0.0
        %455 = vmatpush1.xpose.msra.mxu0 0.0
        %456 = vmatprep.subr.mxu0 0.0
        %457 = vmatpush1.xpose.msra.mxu0 0.0
        %458 = vmatprep.subr.mxu0 0.0
        %459 = vmatpush1.xpose.msra.mxu0 0.0
        %460 = vmatprep.subr.mxu0 0.0
        %461 = vmatpush1.xpose.msra.mxu0 0.0
        %462 = vmatprep.subr.mxu0 0.0
        %463 = vmatpush1.xpose.msra.mxu0 0.0
        %464 = vmatprep.subr.mxu0 0.0
        %465 = vmatpush1.xpose.msra.mxu0 0.0
        %466 = vmatprep.subr.mxu0 0.0
        %467 = vmatpush1.xpose.msra.mxu0 0.0
        %468 = vmatprep.subr.mxu0 0.0
        %469 = vmatpush1.xpose.msra.mxu0 0.0
        %470 = vmatprep.subr.mxu0 0.0
        %471 = vmatpush1.xpose.msra.mxu0 0.0
        %472 = vmatprep.subr.mxu0 0.0
        %473 = vmatpush1.xpose.msra.mxu0 0.0
        %474 = vmatprep.subr.mxu0 0.0
        %475 = vmatpush1.xpose.msra.mxu0 0.0
        %476 = vmatprep.subr.mxu0 0.0
        %477 = vmatpush1.xpose.msra.mxu0 0.0
        %478 = vmatprep.subr.mxu0 0.0
        %479 = vmatpush1.xpose.msra.mxu0 0.0
        %480 = vmatprep.subr.mxu0 0.0
        %481 = vmatpush1.xpose.msra.mxu0 0.0
        %482 = vmatprep.subr.mxu0 0.0
        %483 = vmatpush1.xpose.msra.mxu0 0.0
        %484 = vmatprep.subr.mxu0 0.0
        %485 = vmatpush1.xpose.msra.mxu0 0.0
        %486 = vmatprep.subr.mxu0 0.0
        %487 = vmatpush1.xpose.msra.mxu0 0.0
        %488 = vmatprep.subr.mxu0 0.0
        %489 = vmatpush1.xpose.msra.mxu0 0.0
        %490 = vmatprep.subr.mxu0 0.0
        %491 = vmatpush1.xpose.msra.mxu0 0.0
        %492 = vmatprep.subr.mxu0 0.0
        %493 = vmatpush1.xpose.msra.mxu0 0.0
        %494 = vmatprep.subr.mxu0 0.0
        %495 = vmatpush1.xpose.msra.mxu0 0.0
        %496 = vmatprep.subr.mxu0 0.0
        %497 = vmatpush1.xpose.msra.mxu0 0.0
        %498 = vmatprep.subr.mxu0 0.0
        %499 = vmatpush1.xpose.msra.mxu0 0.0
        %500 = vmatprep.subr.mxu0 0.0
        %501 = vmatpush1.xpose.msra.mxu0 0.0
        %502 = vmatprep.subr.mxu0 0.0
        %503 = vmatpush1.xpose.msra.mxu0 0.0
        %504 = vmatprep.subr.mxu0 0.0
        %505 = vmatpush1.xpose.msra.mxu0 0.0
        %506 = vmatprep.subr.mxu0 0.0
        %507 = vmatpush1.xpose.msra.mxu0 0.0
        %508 = vmatprep.subr.mxu0 0.0
        %509 = vmatpush1.xpose.msra.mxu0 0.0
        %510 = vmatprep.subr.mxu0 0.0
        %511 = vmatpush1.xpose.msra.mxu0 0.0
        %512 = vmatprep.subr.mxu0 0.0
        %513 = vmatpush1.xpose.msra.mxu0 0.0
        %514 = vmatprep.subr.mxu0 0.0
        %515 = vmatpush1.xpose.msra.mxu0 0.0
        %516 = vmatprep.mubr.f32.mxu0 0.0
        %517 = vmatmul.mubr.f32.gmra.mrb[0].mxu0 %v448
        %v518 = vpop.f32.mrb[0].mxu0
        %v519 = vadd.f32 %v303, %v518
        %v520 = vpop.f32.mrb[0].mxu0
        %521 = vdwg.mxu0
        %522 = vrot.lane.b32.xlu0 %v412, 96
        %v523 = vpop.permute.xlu0 %522
        %v524 = vsel %vm447, %v416, 0
        %v526 = vsel %vm447, %v523, 0
        %528 = vmatprep.subr.mxu0 0.0
        %529 = vmatpush1.xpose.msra.mxu0 %v526
        %530 = vmatprep.subr.mxu0 0.0
        %531 = vmatpush1.xpose.msra.mxu0 0.0
        %532 = vmatprep.subr.mxu0 0.0
        %533 = vmatpush1.xpose.msra.mxu0 0.0
        %534 = vmatprep.subr.mxu0 0.0
        %535 = vmatpush1.xpose.msra.mxu0 0.0
        %536 = vmatprep.subr.mxu0 0.0
        %537 = vmatpush1.xpose.msra.mxu0 0.0
        %538 = vmatprep.subr.mxu0 0.0
        %539 = vmatpush1.xpose.msra.mxu0 0.0
        %540 = vmatprep.subr.mxu0 0.0
        %541 = vmatpush1.xpose.msra.mxu0 0.0
        %542 = vmatprep.subr.mxu0 0.0
        %543 = vmatpush1.xpose.msra.mxu0 0.0
        %544 = vmatprep.subr.mxu0 0.0
        %545 = vmatpush1.xpose.msra.mxu0 0.0
        %546 = vmatprep.subr.mxu0 0.0
        %547 = vmatpush1.xpose.msra.mxu0 0.0
        %548 = vmatprep.subr.mxu0 0.0
        %549 = vmatpush1.xpose.msra.mxu0 0.0
        %550 = vmatprep.subr.mxu0 0.0
        %551 = vmatpush1.xpose.msra.mxu0 0.0
        %552 = vmatprep.subr.mxu0 0.0
        %553 = vmatpush1.xpose.msra.mxu0 0.0
        %554 = vmatprep.subr.mxu0 0.0
        %555 = vmatpush1.xpose.msra.mxu0 0.0
        %556 = vmatprep.subr.mxu0 0.0
        %557 = vmatpush1.xpose.msra.mxu0 0.0
        %558 = vmatprep.subr.mxu0 0.0
        %559 = vmatpush1.xpose.msra.mxu0 0.0
        %560 = vmatprep.subr.mxu0 0.0
        %561 = vmatpush1.xpose.msra.mxu0 0.0
        %562 = vmatprep.subr.mxu0 0.0
        %563 = vmatpush1.xpose.msra.mxu0 0.0
        %564 = vmatprep.subr.mxu0 0.0
        %565 = vmatpush1.xpose.msra.mxu0 0.0
        %566 = vmatprep.subr.mxu0 0.0
        %567 = vmatpush1.xpose.msra.mxu0 0.0
        %568 = vmatprep.subr.mxu0 0.0
        %569 = vmatpush1.xpose.msra.mxu0 0.0
        %570 = vmatprep.subr.mxu0 0.0
        %571 = vmatpush1.xpose.msra.mxu0 0.0
        %572 = vmatprep.subr.mxu0 0.0
        %573 = vmatpush1.xpose.msra.mxu0 0.0
        %574 = vmatprep.subr.mxu0 0.0
        %575 = vmatpush1.xpose.msra.mxu0 0.0
        %576 = vmatprep.subr.mxu0 0.0
        %577 = vmatpush1.xpose.msra.mxu0 0.0
        %578 = vmatprep.subr.mxu0 0.0
        %579 = vmatpush1.xpose.msra.mxu0 0.0
        %580 = vmatprep.subr.mxu0 0.0
        %581 = vmatpush1.xpose.msra.mxu0 0.0
        %582 = vmatprep.subr.mxu0 0.0
        %583 = vmatpush1.xpose.msra.mxu0 0.0
        %584 = vmatprep.subr.mxu0 0.0
        %585 = vmatpush1.xpose.msra.mxu0 0.0
        %586 = vmatprep.subr.mxu0 0.0
        %587 = vmatpush1.xpose.msra.mxu0 0.0
        %588 = vmatprep.subr.mxu0 0.0
        %589 = vmatpush1.xpose.msra.mxu0 0.0
        %590 = vmatprep.subr.mxu0 0.0
        %591 = vmatpush1.xpose.msra.mxu0 0.0
        %592 = vmatprep.mubr.f32.mxu0 0.0
        %593 = vmatmul.mubr.f32.gmra.mrb[0].mxu0 %v524
        %v594 = vpop.f32.mrb[0].mxu0
        %v595 = vadd.f32 %v307, %v594
        %v596 = vpop.f32.mrb[0].mxu0
        %597 = vdwg.mxu0
        %598 = vrot.lane.b32.xlu0 %v434, 96
        %v599 = vpop.permute.xlu0 %598
        %v600 = vsel %vm447, %v420, 0
        %v602 = vsel %vm447, %v599, 0
        %604 = vmatprep.subr.mxu0 0.0
        %605 = vmatpush1.xpose.msra.mxu0 %v602
        %606 = vmatprep.subr.mxu0 0.0
        %607 = vmatpush1.xpose.msra.mxu0 0.0
        %608 = vmatprep.subr.mxu0 0.0
        %609 = vmatpush1.xpose.msra.mxu0 0.0
        %610 = vmatprep.subr.mxu0 0.0
        %611 = vmatpush1.xpose.msra.mxu0 0.0
        %612 = vmatprep.subr.mxu0 0.0
        %613 = vmatpush1.xpose.msra.mxu0 0.0
        %614 = vmatprep.subr.mxu0 0.0
        %615 = vmatpush1.xpose.msra.mxu0 0.0
        %616 = vmatprep.subr.mxu0 0.0
        %617 = vmatpush1.xpose.msra.mxu0 0.0
        %618 = vmatprep.subr.mxu0 0.0
        %619 = vmatpush1.xpose.msra.mxu0 0.0
        %620 = vmatprep.subr.mxu0 0.0
        %621 = vmatpush1.xpose.msra.mxu0 0.0
        %622 = vmatprep.subr.mxu0 0.0
        %623 = vmatpush1.xpose.msra.mxu0 0.0
        %624 = vmatprep.subr.mxu0 0.0
        %625 = vmatpush1.xpose.msra.mxu0 0.0
        %626 = vmatprep.subr.mxu0 0.0
        %627 = vmatpush1.xpose.msra.mxu0 0.0
        %628 = vmatprep.subr.mxu0 0.0
        %629 = vmatpush1.xpose.msra.mxu0 0.0
        %630 = vmatprep.subr.mxu0 0.0
        %631 = vmatpush1.xpose.msra.mxu0 0.0
        %632 = vmatprep.subr.mxu0 0.0
        %633 = vmatpush1.xpose.msra.mxu0 0.0
        %634 = vmatprep.subr.mxu0 0.0
        %635 = vmatpush1.xpose.msra.mxu0 0.0
        %636 = vmatprep.subr.mxu0 0.0
        %637 = vmatpush1.xpose.msra.mxu0 0.0
        %638 = vmatprep.subr.mxu0 0.0
        %639 = vmatpush1.xpose.msra.mxu0 0.0
        %640 = vmatprep.subr.mxu0 0.0
        %641 = vmatpush1.xpose.msra.mxu0 0.0
        %642 = vmatprep.subr.mxu0 0.0
        %643 = vmatpush1.xpose.msra.mxu0 0.0
        %644 = vmatprep.subr.mxu0 0.0
        %645 = vmatpush1.xpose.msra.mxu0 0.0
        %646 = vmatprep.subr.mxu0 0.0
        %647 = vmatpush1.xpose.msra.mxu0 0.0
        %648 = vmatprep.subr.mxu0 0.0
        %649 = vmatpush1.xpose.msra.mxu0 0.0
        %650 = vmatprep.subr.mxu0 0.0
        %651 = vmatpush1.xpose.msra.mxu0 0.0
        %652 = vmatprep.subr.mxu0 0.0
        %653 = vmatpush1.xpose.msra.mxu0 0.0
        %654 = vmatprep.subr.mxu0 0.0
        %655 = vmatpush1.xpose.msra.mxu0 0.0
        %656 = vmatprep.subr.mxu0 0.0
        %657 = vmatpush1.xpose.msra.mxu0 0.0
        %658 = vmatprep.subr.mxu0 0.0
        %659 = vmatpush1.xpose.msra.mxu0 0.0
        %660 = vmatprep.subr.mxu0 0.0
        %661 = vmatpush1.xpose.msra.mxu0 0.0
        %662 = vmatprep.subr.mxu0 0.0
        %663 = vmatpush1.xpose.msra.mxu0 0.0
        %664 = vmatprep.subr.mxu0 0.0
        %665 = vmatpush1.xpose.msra.mxu0 0.0
        %666 = vmatprep.subr.mxu0 0.0
        %667 = vmatpush1.xpose.msra.mxu0 0.0
        %668 = vmatprep.mubr.f32.mxu0 0.0
        %669 = vmatmul.mubr.f32.gmra.mrb[0].mxu0 %v600
        %v670 = vpop.f32.mrb[0].mxu0
        %v671 = vadd.f32 %v303, %v670
        %v672 = vpop.f32.mrb[0].mxu0
        %673 = vdwg.mxu0
        %674 = vrot.lane.b32.xlu0 %v436, 96
        %v675 = vpop.permute.xlu0 %674
        %v676 = vsel %vm447, %v422, 0
        %v678 = vsel %vm447, %v675, 0
        %680 = vmatprep.subr.mxu0 0.0
        %681 = vmatpush1.xpose.msra.mxu0 %v678
        %682 = vmatprep.subr.mxu0 0.0
        %683 = vmatpush1.xpose.msra.mxu0 0.0
        %684 = vmatprep.subr.mxu0 0.0
        %685 = vmatpush1.xpose.msra.mxu0 0.0
        %686 = vmatprep.subr.mxu0 0.0
        %687 = vmatpush1.xpose.msra.mxu0 0.0
        %688 = vmatprep.subr.mxu0 0.0
        %689 = vmatpush1.xpose.msra.mxu0 0.0
        %690 = vmatprep.subr.mxu0 0.0
        %691 = vmatpush1.xpose.msra.mxu0 0.0
        %692 = vmatprep.subr.mxu0 0.0
        %693 = vmatpush1.xpose.msra.mxu0 0.0
        %694 = vmatprep.subr.mxu0 0.0
        %695 = vmatpush1.xpose.msra.mxu0 0.0
        %696 = vmatprep.subr.mxu0 0.0
        %697 = vmatpush1.xpose.msra.mxu0 0.0
        %698 = vmatprep.subr.mxu0 0.0
        %699 = vmatpush1.xpose.msra.mxu0 0.0
        %700 = vmatprep.subr.mxu0 0.0
        %701 = vmatpush1.xpose.msra.mxu0 0.0
        %702 = vmatprep.subr.mxu0 0.0
        %703 = vmatpush1.xpose.msra.mxu0 0.0
        %704 = vmatprep.subr.mxu0 0.0
        %705 = vmatpush1.xpose.msra.mxu0 0.0
        %706 = vmatprep.subr.mxu0 0.0
        %707 = vmatpush1.xpose.msra.mxu0 0.0
        %708 = vmatprep.subr.mxu0 0.0
        %709 = vmatpush1.xpose.msra.mxu0 0.0
        %710 = vmatprep.subr.mxu0 0.0
        %711 = vmatpush1.xpose.msra.mxu0 0.0
        %712 = vmatprep.subr.mxu0 0.0
        %713 = vmatpush1.xpose.msra.mxu0 0.0
        %714 = vmatprep.subr.mxu0 0.0
        %715 = vmatpush1.xpose.msra.mxu0 0.0
        %716 = vmatprep.subr.mxu0 0.0
        %717 = vmatpush1.xpose.msra.mxu0 0.0
        %718 = vmatprep.subr.mxu0 0.0
        %719 = vmatpush1.xpose.msra.mxu0 0.0
        %720 = vmatprep.subr.mxu0 0.0
        %721 = vmatpush1.xpose.msra.mxu0 0.0
        %722 = vmatprep.subr.mxu0 0.0
        %723 = vmatpush1.xpose.msra.mxu0 0.0
        %724 = vmatprep.subr.mxu0 0.0
        %725 = vmatpush1.xpose.msra.mxu0 0.0
        %726 = vmatprep.subr.mxu0 0.0
        %727 = vmatpush1.xpose.msra.mxu0 0.0
        %728 = vmatprep.subr.mxu0 0.0
        %729 = vmatpush1.xpose.msra.mxu0 0.0
        %730 = vmatprep.subr.mxu0 0.0
        %731 = vmatpush1.xpose.msra.mxu0 0.0
        %732 = vmatprep.subr.mxu0 0.0
        %733 = vmatpush1.xpose.msra.mxu0 0.0
        %734 = vmatprep.subr.mxu0 0.0
        %735 = vmatpush1.xpose.msra.mxu0 0.0
        %736 = vmatprep.subr.mxu0 0.0
        %737 = vmatpush1.xpose.msra.mxu0 0.0
        %738 = vmatprep.subr.mxu0 0.0
        %739 = vmatpush1.xpose.msra.mxu0 0.0
        %740 = vmatprep.subr.mxu0 0.0
        %741 = vmatpush1.xpose.msra.mxu0 0.0
        %742 = vmatprep.subr.mxu0 0.0
        %743 = vmatpush1.xpose.msra.mxu0 0.0
        %744 = vmatprep.mubr.f32.mxu0 0.0
        %745 = vmatmul.mubr.f32.gmra.mrb[0].mxu0 %v676
        %v746 = vpop.f32.mrb[0].mxu0
        %v747 = vadd.f32 %v307, %v746
        %v748 = vpop.f32.mrb[0].mxu0
        %749 = vdwg.mxu0
        %750 = vrot.lane.b32.xlu0 %v438, 96
        %v751 = vpop.permute.xlu0 %750
        %v752 = vsel %vm447, %v424, 0
        %v754 = vsel %vm447, %v751, 0
        %756 = vmatprep.subr.mxu0 0.0
        %757 = vmatpush1.xpose.msra.mxu0 %v754
        %758 = vmatprep.subr.mxu0 0.0
        %759 = vmatpush1.xpose.msra.mxu0 0.0
        %760 = vmatprep.subr.mxu0 0.0
        %761 = vmatpush1.xpose.msra.mxu0 0.0
        %762 = vmatprep.subr.mxu0 0.0
        %763 = vmatpush1.xpose.msra.mxu0 0.0
        %764 = vmatprep.subr.mxu0 0.0
        %765 = vmatpush1.xpose.msra.mxu0 0.0
        %766 = vmatprep.subr.mxu0 0.0
        %767 = vmatpush1.xpose.msra.mxu0 0.0
        %768 = vmatprep.subr.mxu0 0.0
        %769 = vmatpush1.xpose.msra.mxu0 0.0
        %770 = vmatprep.subr.mxu0 0.0
        %771 = vmatpush1.xpose.msra.mxu0 0.0
        %772 = vmatprep.subr.mxu0 0.0
        %773 = vmatpush1.xpose.msra.mxu0 0.0
        %774 = vmatprep.subr.mxu0 0.0
        %775 = vmatpush1.xpose.msra.mxu0 0.0
        %776 = vmatprep.subr.mxu0 0.0
        %777 = vmatpush1.xpose.msra.mxu0 0.0
        %778 = vmatprep.subr.mxu0 0.0
        %779 = vmatpush1.xpose.msra.mxu0 0.0
        %780 = vmatprep.subr.mxu0 0.0
        %781 = vmatpush1.xpose.msra.mxu0 0.0
        %782 = vmatprep.subr.mxu0 0.0
        %783 = vmatpush1.xpose.msra.mxu0 0.0
        %784 = vmatprep.subr.mxu0 0.0
        %785 = vmatpush1.xpose.msra.mxu0 0.0
        %786 = vmatprep.subr.mxu0 0.0
        %787 = vmatpush1.xpose.msra.mxu0 0.0
        %788 = vmatprep.subr.mxu0 0.0
        %789 = vmatpush1.xpose.msra.mxu0 0.0
        %790 = vmatprep.subr.mxu0 0.0
        %791 = vmatpush1.xpose.msra.mxu0 0.0
        %792 = vmatprep.subr.mxu0 0.0
        %793 = vmatpush1.xpose.msra.mxu0 0.0
        %794 = vmatprep.subr.mxu0 0.0
        %795 = vmatpush1.xpose.msra.mxu0 0.0
        %796 = vmatprep.subr.mxu0 0.0
        %797 = vmatpush1.xpose.msra.mxu0 0.0
        %798 = vmatprep.subr.mxu0 0.0
        %799 = vmatpush1.xpose.msra.mxu0 0.0
        %800 = vmatprep.subr.mxu0 0.0
        %801 = vmatpush1.xpose.msra.mxu0 0.0
        %802 = vmatprep.subr.mxu0 0.0
        %803 = vmatpush1.xpose.msra.mxu0 0.0
        %804 = vmatprep.subr.mxu0 0.0
        %805 = vmatpush1.xpose.msra.mxu0 0.0
        %806 = vmatprep.subr.mxu0 0.0
        %807 = vmatpush1.xpose.msra.mxu0 0.0
        %808 = vmatprep.subr.mxu0 0.0
        %809 = vmatpush1.xpose.msra.mxu0 0.0
        %810 = vmatprep.subr.mxu0 0.0
        %811 = vmatpush1.xpose.msra.mxu0 0.0
        %812 = vmatprep.subr.mxu0 0.0
        %813 = vmatpush1.xpose.msra.mxu0 0.0
        %814 = vmatprep.subr.mxu0 0.0
        %815 = vmatpush1.xpose.msra.mxu0 0.0
        %816 = vmatprep.subr.mxu0 0.0
        %817 = vmatpush1.xpose.msra.mxu0 0.0
        %818 = vmatprep.subr.mxu0 0.0
        %819 = vmatpush1.xpose.msra.mxu0 0.0
        %820 = vmatprep.mubr.f32.mxu0 0.0
        %821 = vmatmul.mubr.f32.gmra.mrb[0].mxu0 %v752
        %v822 = vpop.f32.mrb[0].mxu0
        %v823 = vadd.f32 %v303, %v822
        %v824 = vpop.f32.mrb[0].mxu0
        %825 = vdwg.mxu0
        %826 = vrot.lane.b32.xlu0 %v440, 96
        %v827 = vpop.permute.xlu0 %826
        %v828 = vsel %vm447, %v426, 0
        %v830 = vsel %vm447, %v827, 0
        %832 = vmatprep.subr.mxu0 0.0
        %833 = vmatpush1.xpose.msra.mxu0 %v830
        %834 = vmatprep.subr.mxu0 0.0
        %835 = vmatpush1.xpose.msra.mxu0 0.0
        %836 = vmatprep.subr.mxu0 0.0
        %837 = vmatpush1.xpose.msra.mxu0 0.0
        %838 = vmatprep.subr.mxu0 0.0
        %839 = vmatpush1.xpose.msra.mxu0 0.0
        %840 = vmatprep.subr.mxu0 0.0
        %841 = vmatpush1.xpose.msra.mxu0 0.0
        %842 = vmatprep.subr.mxu0 0.0
        %843 = vmatpush1.xpose.msra.mxu0 0.0
        %844 = vmatprep.subr.mxu0 0.0
        %845 = vmatpush1.xpose.msra.mxu0 0.0
        %846 = vmatprep.subr.mxu0 0.0
        %847 = vmatpush1.xpose.msra.mxu0 0.0
        %848 = vmatprep.subr.mxu0 0.0
        %849 = vmatpush1.xpose.msra.mxu0 0.0
        %850 = vmatprep.subr.mxu0 0.0
        %851 = vmatpush1.xpose.msra.mxu0 0.0
        %852 = vmatprep.subr.mxu0 0.0
        %853 = vmatpush1.xpose.msra.mxu0 0.0
        %854 = vmatprep.subr.mxu0 0.0
        %855 = vmatpush1.xpose.msra.mxu0 0.0
        %856 = vmatprep.subr.mxu0 0.0
        %857 = vmatpush1.xpose.msra.mxu0 0.0
        %858 = vmatprep.subr.mxu0 0.0
        %859 = vmatpush1.xpose.msra.mxu0 0.0
        %860 = vmatprep.subr.mxu0 0.0
        %861 = vmatpush1.xpose.msra.mxu0 0.0
        %862 = vmatprep.subr.mxu0 0.0
        %863 = vmatpush1.xpose.msra.mxu0 0.0
        %864 = vmatprep.subr.mxu0 0.0
        %865 = vmatpush1.xpose.msra.mxu0 0.0
        %866 = vmatprep.subr.mxu0 0.0
        %867 = vmatpush1.xpose.msra.mxu0 0.0
        %868 = vmatprep.subr.mxu0 0.0
        %869 = vmatpush1.xpose.msra.mxu0 0.0
        %870 = vmatprep.subr.mxu0 0.0
        %871 = vmatpush1.xpose.msra.mxu0 0.0
        %872 = vmatprep.subr.mxu0 0.0
        %873 = vmatpush1.xpose.msra.mxu0 0.0
        %874 = vmatprep.subr.mxu0 0.0
        %875 = vmatpush1.xpose.msra.mxu0 0.0
        %876 = vmatprep.subr.mxu0 0.0
        %877 = vmatpush1.xpose.msra.mxu0 0.0
        %878 = vmatprep.subr.mxu0 0.0
        %879 = vmatpush1.xpose.msra.mxu0 0.0
        %880 = vmatprep.subr.mxu0 0.0
        %881 = vmatpush1.xpose.msra.mxu0 0.0
        %882 = vmatprep.subr.mxu0 0.0
        %883 = vmatpush1.xpose.msra.mxu0 0.0
        %884 = vmatprep.subr.mxu0 0.0
        %885 = vmatpush1.xpose.msra.mxu0 0.0
        %886 = vmatprep.subr.mxu0 0.0
        %887 = vmatpush1.xpose.msra.mxu0 0.0
        %888 = vmatprep.subr.mxu0 0.0
        %889 = vmatpush1.xpose.msra.mxu0 0.0
        %890 = vmatprep.subr.mxu0 0.0
        %891 = vmatpush1.xpose.msra.mxu0 0.0
        %892 = vmatprep.subr.mxu0 0.0
        %893 = vmatpush1.xpose.msra.mxu0 0.0
        %894 = vmatprep.subr.mxu0 0.0
        %895 = vmatpush1.xpose.msra.mxu0 0.0
        %896 = vmatprep.mubr.f32.mxu0 0.0
        %897 = vmatmul.mubr.f32.gmra.mrb[0].mxu0 %v828
        %v898 = vpop.f32.mrb[0].mxu0
        %v899 = vadd.f32 %v307, %v898
        %v900 = vpop.f32.mrb[0].mxu0
        %901 = vdwg.mxu0
        %902 = vrot.lane.b32.xlu0 %v442, 96
        %v903 = vpop.permute.xlu0 %902
        %v904 = vsel %vm447, %v428, 0
        %v906 = vsel %vm447, %v903, 0
        %908 = vmatprep.subr.mxu0 0.0
        %909 = vmatpush1.xpose.msra.mxu0 %v906
        %910 = vmatprep.subr.mxu0 0.0
        %911 = vmatpush1.xpose.msra.mxu0 0.0
        %912 = vmatprep.subr.mxu0 0.0
        %913 = vmatpush1.xpose.msra.mxu0 0.0
        %914 = vmatprep.subr.mxu0 0.0
        %915 = vmatpush1.xpose.msra.mxu0 0.0
        %916 = vmatprep.subr.mxu0 0.0
        %917 = vmatpush1.xpose.msra.mxu0 0.0
        %918 = vmatprep.subr.mxu0 0.0
        %919 = vmatpush1.xpose.msra.mxu0 0.0
        %920 = vmatprep.subr.mxu0 0.0
        %921 = vmatpush1.xpose.msra.mxu0 0.0
        %922 = vmatprep.subr.mxu0 0.0
        %923 = vmatpush1.xpose.msra.mxu0 0.0
        %924 = vmatprep.subr.mxu0 0.0
        %925 = vmatpush1.xpose.msra.mxu0 0.0
        %926 = vmatprep.subr.mxu0 0.0
        %927 = vmatpush1.xpose.msra.mxu0 0.0
        %928 = vmatprep.subr.mxu0 0.0
        %929 = vmatpush1.xpose.msra.mxu0 0.0
        %930 = vmatprep.subr.mxu0 0.0
        %931 = vmatpush1.xpose.msra.mxu0 0.0
        %932 = vmatprep.subr.mxu0 0.0
        %933 = vmatpush1.xpose.msra.mxu0 0.0
        %934 = vmatprep.subr.mxu0 0.0
        %935 = vmatpush1.xpose.msra.mxu0 0.0
        %936 = vmatprep.subr.mxu0 0.0
        %937 = vmatpush1.xpose.msra.mxu0 0.0
        %938 = vmatprep.subr.mxu0 0.0
        %939 = vmatpush1.xpose.msra.mxu0 0.0
        %940 = vmatprep.subr.mxu0 0.0
        %941 = vmatpush1.xpose.msra.mxu0 0.0
        %942 = vmatprep.subr.mxu0 0.0
        %943 = vmatpush1.xpose.msra.mxu0 0.0
        %944 = vmatprep.subr.mxu0 0.0
        %945 = vmatpush1.xpose.msra.mxu0 0.0
        %946 = vmatprep.subr.mxu0 0.0
        %947 = vmatpush1.xpose.msra.mxu0 0.0
        %948 = vmatprep.subr.mxu0 0.0
        %949 = vmatpush1.xpose.msra.mxu0 0.0
        %950 = vmatprep.subr.mxu0 0.0
        %951 = vmatpush1.xpose.msra.mxu0 0.0
        %952 = vmatprep.subr.mxu0 0.0
        %953 = vmatpush1.xpose.msra.mxu0 0.0
        %954 = vmatprep.subr.mxu0 0.0
        %955 = vmatpush1.xpose.msra.mxu0 0.0
        %956 = vmatprep.subr.mxu0 0.0
        %957 = vmatpush1.xpose.msra.mxu0 0.0
        %958 = vmatprep.subr.mxu0 0.0
        %959 = vmatpush1.xpose.msra.mxu0 0.0
        %960 = vmatprep.subr.mxu0 0.0
        %961 = vmatpush1.xpose.msra.mxu0 0.0
        %962 = vmatprep.subr.mxu0 0.0
        %963 = vmatpush1.xpose.msra.mxu0 0.0
        %964 = vmatprep.subr.mxu0 0.0
        %965 = vmatpush1.xpose.msra.mxu0 0.0
        %966 = vmatprep.subr.mxu0 0.0
        %967 = vmatpush1.xpose.msra.mxu0 0.0
        %968 = vmatprep.subr.mxu0 0.0
        %969 = vmatpush1.xpose.msra.mxu0 0.0
        %970 = vmatprep.subr.mxu0 0.0
        %971 = vmatpush1.xpose.msra.mxu0 0.0
        %972 = vmatprep.mubr.f32.mxu0 0.0
        %973 = vmatmul.mubr.f32.gmra.mrb[0].mxu0 %v904
        %v974 = vpop.f32.mrb[0].mxu0
        %v975 = vadd.f32 %v303, %v974
        %v976 = vpop.f32.mrb[0].mxu0
        %977 = vdwg.mxu0
        %978 = vrot.lane.b32.xlu0 %v444, 96
        %v979 = vpop.permute.xlu0 %978
        %v980 = vsel %vm447, %v430, 0
        %v982 = vsel %vm447, %v979, 0
        %984 = vmatprep.subr.mxu0 0.0
        %985 = vmatpush1.xpose.msra.mxu0 %v982
        %986 = vmatprep.subr.mxu0 0.0
        %987 = vmatpush1.xpose.msra.mxu0 0.0
        %988 = vmatprep.subr.mxu0 0.0
        %989 = vmatpush1.xpose.msra.mxu0 0.0
        %990 = vmatprep.subr.mxu0 0.0
        %991 = vmatpush1.xpose.msra.mxu0 0.0
        %992 = vmatprep.subr.mxu0 0.0
        %993 = vmatpush1.xpose.msra.mxu0 0.0
        %994 = vmatprep.subr.mxu0 0.0
        %995 = vmatpush1.xpose.msra.mxu0 0.0
        %996 = vmatprep.subr.mxu0 0.0
        %997 = vmatpush1.xpose.msra.mxu0 0.0
        %998 = vmatprep.subr.mxu0 0.0
        %999 = vmatpush1.xpose.msra.mxu0 0.0
        %1000 = vmatprep.subr.mxu0 0.0
        %1001 = vmatpush1.xpose.msra.mxu0 0.0
        %1002 = vmatprep.subr.mxu0 0.0
        %1003 = vmatpush1.xpose.msra.mxu0 0.0
        %1004 = vmatprep.subr.mxu0 0.0
        %1005 = vmatpush1.xpose.msra.mxu0 0.0
        %1006 = vmatprep.subr.mxu0 0.0
        %1007 = vmatpush1.xpose.msra.mxu0 0.0
        %1008 = vmatprep.subr.mxu0 0.0
        %1009 = vmatpush1.xpose.msra.mxu0 0.0
        %1010 = vmatprep.subr.mxu0 0.0
        %1011 = vmatpush1.xpose.msra.mxu0 0.0
        %1012 = vmatprep.subr.mxu0 0.0
        %1013 = vmatpush1.xpose.msra.mxu0 0.0
        %1014 = vmatprep.subr.mxu0 0.0
        %1015 = vmatpush1.xpose.msra.mxu0 0.0
        %1016 = vmatprep.subr.mxu0 0.0
        %1017 = vmatpush1.xpose.msra.mxu0 0.0
        %1018 = vmatprep.subr.mxu0 0.0
        %1019 = vmatpush1.xpose.msra.mxu0 0.0
        %1020 = vmatprep.subr.mxu0 0.0
        %1021 = vmatpush1.xpose.msra.mxu0 0.0
        %1022 = vmatprep.subr.mxu0 0.0
        %1023 = vmatpush1.xpose.msra.mxu0 0.0
        %1024 = vmatprep.subr.mxu0 0.0
        %1025 = vmatpush1.xpose.msra.mxu0 0.0
        %1026 = vmatprep.subr.mxu0 0.0
        %1027 = vmatpush1.xpose.msra.mxu0 0.0
        %1028 = vmatprep.subr.mxu0 0.0
        %1029 = vmatpush1.xpose.msra.mxu0 0.0
        %1030 = vmatprep.subr.mxu0 0.0
        %1031 = vmatpush1.xpose.msra.mxu0 0.0
        %1032 = vmatprep.subr.mxu0 0.0
        %1033 = vmatpush1.xpose.msra.mxu0 0.0
        %1034 = vmatprep.subr.mxu0 0.0
        %1035 = vmatpush1.xpose.msra.mxu0 0.0
        %1036 = vmatprep.subr.mxu0 0.0
        %1037 = vmatpush1.xpose.msra.mxu0 0.0
        %1038 = vmatprep.subr.mxu0 0.0
        %1039 = vmatpush1.xpose.msra.mxu0 0.0
        %1040 = vmatprep.subr.mxu0 0.0
        %1041 = vmatpush1.xpose.msra.mxu0 0.0
        %1042 = vmatprep.subr.mxu0 0.0
        %1043 = vmatpush1.xpose.msra.mxu0 0.0
        %1044 = vmatprep.subr.mxu0 0.0
        %1045 = vmatpush1.xpose.msra.mxu0 0.0
        %1046 = vmatprep.subr.mxu0 0.0
        %1047 = vmatpush1.xpose.msra.mxu0 0.0
        %1048 = vmatprep.mubr.f32.mxu0 0.0
        %1049 = vmatmul.mubr.f32.gmra.mrb[0].mxu0 %v980
        %v1050 = vpop.f32.mrb[0].mxu0
        %v1051 = vadd.f32 %v307, %v1050
        %v1052 = vpop.f32.mrb[0].mxu0
        %1053 = vdwg.mxu0
        %v1054 = vsel %vm447, %v519, -inf
        %1055 = vmax.xlane.f32.xlu0 %v1054
        %v1056 = vpop.xlane.xlu0 %1055
        %v1057 = vsel %vm447, %v595, -inf
        %1058 = vmax.xlane.f32.xlu0 %v1057
        %v1059 = vpop.xlane.xlu0 %1058
        %v1060 = vsel %vm447, %v671, -inf
        %1061 = vmax.xlane.f32.xlu0 %v1060
        %v1062 = vpop.xlane.xlu0 %1061
        %v1063 = vsel %vm447, %v747, -inf
        %1064 = vmax.xlane.f32.xlu0 %v1063
        %v1065 = vpop.xlane.xlu0 %1064
        %v1066 = vsel %vm447, %v823, -inf
        %1067 = vmax.xlane.f32.xlu0 %v1066
        %v1068 = vpop.xlane.xlu0 %1067
        %v1069 = vsel %vm447, %v899, -inf
        %1070 = vmax.xlane.f32.xlu0 %v1069
        %v1071 = vpop.xlane.xlu0 %1070
        %v1072 = vsel %vm447, %v975, -inf
        %1073 = vmax.xlane.f32.xlu0 %v1072
        %v1074 = vpop.xlane.xlu0 %1073
        %v1075 = vsel %vm447, %v1051, -inf
        %1076 = vmax.xlane.f32.xlu0 %v1075
        %v1077 = vpop.xlane.xlu0 %1076
        %v1078 = vsub.f32 %v519, %v1056
        %v1079 = vsub.f32 %v595, %v1059
        %v1080 = vsub.f32 %v671, %v1062
        %v1081 = vsub.f32 %v747, %v1065
        %v1082 = vsub.f32 %v823, %v1068
        %v1083 = vsub.f32 %v899, %v1071
        %v1084 = vsub.f32 %v975, %v1074
        %v1085 = vsub.f32 %v1051, %v1077
        %v1086 = vmul.f32 %v1078, 1.442695
        %v1087 = vpow.pop %v1086
        %v1088 = vmul.f32 %v1079, 1.442695
        %v1089 = vpow.pop %v1088
        %v1090 = vmul.f32 %v1080, 1.442695
        %v1091 = vpow.pop %v1090
        %v1092 = vmul.f32 %v1081, 1.442695
        %v1093 = vpow.pop %v1092
        %v1094 = vmul.f32 %v1082, 1.442695
        %v1095 = vpow.pop %v1094
        %v1096 = vmul.f32 %v1083, 1.442695
        %v1097 = vpow.pop %v1096
        %v1098 = vmul.f32 %v1084, 1.442695
        %v1099 = vpow.pop %v1098
        %v1100 = vmul.f32 %v1085, 1.442695
        %v1101 = vpow.pop %v1100
        %v1102 = vsel %vm447, %v1087, 0.0
        %1103 = vadd.xlane.f32.xlu0 %v1102
        %v1104 = vpop.xlane.xlu0 %1103
        %v1105 = vsel %vm447, %v1089, 0.0
        %1106 = vadd.xlane.f32.xlu0 %v1105
        %v1107 = vpop.xlane.xlu0 %1106
        %v1108 = vsel %vm447, %v1091, 0.0
        %1109 = vadd.xlane.f32.xlu0 %v1108
        %v1110 = vpop.xlane.xlu0 %1109
        %v1111 = vsel %vm447, %v1093, 0.0
        %1112 = vadd.xlane.f32.xlu0 %v1111
        %v1113 = vpop.xlane.xlu0 %1112
        %v1114 = vsel %vm447, %v1095, 0.0
        %1115 = vadd.xlane.f32.xlu0 %v1114
        %v1116 = vpop.xlane.xlu0 %1115
        %v1117 = vsel %vm447, %v1097, 0.0
        %1118 = vadd.xlane.f32.xlu0 %v1117
        %v1119 = vpop.xlane.xlu0 %1118
        %v1120 = vsel %vm447, %v1099, 0.0
        %1121 = vadd.xlane.f32.xlu0 %v1120
        %v1122 = vpop.xlane.xlu0 %1121
        %v1123 = vsel %vm447, %v1101, 0.0
        %1124 = vadd.xlane.f32.xlu0 %v1123
        %v1125 = vpop.xlane.xlu0 %1124
        %v1126 = vrcp.pop %v1104
        %v1127 = vrcp.pop %v1107
        %v1128 = vrcp.pop %v1110
        %v1129 = vrcp.pop %v1113
        %v1130 = vrcp.pop %v1116
        %v1131 = vrcp.pop %v1119
        %v1132 = vrcp.pop %v1122
        %v1133 = vrcp.pop %v1125
        %v1134 = vmul.f32 %v1087, %v1126
        %v1135 = vmul.f32 %v1089, %v1127
        %v1136 = vmul.f32 %v1091, %v1128
        %v1137 = vmul.f32 %v1093, %v1129
        %v1138 = vmul.f32 %v1095, %v1130
        %v1139 = vmul.f32 %v1097, %v1131
        %v1140 = vmul.f32 %v1099, %v1132
        %v1141 = vmul.f32 %v1101, %v1133
        %1142 = vrot.lane.b32.xlu0 %v407, 64
        %v1143 = vpop.permute.xlu0 %1142
        %v1146 = vsel %vm447, %v1134, 0
        %1148 = vmatprep.subr.mxu0 0.0
        %1149 = vmatpush1.msra.mxu0 %v1143
        %1150 = vmatprep.subr.mxu0 0.0
        %1151 = vmatpush1.msra.mxu0 0.0
        %1152 = vmatprep.subr.mxu0 0.0
        %1153 = vmatpush1.msra.mxu0 0.0
        %1154 = vmatprep.subr.mxu0 0.0
        %1155 = vmatpush1.msra.mxu0 0.0
        %1156 = vmatprep.subr.mxu0 0.0
        %1157 = vmatpush1.msra.mxu0 0.0
        %1158 = vmatprep.subr.mxu0 0.0
        %1159 = vmatpush1.msra.mxu0 0.0
        %1160 = vmatprep.subr.mxu0 0.0
        %1161 = vmatpush1.msra.mxu0 0.0
        %1162 = vmatprep.subr.mxu0 0.0
        %1163 = vmatpush1.msra.mxu0 0.0
        %1164 = vmatprep.subr.mxu0 0.0
        %1165 = vmatpush1.msra.mxu0 0.0
        %1166 = vmatprep.subr.mxu0 0.0
        %1167 = vmatpush1.msra.mxu0 0.0
        %1168 = vmatprep.subr.mxu0 0.0
        %1169 = vmatpush1.msra.mxu0 0.0
        %1170 = vmatprep.subr.mxu0 0.0
        %1171 = vmatpush1.msra.mxu0 0.0
        %1172 = vmatprep.subr.mxu0 0.0
        %1173 = vmatpush1.msra.mxu0 0.0
        %1174 = vmatprep.subr.mxu0 0.0
        %1175 = vmatpush1.msra.mxu0 0.0
        %1176 = vmatprep.subr.mxu0 0.0
        %1177 = vmatpush1.msra.mxu0 0.0
        %1178 = vmatprep.subr.mxu0 0.0
        %1179 = vmatpush1.msra.mxu0 0.0
        %1180 = vmatprep.subr.mxu0 0.0
        %1181 = vmatpush1.msra.mxu0 0.0
        %1182 = vmatprep.subr.mxu0 0.0
        %1183 = vmatpush1.msra.mxu0 0.0
        %1184 = vmatprep.subr.mxu0 0.0
        %1185 = vmatpush1.msra.mxu0 0.0
        %1186 = vmatprep.subr.mxu0 0.0
        %1187 = vmatpush1.msra.mxu0 0.0
        %1188 = vmatprep.subr.mxu0 0.0
        %1189 = vmatpush1.msra.mxu0 0.0
        %1190 = vmatprep.subr.mxu0 0.0
        %1191 = vmatpush1.msra.mxu0 0.0
        %1192 = vmatprep.subr.mxu0 0.0
        %1193 = vmatpush1.msra.mxu0 0.0
        %1194 = vmatprep.subr.mxu0 0.0
        %1195 = vmatpush1.msra.mxu0 0.0
        %1196 = vmatprep.subr.mxu0 0.0
        %1197 = vmatpush1.msra.mxu0 0.0
        %1198 = vmatprep.subr.mxu0 0.0
        %1199 = vmatpush1.msra.mxu0 0.0
        %1200 = vmatprep.subr.mxu0 0.0
        %1201 = vmatpush1.msra.mxu0 0.0
        %1202 = vmatprep.subr.mxu0 0.0
        %1203 = vmatpush1.msra.mxu0 0.0
        %1204 = vmatprep.subr.mxu0 0.0
        %1205 = vmatpush1.msra.mxu0 0.0
        %1206 = vmatprep.subr.mxu0 0.0
        %1207 = vmatpush1.msra.mxu0 0.0
        %1208 = vmatprep.subr.mxu0 0.0
        %1209 = vmatpush1.msra.mxu0 0.0
        %1210 = vmatprep.subr.mxu0 0.0
        %1211 = vmatpush1.msra.mxu0 0.0
        %1212 = vmatprep.mubr.f32.mxu0 0.0
        %1213 = vmatmul.mubr.f32.gmra.mrb[0].mxu0 %v1146
        %v1214 = vpop.f32.mrb[0].mxu0
        %v1215 = vadd.f32 0.0, %v1214
        %v1216 = vpop.f32.mrb[0].mxu0
        %1217 = vdwg.mxu0
        %1218 = vrot.lane.b32.xlu0 %v412, 64
        %v1219 = vpop.permute.xlu0 %1218
        %v1222 = vsel %vm447, %v1135, 0
        %1224 = vmatprep.subr.mxu0 0.0
        %1225 = vmatpush1.msra.mxu0 %v1219
        %1226 = vmatprep.subr.mxu0 0.0
        %1227 = vmatpush1.msra.mxu0 0.0
        %1228 = vmatprep.subr.mxu0 0.0
        %1229 = vmatpush1.msra.mxu0 0.0
        %1230 = vmatprep.subr.mxu0 0.0
        %1231 = vmatpush1.msra.mxu0 0.0
        %1232 = vmatprep.subr.mxu0 0.0
        %1233 = vmatpush1.msra.mxu0 0.0
        %1234 = vmatprep.subr.mxu0 0.0
        %1235 = vmatpush1.msra.mxu0 0.0
        %1236 = vmatprep.subr.mxu0 0.0
        %1237 = vmatpush1.msra.mxu0 0.0
        %1238 = vmatprep.subr.mxu0 0.0
        %1239 = vmatpush1.msra.mxu0 0.0
        %1240 = vmatprep.subr.mxu0 0.0
        %1241 = vmatpush1.msra.mxu0 0.0
        %1242 = vmatprep.subr.mxu0 0.0
        %1243 = vmatpush1.msra.mxu0 0.0
        %1244 = vmatprep.subr.mxu0 0.0
        %1245 = vmatpush1.msra.mxu0 0.0
        %1246 = vmatprep.subr.mxu0 0.0
        %1247 = vmatpush1.msra.mxu0 0.0
        %1248 = vmatprep.subr.mxu0 0.0
        %1249 = vmatpush1.msra.mxu0 0.0
        %1250 = vmatprep.subr.mxu0 0.0
        %1251 = vmatpush1.msra.mxu0 0.0
        %1252 = vmatprep.subr.mxu0 0.0
        %1253 = vmatpush1.msra.mxu0 0.0
        %1254 = vmatprep.subr.mxu0 0.0
        %1255 = vmatpush1.msra.mxu0 0.0
        %1256 = vmatprep.subr.mxu0 0.0
        %1257 = vmatpush1.msra.mxu0 0.0
        %1258 = vmatprep.subr.mxu0 0.0
        %1259 = vmatpush1.msra.mxu0 0.0
        %1260 = vmatprep.subr.mxu0 0.0
        %1261 = vmatpush1.msra.mxu0 0.0
        %1262 = vmatprep.subr.mxu0 0.0
        %1263 = vmatpush1.msra.mxu0 0.0
        %1264 = vmatprep.subr.mxu0 0.0
        %1265 = vmatpush1.msra.mxu0 0.0
        %1266 = vmatprep.subr.mxu0 0.0
        %1267 = vmatpush1.msra.mxu0 0.0
        %1268 = vmatprep.subr.mxu0 0.0
        %1269 = vmatpush1.msra.mxu0 0.0
        %1270 = vmatprep.subr.mxu0 0.0
        %1271 = vmatpush1.msra.mxu0 0.0
        %1272 = vmatprep.subr.mxu0 0.0
        %1273 = vmatpush1.msra.mxu0 0.0
        %1274 = vmatprep.subr.mxu0 0.0
        %1275 = vmatpush1.msra.mxu0 0.0
        %1276 = vmatprep.subr.mxu0 0.0
        %1277 = vmatpush1.msra.mxu0 0.0
        %1278 = vmatprep.subr.mxu0 0.0
        %1279 = vmatpush1.msra.mxu0 0.0
        %1280 = vmatprep.subr.mxu0 0.0
        %1281 = vmatpush1.msra.mxu0 0.0
        %1282 = vmatprep.subr.mxu0 0.0
        %1283 = vmatpush1.msra.mxu0 0.0
        %1284 = vmatprep.subr.mxu0 0.0
        %1285 = vmatpush1.msra.mxu0 0.0
        %1286 = vmatprep.subr.mxu0 0.0
        %1287 = vmatpush1.msra.mxu0 0.0
        %1288 = vmatprep.mubr.f32.mxu0 0.0
        %1289 = vmatmul.mubr.f32.gmra.mrb[0].mxu0 %v1222
        %v1290 = vpop.f32.mrb[0].mxu0
        %v1291 = vadd.f32 0.0, %v1290
        %v1292 = vpop.f32.mrb[0].mxu0
        %1293 = vdwg.mxu0
        %1294 = vrot.lane.b32.xlu0 %v434, 64
        %v1295 = vpop.permute.xlu0 %1294
        %v1298 = vsel %vm447, %v1136, 0
        %1300 = vmatprep.subr.mxu0 0.0
        %1301 = vmatpush1.msra.mxu0 %v1295
        %1302 = vmatprep.subr.mxu0 0.0
        %1303 = vmatpush1.msra.mxu0 0.0
        %1304 = vmatprep.subr.mxu0 0.0
        %1305 = vmatpush1.msra.mxu0 0.0
        %1306 = vmatprep.subr.mxu0 0.0
        %1307 = vmatpush1.msra.mxu0 0.0
        %1308 = vmatprep.subr.mxu0 0.0
        %1309 = vmatpush1.msra.mxu0 0.0
        %1310 = vmatprep.subr.mxu0 0.0
        %1311 = vmatpush1.msra.mxu0 0.0
        %1312 = vmatprep.subr.mxu0 0.0
        %1313 = vmatpush1.msra.mxu0 0.0
        %1314 = vmatprep.subr.mxu0 0.0
        %1315 = vmatpush1.msra.mxu0 0.0
        %1316 = vmatprep.subr.mxu0 0.0
        %1317 = vmatpush1.msra.mxu0 0.0
        %1318 = vmatprep.subr.mxu0 0.0
        %1319 = vmatpush1.msra.mxu0 0.0
        %1320 = vmatprep.subr.mxu0 0.0
        %1321 = vmatpush1.msra.mxu0 0.0
        %1322 = vmatprep.subr.mxu0 0.0
        %1323 = vmatpush1.msra.mxu0 0.0
        %1324 = vmatprep.subr.mxu0 0.0
        %1325 = vmatpush1.msra.mxu0 0.0
        %1326 = vmatprep.subr.mxu0 0.0
        %1327 = vmatpush1.msra.mxu0 0.0
        %1328 = vmatprep.subr.mxu0 0.0
        %1329 = vmatpush1.msra.mxu0 0.0
        %1330 = vmatprep.subr.mxu0 0.0
        %1331 = vmatpush1.msra.mxu0 0.0
        %1332 = vmatprep.subr.mxu0 0.0
        %1333 = vmatpush1.msra.mxu0 0.0
        %1334 = vmatprep.subr.mxu0 0.0
        %1335 = vmatpush1.msra.mxu0 0.0
        %1336 = vmatprep.subr.mxu0 0.0
        %1337 = vmatpush1.msra.mxu0 0.0
        %1338 = vmatprep.subr.mxu0 0.0
        %1339 = vmatpush1.msra.mxu0 0.0
        %1340 = vmatprep.subr.mxu0 0.0
        %1341 = vmatpush1.msra.mxu0 0.0
        %1342 = vmatprep.subr.mxu0 0.0
        %1343 = vmatpush1.msra.mxu0 0.0
        %1344 = vmatprep.subr.mxu0 0.0
        %1345 = vmatpush1.msra.mxu0 0.0
        %1346 = vmatprep.subr.mxu0 0.0
        %1347 = vmatpush1.msra.mxu0 0.0
        %1348 = vmatprep.subr.mxu0 0.0
        %1349 = vmatpush1.msra.mxu0 0.0
        %1350 = vmatprep.subr.mxu0 0.0
        %1351 = vmatpush1.msra.mxu0 0.0
        %1352 = vmatprep.subr.mxu0 0.0
        %1353 = vmatpush1.msra.mxu0 0.0
        %1354 = vmatprep.subr.mxu0 0.0
        %1355 = vmatpush1.msra.mxu0 0.0
        %1356 = vmatprep.subr.mxu0 0.0
        %1357 = vmatpush1.msra.mxu0 0.0
        %1358 = vmatprep.subr.mxu0 0.0
        %1359 = vmatpush1.msra.mxu0 0.0
        %1360 = vmatprep.subr.mxu0 0.0
        %1361 = vmatpush1.msra.mxu0 0.0
        %1362 = vmatprep.subr.mxu0 0.0
        %1363 = vmatpush1.msra.mxu0 0.0
        %1364 = vmatprep.mubr.f32.mxu0 0.0
        %1365 = vmatmul.mubr.f32.gmra.mrb[0].mxu0 %v1298
        %v1366 = vpop.f32.mrb[0].mxu0
        %v1367 = vadd.f32 0.0, %v1366
        %v1368 = vpop.f32.mrb[0].mxu0
        %1369 = vdwg.mxu0
        %1370 = vrot.lane.b32.xlu0 %v436, 64
        %v1371 = vpop.permute.xlu0 %1370
        %v1374 = vsel %vm447, %v1137, 0
        %1376 = vmatprep.subr.mxu0 0.0
        %1377 = vmatpush1.msra.mxu0 %v1371
        %1378 = vmatprep.subr.mxu0 0.0
        %1379 = vmatpush1.msra.mxu0 0.0
        %1380 = vmatprep.subr.mxu0 0.0
        %1381 = vmatpush1.msra.mxu0 0.0
        %1382 = vmatprep.subr.mxu0 0.0
        %1383 = vmatpush1.msra.mxu0 0.0
        %1384 = vmatprep.subr.mxu0 0.0
        %1385 = vmatpush1.msra.mxu0 0.0
        %1386 = vmatprep.subr.mxu0 0.0
        %1387 = vmatpush1.msra.mxu0 0.0
        %1388 = vmatprep.subr.mxu0 0.0
        %1389 = vmatpush1.msra.mxu0 0.0
        %1390 = vmatprep.subr.mxu0 0.0
        %1391 = vmatpush1.msra.mxu0 0.0
        %1392 = vmatprep.subr.mxu0 0.0
        %1393 = vmatpush1.msra.mxu0 0.0
        %1394 = vmatprep.subr.mxu0 0.0
        %1395 = vmatpush1.msra.mxu0 0.0
        %1396 = vmatprep.subr.mxu0 0.0
        %1397 = vmatpush1.msra.mxu0 0.0
        %1398 = vmatprep.subr.mxu0 0.0
        %1399 = vmatpush1.msra.mxu0 0.0
        %1400 = vmatprep.subr.mxu0 0.0
        %1401 = vmatpush1.msra.mxu0 0.0
        %1402 = vmatprep.subr.mxu0 0.0
        %1403 = vmatpush1.msra.mxu0 0.0
        %1404 = vmatprep.subr.mxu0 0.0
        %1405 = vmatpush1.msra.mxu0 0.0
        %1406 = vmatprep.subr.mxu0 0.0
        %1407 = vmatpush1.msra.mxu0 0.0
        %1408 = vmatprep.subr.mxu0 0.0
        %1409 = vmatpush1.msra.mxu0 0.0
        %1410 = vmatprep.subr.mxu0 0.0
        %1411 = vmatpush1.msra.mxu0 0.0
        %1412 = vmatprep.subr.mxu0 0.0
        %1413 = vmatpush1.msra.mxu0 0.0
        %1414 = vmatprep.subr.mxu0 0.0
        %1415 = vmatpush1.msra.mxu0 0.0
        %1416 = vmatprep.subr.mxu0 0.0
        %1417 = vmatpush1.msra.mxu0 0.0
        %1418 = vmatprep.subr.mxu0 0.0
        %1419 = vmatpush1.msra.mxu0 0.0
        %1420 = vmatprep.subr.mxu0 0.0
        %1421 = vmatpush1.msra.mxu0 0.0
        %1422 = vmatprep.subr.mxu0 0.0
        %1423 = vmatpush1.msra.mxu0 0.0
        %1424 = vmatprep.subr.mxu0 0.0
        %1425 = vmatpush1.msra.mxu0 0.0
        %1426 = vmatprep.subr.mxu0 0.0
        %1427 = vmatpush1.msra.mxu0 0.0
        %1428 = vmatprep.subr.mxu0 0.0
        %1429 = vmatpush1.msra.mxu0 0.0
        %1430 = vmatprep.subr.mxu0 0.0
        %1431 = vmatpush1.msra.mxu0 0.0
        %1432 = vmatprep.subr.mxu0 0.0
        %1433 = vmatpush1.msra.mxu0 0.0
        %1434 = vmatprep.subr.mxu0 0.0
        %1435 = vmatpush1.msra.mxu0 0.0
        %1436 = vmatprep.subr.mxu0 0.0
        %1437 = vmatpush1.msra.mxu0 0.0
        %1438 = vmatprep.subr.mxu0 0.0
        %1439 = vmatpush1.msra.mxu0 0.0
        %1440 = vmatprep.mubr.f32.mxu0 0.0
        %1441 = vmatmul.mubr.f32.gmra.mrb[0].mxu0 %v1374
        %v1442 = vpop.f32.mrb[0].mxu0
        %v1443 = vadd.f32 0.0, %v1442
        %v1444 = vpop.f32.mrb[0].mxu0
        %1445 = vdwg.mxu0
        %1446 = vrot.lane.b32.xlu0 %v438, 64
        %v1447 = vpop.permute.xlu0 %1446
        %v1450 = vsel %vm447, %v1138, 0
        %1452 = vmatprep.subr.mxu0 0.0
        %1453 = vmatpush1.msra.mxu0 %v1447
        %1454 = vmatprep.subr.mxu0 0.0
        %1455 = vmatpush1.msra.mxu0 0.0
        %1456 = vmatprep.subr.mxu0 0.0
        %1457 = vmatpush1.msra.mxu0 0.0
        %1458 = vmatprep.subr.mxu0 0.0
        %1459 = vmatpush1.msra.mxu0 0.0
        %1460 = vmatprep.subr.mxu0 0.0
        %1461 = vmatpush1.msra.mxu0 0.0
        %1462 = vmatprep.subr.mxu0 0.0
        %1463 = vmatpush1.msra.mxu0 0.0
        %1464 = vmatprep.subr.mxu0 0.0
        %1465 = vmatpush1.msra.mxu0 0.0
        %1466 = vmatprep.subr.mxu0 0.0
        %1467 = vmatpush1.msra.mxu0 0.0
        %1468 = vmatprep.subr.mxu0 0.0
        %1469 = vmatpush1.msra.mxu0 0.0
        %1470 = vmatprep.subr.mxu0 0.0
        %1471 = vmatpush1.msra.mxu0 0.0
        %1472 = vmatprep.subr.mxu0 0.0
        %1473 = vmatpush1.msra.mxu0 0.0
        %1474 = vmatprep.subr.mxu0 0.0
        %1475 = vmatpush1.msra.mxu0 0.0
        %1476 = vmatprep.subr.mxu0 0.0
        %1477 = vmatpush1.msra.mxu0 0.0
        %1478 = vmatprep.subr.mxu0 0.0
        %1479 = vmatpush1.msra.mxu0 0.0
        %1480 = vmatprep.subr.mxu0 0.0
        %1481 = vmatpush1.msra.mxu0 0.0
        %1482 = vmatprep.subr.mxu0 0.0
        %1483 = vmatpush1.msra.mxu0 0.0
        %1484 = vmatprep.subr.mxu0 0.0
        %1485 = vmatpush1.msra.mxu0 0.0
        %1486 = vmatprep.subr.mxu0 0.0
        %1487 = vmatpush1.msra.mxu0 0.0
        %1488 = vmatprep.subr.mxu0 0.0
        %1489 = vmatpush1.msra.mxu0 0.0
        %1490 = vmatprep.subr.mxu0 0.0
        %1491 = vmatpush1.msra.mxu0 0.0
        %1492 = vmatprep.subr.mxu0 0.0
        %1493 = vmatpush1.msra.mxu0 0.0
        %1494 = vmatprep.subr.mxu0 0.0
        %1495 = vmatpush1.msra.mxu0 0.0
        %1496 = vmatprep.subr.mxu0 0.0
        %1497 = vmatpush1.msra.mxu0 0.0
        %1498 = vmatprep.subr.mxu0 0.0
        %1499 = vmatpush1.msra.mxu0 0.0
        %1500 = vmatprep.subr.mxu0 0.0
        %1501 = vmatpush1.msra.mxu0 0.0
        %1502 = vmatprep.subr.mxu0 0.0
        %1503 = vmatpush1.msra.mxu0 0.0
        %1504 = vmatprep.subr.mxu0 0.0
        %1505 = vmatpush1.msra.mxu0 0.0
        %1506 = vmatprep.subr.mxu0 0.0
        %1507 = vmatpush1.msra.mxu0 0.0
        %1508 = vmatprep.subr.mxu0 0.0
        %1509 = vmatpush1.msra.mxu0 0.0
        %1510 = vmatprep.subr.mxu0 0.0
        %1511 = vmatpush1.msra.mxu0 0.0
        %1512 = vmatprep.subr.mxu0 0.0
        %1513 = vmatpush1.msra.mxu0 0.0
        %1514 = vmatprep.subr.mxu0 0.0
        %1515 = vmatpush1.msra.mxu0 0.0
        %1516 = vmatprep.mubr.f32.mxu0 0.0
        %1517 = vmatmul.mubr.f32.gmra.mrb[0].mxu0 %v1450
        %v1518 = vpop.f32.mrb[0].mxu0
        %v1519 = vadd.f32 0.0, %v1518
        %v1520 = vpop.f32.mrb[0].mxu0
        %1521 = vdwg.mxu0
        %1522 = vrot.lane.b32.xlu0 %v440, 64
        %v1523 = vpop.permute.xlu0 %1522
        %v1526 = vsel %vm447, %v1139, 0
        %1528 = vmatprep.subr.mxu0 0.0
        %1529 = vmatpush1.msra.mxu0 %v1523
        %1530 = vmatprep.subr.mxu0 0.0
        %1531 = vmatpush1.msra.mxu0 0.0
        %1532 = vmatprep.subr.mxu0 0.0
        %1533 = vmatpush1.msra.mxu0 0.0
        %1534 = vmatprep.subr.mxu0 0.0
        %1535 = vmatpush1.msra.mxu0 0.0
        %1536 = vmatprep.subr.mxu0 0.0
        %1537 = vmatpush1.msra.mxu0 0.0
        %1538 = vmatprep.subr.mxu0 0.0
        %1539 = vmatpush1.msra.mxu0 0.0
        %1540 = vmatprep.subr.mxu0 0.0
        %1541 = vmatpush1.msra.mxu0 0.0
        %1542 = vmatprep.subr.mxu0 0.0
        %1543 = vmatpush1.msra.mxu0 0.0
        %1544 = vmatprep.subr.mxu0 0.0
        %1545 = vmatpush1.msra.mxu0 0.0
        %1546 = vmatprep.subr.mxu0 0.0
        %1547 = vmatpush1.msra.mxu0 0.0
        %1548 = vmatprep.subr.mxu0 0.0
        %1549 = vmatpush1.msra.mxu0 0.0
        %1550 = vmatprep.subr.mxu0 0.0
        %1551 = vmatpush1.msra.mxu0 0.0
        %1552 = vmatprep.subr.mxu0 0.0
        %1553 = vmatpush1.msra.mxu0 0.0
        %1554 = vmatprep.subr.mxu0 0.0
        %1555 = vmatpush1.msra.mxu0 0.0
        %1556 = vmatprep.subr.mxu0 0.0
        %1557 = vmatpush1.msra.mxu0 0.0
        %1558 = vmatprep.subr.mxu0 0.0
        %1559 = vmatpush1.msra.mxu0 0.0
        %1560 = vmatprep.subr.mxu0 0.0
        %1561 = vmatpush1.msra.mxu0 0.0
        %1562 = vmatprep.subr.mxu0 0.0
        %1563 = vmatpush1.msra.mxu0 0.0
        %1564 = vmatprep.subr.mxu0 0.0
        %1565 = vmatpush1.msra.mxu0 0.0
        %1566 = vmatprep.subr.mxu0 0.0
        %1567 = vmatpush1.msra.mxu0 0.0
        %1568 = vmatprep.subr.mxu0 0.0
        %1569 = vmatpush1.msra.mxu0 0.0
        %1570 = vmatprep.subr.mxu0 0.0
        %1571 = vmatpush1.msra.mxu0 0.0
        %1572 = vmatprep.subr.mxu0 0.0
        %1573 = vmatpush1.msra.mxu0 0.0
        %1574 = vmatprep.subr.mxu0 0.0
        %1575 = vmatpush1.msra.mxu0 0.0
        %1576 = vmatprep.subr.mxu0 0.0
        %1577 = vmatpush1.msra.mxu0 0.0
        %1578 = vmatprep.subr.mxu0 0.0
        %1579 = vmatpush1.msra.mxu0 0.0
        %1580 = vmatprep.subr.mxu0 0.0
        %1581 = vmatpush1.msra.mxu0 0.0
        %1582 = vmatprep.subr.mxu0 0.0
        %1583 = vmatpush1.msra.mxu0 0.0
        %1584 = vmatprep.subr.mxu0 0.0
        %1585 = vmatpush1.msra.mxu0 0.0
        %1586 = vmatprep.subr.mxu0 0.0
        %1587 = vmatpush1.msra.mxu0 0.0
        %1588 = vmatprep.subr.mxu0 0.0
        %1589 = vmatpush1.msra.mxu0 0.0
        %1590 = vmatprep.subr.mxu0 0.0
        %1591 = vmatpush1.msra.mxu0 0.0
        %1592 = vmatprep.mubr.f32.mxu0 0.0
        %1593 = vmatmul.mubr.f32.gmra.mrb[0].mxu0 %v1526
        %v1594 = vpop.f32.mrb[0].mxu0
        %v1595 = vadd.f32 0.0, %v1594
        %v1596 = vpop.f32.mrb[0].mxu0
        %1597 = vdwg.mxu0
        %1598 = vrot.lane.b32.xlu0 %v442, 64
        %v1599 = vpop.permute.xlu0 %1598
        %v1602 = vsel %vm447, %v1140, 0
        %1604 = vmatprep.subr.mxu0 0.0
        %1605 = vmatpush1.msra.mxu0 %v1599
        %1606 = vmatprep.subr.mxu0 0.0
        %1607 = vmatpush1.msra.mxu0 0.0
        %1608 = vmatprep.subr.mxu0 0.0
        %1609 = vmatpush1.msra.mxu0 0.0
        %1610 = vmatprep.subr.mxu0 0.0
        %1611 = vmatpush1.msra.mxu0 0.0
        %1612 = vmatprep.subr.mxu0 0.0
        %1613 = vmatpush1.msra.mxu0 0.0
        %1614 = vmatprep.subr.mxu0 0.0
        %1615 = vmatpush1.msra.mxu0 0.0
        %1616 = vmatprep.subr.mxu0 0.0
        %1617 = vmatpush1.msra.mxu0 0.0
        %1618 = vmatprep.subr.mxu0 0.0
        %1619 = vmatpush1.msra.mxu0 0.0
        %1620 = vmatprep.subr.mxu0 0.0
        %1621 = vmatpush1.msra.mxu0 0.0
        %1622 = vmatprep.subr.mxu0 0.0
        %1623 = vmatpush1.msra.mxu0 0.0
        %1624 = vmatprep.subr.mxu0 0.0
        %1625 = vmatpush1.msra.mxu0 0.0
        %1626 = vmatprep.subr.mxu0 0.0
        %1627 = vmatpush1.msra.mxu0 0.0
        %1628 = vmatprep.subr.mxu0 0.0
        %1629 = vmatpush1.msra.mxu0 0.0
        %1630 = vmatprep.subr.mxu0 0.0
        %1631 = vmatpush1.msra.mxu0 0.0
        %1632 = vmatprep.subr.mxu0 0.0
        %1633 = vmatpush1.msra.mxu0 0.0
        %1634 = vmatprep.subr.mxu0 0.0
        %1635 = vmatpush1.msra.mxu0 0.0
        %1636 = vmatprep.subr.mxu0 0.0
        %1637 = vmatpush1.msra.mxu0 0.0
        %1638 = vmatprep.subr.mxu0 0.0
        %1639 = vmatpush1.msra.mxu0 0.0
        %1640 = vmatprep.subr.mxu0 0.0
        %1641 = vmatpush1.msra.mxu0 0.0
        %1642 = vmatprep.subr.mxu0 0.0
        %1643 = vmatpush1.msra.mxu0 0.0
        %1644 = vmatprep.subr.mxu0 0.0
        %1645 = vmatpush1.msra.mxu0 0.0
        %1646 = vmatprep.subr.mxu0 0.0
        %1647 = vmatpush1.msra.mxu0 0.0
        %1648 = vmatprep.subr.mxu0 0.0
        %1649 = vmatpush1.msra.mxu0 0.0
        %1650 = vmatprep.subr.mxu0 0.0
        %1651 = vmatpush1.msra.mxu0 0.0
        %1652 = vmatprep.subr.mxu0 0.0
        %1653 = vmatpush1.msra.mxu0 0.0
        %1654 = vmatprep.subr.mxu0 0.0
        %1655 = vmatpush1.msra.mxu0 0.0
        %1656 = vmatprep.subr.mxu0 0.0
        %1657 = vmatpush1.msra.mxu0 0.0
        %1658 = vmatprep.subr.mxu0 0.0
        %1659 = vmatpush1.msra.mxu0 0.0
        %1660 = vmatprep.subr.mxu0 0.0
        %1661 = vmatpush1.msra.mxu0 0.0
        %1662 = vmatprep.subr.mxu0 0.0
        %1663 = vmatpush1.msra.mxu0 0.0
        %1664 = vmatprep.subr.mxu0 0.0
        %1665 = vmatpush1.msra.mxu0 0.0
        %1666 = vmatprep.subr.mxu0 0.0
        %1667 = vmatpush1.msra.mxu0 0.0
        %1668 = vmatprep.mubr.f32.mxu0 0.0
        %1669 = vmatmul.mubr.f32.gmra.mrb[0].mxu0 %v1602
        %v1670 = vpop.f32.mrb[0].mxu0
        %v1671 = vadd.f32 0.0, %v1670
        %v1672 = vpop.f32.mrb[0].mxu0
        %1673 = vdwg.mxu0
        %1674 = vrot.lane.b32.xlu0 %v444, 64
        %v1675 = vpop.permute.xlu0 %1674
        %v1678 = vsel %vm447, %v1141, 0
        %1680 = vmatprep.subr.mxu0 0.0
        %1681 = vmatpush1.msra.mxu0 %v1675
        %1682 = vmatprep.subr.mxu0 0.0
        %1683 = vmatpush1.msra.mxu0 0.0
        %1684 = vmatprep.subr.mxu0 0.0
        %1685 = vmatpush1.msra.mxu0 0.0
        %1686 = vmatprep.subr.mxu0 0.0
        %1687 = vmatpush1.msra.mxu0 0.0
        %1688 = vmatprep.subr.mxu0 0.0
        %1689 = vmatpush1.msra.mxu0 0.0
        %1690 = vmatprep.subr.mxu0 0.0
        %1691 = vmatpush1.msra.mxu0 0.0
        %1692 = vmatprep.subr.mxu0 0.0
        %1693 = vmatpush1.msra.mxu0 0.0
        %1694 = vmatprep.subr.mxu0 0.0
        %1695 = vmatpush1.msra.mxu0 0.0
        %1696 = vmatprep.subr.mxu0 0.0
        %1697 = vmatpush1.msra.mxu0 0.0
        %1698 = vmatprep.subr.mxu0 0.0
        %1699 = vmatpush1.msra.mxu0 0.0
        %1700 = vmatprep.subr.mxu0 0.0
        %1701 = vmatpush1.msra.mxu0 0.0
        %1702 = vmatprep.subr.mxu0 0.0
        %1703 = vmatpush1.msra.mxu0 0.0
        %1704 = vmatprep.subr.mxu0 0.0
        %1705 = vmatpush1.msra.mxu0 0.0
        %1706 = vmatprep.subr.mxu0 0.0
        %1707 = vmatpush1.msra.mxu0 0.0
        %1708 = vmatprep.subr.mxu0 0.0
        %1709 = vmatpush1.msra.mxu0 0.0
        %1710 = vmatprep.subr.mxu0 0.0
        %1711 = vmatpush1.msra.mxu0 0.0
        %1712 = vmatprep.subr.mxu0 0.0
        %1713 = vmatpush1.msra.mxu0 0.0
        %1714 = vmatprep.subr.mxu0 0.0
        %1715 = vmatpush1.msra.mxu0 0.0
        %1716 = vmatprep.subr.mxu0 0.0
        %1717 = vmatpush1.msra.mxu0 0.0
        %1718 = vmatprep.subr.mxu0 0.0
        %1719 = vmatpush1.msra.mxu0 0.0
        %1720 = vmatprep.subr.mxu0 0.0
        %1721 = vmatpush1.msra.mxu0 0.0
        %1722 = vmatprep.subr.mxu0 0.0
        %1723 = vmatpush1.msra.mxu0 0.0
        %1724 = vmatprep.subr.mxu0 0.0
        %1725 = vmatpush1.msra.mxu0 0.0
        %1726 = vmatprep.subr.mxu0 0.0
        %1727 = vmatpush1.msra.mxu0 0.0
        %1728 = vmatprep.subr.mxu0 0.0
        %1729 = vmatpush1.msra.mxu0 0.0
        %1730 = vmatprep.subr.mxu0 0.0
        %1731 = vmatpush1.msra.mxu0 0.0
        %1732 = vmatprep.subr.mxu0 0.0
        %1733 = vmatpush1.msra.mxu0 0.0
        %1734 = vmatprep.subr.mxu0 0.0
        %1735 = vmatpush1.msra.mxu0 0.0
        %1736 = vmatprep.subr.mxu0 0.0
        %1737 = vmatpush1.msra.mxu0 0.0
        %1738 = vmatprep.subr.mxu0 0.0
        %1739 = vmatpush1.msra.mxu0 0.0
        %1740 = vmatprep.subr.mxu0 0.0
        %1741 = vmatpush1.msra.mxu0 0.0
        %1742 = vmatprep.subr.mxu0 0.0
        %1743 = vmatpush1.msra.mxu0 0.0
        %1744 = vmatprep.mubr.f32.mxu0 0.0
        %1745 = vmatmul.mubr.f32.gmra.mrb[0].mxu0 %v1678
        %v1746 = vpop.f32.mrb[0].mxu0
        %v1747 = vadd.f32 0.0, %v1746
        %v1748 = vpop.f32.mrb[0].mxu0
        %1749 = vdwg.mxu0
        %1752 = vrot.lane.b32.xlu0 %v1367, 8
        %v1753 = vpop.permute.xlu0 %1752
        %1754 = vrot.lane.b32.xlu0 %v1443, 8
        %v1755 = vpop.permute.xlu0 %1754
        %1760 = vrot.lane.b32.xlu0 %v1519, 16
        %v1761 = vpop.permute.xlu0 %1760
        %1762 = vrot.lane.b32.xlu0 %v1595, 16
        %v1763 = vpop.permute.xlu0 %1762
        %1768 = vrot.lane.b32.xlu0 %v1671, 24
        %v1769 = vpop.permute.xlu0 %1768
        %1770 = vrot.lane.b32.xlu0 %v1747, 24
        %v1771 = vpop.permute.xlu0 %1770
        %v1774 = vsel %vm447, %v1215, %v1753
        %v1775 = vsel %vm447, %v1291, %v1755
        %vm1776 = vcmask 130048
        %v1777 = vsel %vm1776, %v1774, %v1761
        %v1778 = vsel %vm1776, %v1775, %v1763
        %vm1779 = vcmask 195584
        %v1780 = vsel %vm1779, %v1777, %v1769
        %v1781 = vsel %vm1779, %v1778, %v1771
        %v1782 = vlaneseq
        %v1783 = vshrl.u32 %v1782, 7
        %v1784 = vsub.s32 0, %v1783
        %v1785 = vrot.slane %v323, %v1784
        %1790 = vrot.lane.b32.xlu0 %v310, 32
        %v1791 = vpop.permute.xlu0 %1790
        %1792 = vrot.lane.b32.xlu0 %v311, 32
        %v1793 = vpop.permute.xlu0 %1792
        %1794 = vrot.lane.b32.xlu0 %v312, 32
        %v1795 = vpop.permute.xlu0 %1794
        %1796 = vrot.lane.b32.xlu0 %v313, 32
        %v1797 = vpop.permute.xlu0 %1796
        %v1803 = vsel %vm252, %v1780, 0
        %v1806 = vsel %vm252, %v1781, 0
        %1808 = vmatprep.subr.mxu0 0.0
        %1809 = vmatpush1.msra.mxu0 %v1791
        %1810 = vmatprep.subr.mxu0 0.0
        %1811 = vmatpush1.msra.mxu0 %v1793
        %1812 = vmatprep.subr.mxu0 0.0
        %1813 = vmatpush1.msra.mxu0 %v1795
        %1814 = vmatprep.subr.mxu0 0.0
        %1815 = vmatpush1.msra.mxu0 %v1797
        %1816 = vmatprep.subr.mxu0 0.0
        %1817 = vmatpush1.msra.mxu0 0.0
        %1818 = vmatprep.subr.mxu0 0.0
        %1819 = vmatpush1.msra.mxu0 0.0
        %1820 = vmatprep.subr.mxu0 0.0
        %1821 = vmatpush1.msra.mxu0 0.0
        %1822 = vmatprep.subr.mxu0 0.0
        %1823 = vmatpush1.msra.mxu0 0.0
        %1824 = vmatprep.subr.mxu0 0.0
        %1825 = vmatpush1.msra.mxu0 0.0
        %1826 = vmatprep.subr.mxu0 0.0
        %1827 = vmatpush1.msra.mxu0 0.0
        %1828 = vmatprep.subr.mxu0 0.0
        %1829 = vmatpush1.msra.mxu0 0.0
        %1830 = vmatprep.subr.mxu0 0.0
        %1831 = vmatpush1.msra.mxu0 0.0
        %1832 = vmatprep.subr.mxu0 0.0
        %1833 = vmatpush1.msra.mxu0 0.0
        %1834 = vmatprep.subr.mxu0 0.0
        %1835 = vmatpush1.msra.mxu0 0.0
        %1836 = vmatprep.subr.mxu0 0.0
        %1837 = vmatpush1.msra.mxu0 0.0
        %1838 = vmatprep.subr.mxu0 0.0
        %1839 = vmatpush1.msra.mxu0 0.0
        %1840 = vmatprep.subr.mxu0 0.0
        %1841 = vmatpush1.msra.mxu0 0.0
        %1842 = vmatprep.subr.mxu0 0.0
        %1843 = vmatpush1.msra.mxu0 0.0
        %1844 = vmatprep.subr.mxu0 0.0
        %1845 = vmatpush1.msra.mxu0 0.0
        %1846 = vmatprep.subr.mxu0 0.0
        %1847 = vmatpush1.msra.mxu0 0.0
        %1848 = vmatprep.subr.mxu0 0.0
        %1849 = vmatpush1.msra.mxu0 0.0
        %1850 = vmatprep.subr.mxu0 0.0
        %1851 = vmatpush1.msra.mxu0 0.0
        %1852 = vmatprep.subr.mxu0 0.0
        %1853 = vmatpush1.msra.mxu0 0.0
        %1854 = vmatprep.subr.mxu0 0.0
        %1855 = vmatpush1.msra.mxu0 0.0
        %1856 = vmatprep.subr.mxu0 0.0
        %1857 = vmatpush1.msra.mxu0 0.0
        %1858 = vmatprep.subr.mxu0 0.0
        %1859 = vmatpush1.msra.mxu0 0.0
        %1860 = vmatprep.subr.mxu0 0.0
        %1861 = vmatpush1.msra.mxu0 0.0
        %1862 = vmatprep.subr.mxu0 0.0
        %1863 = vmatpush1.msra.mxu0 0.0
        %1864 = vmatprep.subr.mxu0 0.0
        %1865 = vmatpush1.msra.mxu0 0.0
        %1866 = vmatprep.subr.mxu0 0.0
        %1867 = vmatpush1.msra.mxu0 0.0
        %1868 = vmatprep.subr.mxu0 0.0
        %1869 = vmatpush1.msra.mxu0 0.0
        %1870 = vmatprep.subr.mxu0 0.0
        %1871 = vmatpush1.msra.mxu0 0.0
        %1872 = vmatprep.mubr.f32.mxu0 0.0
        %1873 = vmatmul.mubr.f32.gmra.mrb[0].mxu0 %v1803
        %v1874 = vpop.f32.mrb[0].mxu0
        %v1875 = vadd.f32 %v1785, %v1874
        %v1876 = vpop.f32.mrb[0].mxu0
        %1877 = vmatprep.mubr.f32.mxu0 0.0
        %1878 = vmatmul.mubr.f32.gmra.mrb[0].mxu0 %v1806
        %v1879 = vpop.f32.mrb[0].mxu0
        %v1880 = vadd.f32 %v1785, %v1879
        %v1881 = vpop.f32.mrb[0].mxu0
        %1882 = vdwg.mxu0
        %v1883 = vadd.f32 %v1875, %v290
        %v1884 = vadd.f32 %v1880, %v291
        %v1885 = vsel %vm252, %v1883, 0.0
        %1886 = vadd.xlane.f32.xlu0 %v1885
        %v1887 = vpop.xlane.xlu0 %1886
        %v1888 = vsel %vm252, %v1884, 0.0
        %1889 = vadd.xlane.f32.xlu0 %v1888
        %v1890 = vpop.xlane.xlu0 %1889
        %v1891 = vmul.f32 %v1887, %v259
        %v1892 = vmul.f32 %v1890, %v259
        %v1893 = vsub.f32 %v1883, %v1891
        %v1894 = vsub.f32 %v1884, %v1892
        %v1895 = vmul.f32 %v1893, %v1893
        %v1896 = vmul.f32 %v1894, %v1894
        %v1897 = vsel %vm252, %v1895, 0.0
        %1898 = vadd.xlane.f32.xlu0 %v1897
        %v1899 = vpop.xlane.xlu0 %1898
        %v1900 = vsel %vm252, %v1896, 0.0
        %1901 = vadd.xlane.f32.xlu0 %v1900
        %v1902 = vpop.xlane.xlu0 %1901
        %v1903 = vmul.f32 %v1899, %v259
        %v1904 = vmul.f32 %v1902, %v259
        %v1905 = vadd.f32 %v1903, 1e-12
        %v1906 = vadd.f32 %v1904, 1e-12
        %v1907 = vrsqrt.pop %v1905
        %v1908 = vrsqrt.pop %v1906
        %v1909 = vmul.f32 %v1893, %v1907
        %v1910 = vmul.f32 %v1894, %v1908
        %v1911 = vlaneseq
        %v1912 = vshrl.u32 %v1911, 7
        %v1913 = vsub.s32 0, %v1912
        %v1914 = vrot.slane %v324, %v1913
        %v1915 = vmul.f32 %v1909, %v1914
        %v1916 = vmul.f32 %v1910, %v1914
        %v1917 = vlaneseq
        %v1918 = vshrl.u32 %v1917, 7
        %v1919 = vsub.s32 0, %v1918
        %v1920 = vrot.slane %v325, %v1919
        %v1921 = vadd.f32 %v1915, %v1920
        %v1922 = vadd.f32 %v1916, %v1920
        %v1923 = vlaneseq
        %v1924 = vshrl.u32 %v1923, 7
        %v1925 = vsub.s32 0, %v1924
        %v1926 = vrot.slane %v326, %v1925
        %v1928 = vsel %vm252, %v1921, 0
        %v1931 = vsel %vm252, %v1922, 0
        %1933 = vmatprep.subr.mxu0 0.0
        %1934 = vmatpush1.msra.mxu0 %v314
        %1935 = vmatprep.subr.mxu0 0.0
        %1936 = vmatpush1.msra.mxu0 %v315
        %1937 = vmatprep.subr.mxu0 0.0
        %1938 = vmatpush1.msra.mxu0 %v316
        %1939 = vmatprep.subr.mxu0 0.0
        %1940 = vmatpush1.msra.mxu0 %v317
        %1941 = vmatprep.subr.mxu0 0.0
        %1942 = vmatpush1.msra.mxu0 0.0
        %1943 = vmatprep.subr.mxu0 0.0
        %1944 = vmatpush1.msra.mxu0 0.0
        %1945 = vmatprep.subr.mxu0 0.0
        %1946 = vmatpush1.msra.mxu0 0.0
        %1947 = vmatprep.subr.mxu0 0.0
        %1948 = vmatpush1.msra.mxu0 0.0
        %1949 = vmatprep.subr.mxu0 0.0
        %1950 = vmatpush1.msra.mxu0 0.0
        %1951 = vmatprep.subr.mxu0 0.0
        %1952 = vmatpush1.msra.mxu0 0.0
        %1953 = vmatprep.subr.mxu0 0.0
        %1954 = vmatpush1.msra.mxu0 0.0
        %1955 = vmatprep.subr.mxu0 0.0
        %1956 = vmatpush1.msra.mxu0 0.0
        %1957 = vmatprep.subr.mxu0 0.0
        %1958 = vmatpush1.msra.mxu0 0.0
        %1959 = vmatprep.subr.mxu0 0.0
        %1960 = vmatpush1.msra.mxu0 0.0
        %1961 = vmatprep.subr.mxu0 0.0
        %1962 = vmatpush1.msra.mxu0 0.0
        %1963 = vmatprep.subr.mxu0 0.0
        %1964 = vmatpush1.msra.mxu0 0.0
        %1965 = vmatprep.subr.mxu0 0.0
        %1966 = vmatpush1.msra.mxu0 0.0
        %1967 = vmatprep.subr.mxu0 0.0
        %1968 = vmatpush1.msra.mxu0 0.0
        %1969 = vmatprep.subr.mxu0 0.0
        %1970 = vmatpush1.msra.mxu0 0.0
        %1971 = vmatprep.subr.mxu0 0.0
        %1972 = vmatpush1.msra.mxu0 0.0
        %1973 = vmatprep.subr.mxu0 0.0
        %1974 = vmatpush1.msra.mxu0 0.0
        %1975 = vmatprep.subr.mxu0 0.0
        %1976 = vmatpush1.msra.mxu0 0.0
        %1977 = vmatprep.subr.mxu0 0.0
        %1978 = vmatpush1.msra.mxu0 0.0
        %1979 = vmatprep.subr.mxu0 0.0
        %1980 = vmatpush1.msra.mxu0 0.0
        %1981 = vmatprep.subr.mxu0 0.0
        %1982 = vmatpush1.msra.mxu0 0.0
        %1983 = vmatprep.subr.mxu0 0.0
        %1984 = vmatpush1.msra.mxu0 0.0
        %1985 = vmatprep.subr.mxu0 0.0
        %1986 = vmatpush1.msra.mxu0 0.0
        %1987 = vmatprep.subr.mxu0 0.0
        %1988 = vmatpush1.msra.mxu0 0.0
        %1989 = vmatprep.subr.mxu0 0.0
        %1990 = vmatpush1.msra.mxu0 0.0
        %1991 = vmatprep.subr.mxu0 0.0
        %1992 = vmatpush1.msra.mxu0 0.0
        %1993 = vmatprep.subr.mxu0 0.0
        %1994 = vmatpush1.msra.mxu0 0.0
        %1995 = vmatprep.subr.mxu0 0.0
        %1996 = vmatpush1.msra.mxu0 0.0
        %1997 = vmatprep.mubr.f32.mxu0 0.0
        %1998 = vmatmul.mubr.f32.gmra.mrb[0].mxu0 %v1928
        %v1999 = vpop.f32.mrb[0].mxu0
        %v2000 = vadd.f32 %v1926, %v1999
        %v2001 = vpop.f32.mrb[0].mxu0
        %2002 = vmatprep.mubr.f32.mxu0 0.0
        %2003 = vmatmul.mubr.f32.gmra.mrb[0].mxu0 %v1931
        %v2004 = vpop.f32.mrb[0].mxu0
        %v2005 = vadd.f32 %v1926, %v2004
        %v2006 = vpop.f32.mrb[0].mxu0
        %2007 = vdwg.mxu0
        %v2008 = vmul.f32 %v2000, %v2000
        %v2009 = vmul.f32 %v2005, %v2005
        %v2010 = vmul.f32 %v2000, %v2008
        %v2011 = vmul.f32 %v2005, %v2009
        %v2012 = vmul.f32 %v2010, 0.044715
        %v2013 = vmul.f32 %v2011, 0.044715
        %v2014 = vadd.f32 %v2000, %v2012
        %v2015 = vadd.f32 %v2005, %v2013
        %v2016 = vmul.f32 %v2014, 0.7978846
        %v2017 = vmul.f32 %v2015, 0.7978846
        %v2018 = vtanh.pop %v2016
        %v2019 = vtanh.pop %v2017
        %v2020 = vadd.f32 %v2018, 1.0
        %v2021 = vadd.f32 %v2019, 1.0
        %v2022 = vmul.f32 %v2020, 0.5
        %v2023 = vmul.f32 %v2021, 0.5
        %v2024 = vmul.f32 %v2000, %v2022
        %v2025 = vmul.f32 %v2005, %v2023
        %v2026 = vlaneseq
        %v2027 = vshrl.u32 %v2026, 7
        %v2028 = vsub.s32 0, %v2027
        %v2029 = vrot.slane %v327, %v2028
        %2038 = vrot.lane.b32.xlu0 %v314, 64
        %v2039 = vpop.permute.xlu0 %2038
        %2040 = vrot.lane.b32.xlu0 %v315, 64
        %v2041 = vpop.permute.xlu0 %2040
        %2042 = vrot.lane.b32.xlu0 %v316, 64
        %v2043 = vpop.permute.xlu0 %2042
        %2044 = vrot.lane.b32.xlu0 %v317, 64
        %v2045 = vpop.permute.xlu0 %2044
        %2046 = vrot.lane.b32.xlu0 %v318, 64
        %v2047 = vpop.permute.xlu0 %2046
        %2048 = vrot.lane.b32.xlu0 %v319, 64
        %v2049 = vpop.permute.xlu0 %2048
        %2050 = vrot.lane.b32.xlu0 %v320, 64
        %v2051 = vpop.permute.xlu0 %2050
        %2052 = vrot.lane.b32.xlu0 %v321, 64
        %v2053 = vpop.permute.xlu0 %2052
        %vm2062 = vcmask 523264
        %v2064 = vsel %vm2062, %v2024, 0
        %v2067 = vsel %vm2062, %v2025, 0
        %2069 = vmatprep.subr.mxu0 0.0
        %2070 = vmatpush1.msra.mxu0 %v2039
        %2071 = vmatprep.subr.mxu0 0.0
        %2072 = vmatpush1.msra.mxu0 %v2041
        %2073 = vmatprep.subr.mxu0 0.0
        %2074 = vmatpush1.msra.mxu0 %v2043
        %2075 = vmatprep.subr.mxu0 0.0
        %2076 = vmatpush1.msra.mxu0 %v2045
        %2077 = vmatprep.subr.mxu0 0.0
        %2078 = vmatpush1.msra.mxu0 %v2047
        %2079 = vmatprep.subr.mxu0 0.0
        %2080 = vmatpush1.msra.mxu0 %v2049
        %2081 = vmatprep.subr.mxu0 0.0
        %2082 = vmatpush1.msra.mxu0 %v2051
        %2083 = vmatprep.subr.mxu0 0.0
        %2084 = vmatpush1.msra.mxu0 %v2053
        %2085 = vmatprep.subr.mxu0 0.0
        %2086 = vmatpush1.msra.mxu0 0.0
        %2087 = vmatprep.subr.mxu0 0.0
        %2088 = vmatpush1.msra.mxu0 0.0
        %2089 = vmatprep.subr.mxu0 0.0
        %2090 = vmatpush1.msra.mxu0 0.0
        %2091 = vmatprep.subr.mxu0 0.0
        %2092 = vmatpush1.msra.mxu0 0.0
        %2093 = vmatprep.subr.mxu0 0.0
        %2094 = vmatpush1.msra.mxu0 0.0
        %2095 = vmatprep.subr.mxu0 0.0
        %2096 = vmatpush1.msra.mxu0 0.0
        %2097 = vmatprep.subr.mxu0 0.0
        %2098 = vmatpush1.msra.mxu0 0.0
        %2099 = vmatprep.subr.mxu0 0.0
        %2100 = vmatpush1.msra.mxu0 0.0
        %2101 = vmatprep.subr.mxu0 0.0
        %2102 = vmatpush1.msra.mxu0 0.0
        %2103 = vmatprep.subr.mxu0 0.0
        %2104 = vmatpush1.msra.mxu0 0.0
        %2105 = vmatprep.subr.mxu0 0.0
        %2106 = vmatpush1.msra.mxu0 0.0
        %2107 = vmatprep.subr.mxu0 0.0
        %2108 = vmatpush1.msra.mxu0 0.0
        %2109 = vmatprep.subr.mxu0 0.0
        %2110 = vmatpush1.msra.mxu0 0.0
        %2111 = vmatprep.subr.mxu0 0.0
        %2112 = vmatpush1.msra.mxu0 0.0
        %2113 = vmatprep.subr.mxu0 0.0
        %2114 = vmatpush1.msra.mxu0 0.0
        %2115 = vmatprep.subr.mxu0 0.0
        %2116 = vmatpush1.msra.mxu0 0.0
        %2117 = vmatprep.subr.mxu0 0.0
        %2118 = vmatpush1.msra.mxu0 0.0
        %2119 = vmatprep.subr.mxu0 0.0
        %2120 = vmatpush1.msra.mxu0 0.0
        %2121 = vmatprep.subr.mxu0 0.0
        %2122 = vmatpush1.msra.mxu0 0.0
        %2123 = vmatprep.subr.mxu0 0.0
        %2124 = vmatpush1.msra.mxu0 0.0
        %2125 = vmatprep.subr.mxu0 0.0
        %2126 = vmatpush1.msra.mxu0 0.0
        %2127 = vmatprep.subr.mxu0 0.0
        %2128 = vmatpush1.msra.mxu0 0.0
        %2129 = vmatprep.subr.mxu0 0.0
        %2130 = vmatpush1.msra.mxu0 0.0
        %2131 = vmatprep.subr.mxu0 0.0
        %2132 = vmatpush1.msra.mxu0 0.0
        %2133 = vmatprep.mubr.f32.mxu0 0.0
        %2134 = vmatmul.mubr.f32.gmra.mrb[0].mxu0 %v2064
        %v2135 = vpop.f32.mrb[0].mxu0
        %v2136 = vadd.f32 %v2029, %v2135
        %v2137 = vpop.f32.mrb[0].mxu0
        %2138 = vmatprep.mubr.f32.mxu0 0.0
        %2139 = vmatmul.mubr.f32.gmra.mrb[0].mxu0 %v2067
        %v2140 = vpop.f32.mrb[0].mxu0
        %v2141 = vadd.f32 %v2029, %v2140
        %v2142 = vpop.f32.mrb[0].mxu0
        %2143 = vdwg.mxu0
        %v2144 = vadd.f32 %v2136, %v1921
        %v2145 = vadd.f32 %v2141, %v1922
        %v2146 = vsel %vm252, %v2144, 0.0
        %2147 = vadd.xlane.f32.xlu0 %v2146
        %v2148 = vpop.xlane.xlu0 %2147
        %v2149 = vsel %vm252, %v2145, 0.0
        %2150 = vadd.xlane.f32.xlu0 %v2149
        %v2151 = vpop.xlane.xlu0 %2150
        %v2152 = vmul.f32 %v2148, %v259
        %v2153 = vmul.f32 %v2151, %v259
        %v2154 = vsub.f32 %v2144, %v2152
        %v2155 = vsub.f32 %v2145, %v2153
        %v2156 = vmul.f32 %v2154, %v2154
        %v2157 = vmul.f32 %v2155, %v2155
        %v2158 = vsel %vm252, %v2156, 0.0
        %2159 = vadd.xlane.f32.xlu0 %v2158
        %v2160 = vpop.xlane.xlu0 %2159
        %v2161 = vsel %vm252, %v2157, 0.0
        %2162 = vadd.xlane.f32.xlu0 %v2161
        %v2163 = vpop.xlane.xlu0 %2162
        %v2164 = vmul.f32 %v2160, %v259
        %v2165 = vmul.f32 %v2163, %v259
        %v2166 = vadd.f32 %v2164, 1e-12
        %v2167 = vadd.f32 %v2165, 1e-12
        %v2168 = vrsqrt.pop %v2166
        %v2169 = vrsqrt.pop %v2167
        %v2170 = vmul.f32 %v2154, %v2168
        %v2171 = vmul.f32 %v2155, %v2169
        %v2172 = vlaneseq
        %v2173 = vshrl.u32 %v2172, 7
        %v2174 = vsub.s32 0, %v2173
        %v2175 = vrot.slane %v328, %v2174
        %v2176 = vmul.f32 %v2170, %v2175
        %v2177 = vmul.f32 %v2171, %v2175
        %v2178 = vlaneseq
        %v2179 = vshrl.u32 %v2178, 7
        %v2180 = vsub.s32 0, %v2179
        %v2181 = vrot.slane %v329, %v2180
        %v2182 = vadd.f32 %v2176, %v2181
        %v2183 = vadd.f32 %v2177, %v2181
        %s2184 = scalar_lea.vmem %s2, 128
        %v2185 = vld [vmem:[%s2184] sm:$0xff]
        %v2186 = vld [vmem:[%s2184 + $0x10] sm:$0xff]
        %v2187 = vld [vmem:[%s2184 + $0x20] sm:$0xff]
        %v2188 = vld [vmem:[%s2184 + $0x30] sm:$0xff]
        %v2189 = vld [vmem:[%s2184 + $0x8] sm:$0xff]
        %v2190 = vld [vmem:[%s2184 + $0x18] sm:$0xff]
        %v2191 = vld [vmem:[%s2184 + $0x28] sm:$0xff]
        %v2192 = vld [vmem:[%s2184 + $0x38] sm:$0xff]
        %v2193 = vld [vmem:[%s2184 + $0x48] sm:$0xff]
        %v2194 = vld [vmem:[%s2184 + $0x58] sm:$0xff]
        %v2195 = vld [vmem:[%s2184 + $0x68] sm:$0xff]
        %v2196 = vld [vmem:[%s2184 + $0x78] sm:$0xff]
        %s2197 = scalar_lea.vmem %s3, 8
        %v2198 = vld [vmem:[%s2197] sm:$0x1]
        %v2199 = vld [vmem:[%s2197 + $0x1] sm:$0x1]
        %v2200 = vld [vmem:[%s2197 + $0x2] sm:$0x1]
        %v2201 = vld [vmem:[%s2197 + $0x3] sm:$0x1]
        %v2202 = vld [vmem:[%s2197 + $0x4] sm:$0x1]
        %v2203 = vld [vmem:[%s2197 + $0x5] sm:$0x1]
        %v2204 = vld [vmem:[%s2197 + $0x6] sm:$0x1]
        %v2205 = vld [vmem:[%s2197 + $0x7] sm:$0x1]
        %v2206 = vlaneseq
        %v2207 = vshrl.u32 %v2206, 7
        %v2208 = vsub.s32 0, %v2207
        %v2209 = vrot.slane %v2198, %v2208
        %v2211 = vsel %vm252, %v2182, 0
        %v2214 = vsel %vm252, %v2183, 0
        %2216 = vmatprep.subr.mxu0 0.0
        %2217 = vmatpush1.msra.mxu0 %v2185
        %2218 = vmatprep.subr.mxu0 0.0
        %2219 = vmatpush1.msra.mxu0 %v2186
        %2220 = vmatprep.subr.mxu0 0.0
        %2221 = vmatpush1.msra.mxu0 %v2187
        %2222 = vmatprep.subr.mxu0 0.0
        %2223 = vmatpush1.msra.mxu0 %v2188
        %2224 = vmatprep.subr.mxu0 0.0
        %2225 = vmatpush1.msra.mxu0 0.0
        %2226 = vmatprep.subr.mxu0 0.0
        %2227 = vmatpush1.msra.mxu0 0.0
        %2228 = vmatprep.subr.mxu0 0.0
        %2229 = vmatpush1.msra.mxu0 0.0
        %2230 = vmatprep.subr.mxu0 0.0
        %2231 = vmatpush1.msra.mxu0 0.0
        %2232 = vmatprep.subr.mxu0 0.0
        %2233 = vmatpush1.msra.mxu0 0.0
        %2234 = vmatprep.subr.mxu0 0.0
        %2235 = vmatpush1.msra.mxu0 0.0
        %2236 = vmatprep.subr.mxu0 0.0
        %2237 = vmatpush1.msra.mxu0 0.0
        %2238 = vmatprep.subr.mxu0 0.0
        %2239 = vmatpush1.msra.mxu0 0.0
        %2240 = vmatprep.subr.mxu0 0.0
        %2241 = vmatpush1.msra.mxu0 0.0
        %2242 = vmatprep.subr.mxu0 0.0
        %2243 = vmatpush1.msra.mxu0 0.0
        %2244 = vmatprep.subr.mxu0 0.0
        %2245 = vmatpush1.msra.mxu0 0.0
        %2246 = vmatprep.subr.mxu0 0.0
        %2247 = vmatpush1.msra.mxu0 0.0
        %2248 = vmatprep.subr.mxu0 0.0
        %2249 = vmatpush1.msra.mxu0 0.0
        %2250 = vmatprep.subr.mxu0 0.0
        %2251 = vmatpush1.msra.mxu0 0.0
        %2252 = vmatprep.subr.mxu0 0.0
        %2253 = vmatpush1.msra.mxu0 0.0
        %2254 = vmatprep.subr.mxu0 0.0
        %2255 = vmatpush1.msra.mxu0 0.0
        %2256 = vmatprep.subr.mxu0 0.0
        %2257 = vmatpush1.msra.mxu0 0.0
        %2258 = vmatprep.subr.mxu0 0.0
        %2259 = vmatpush1.msra.mxu0 0.0
        %2260 = vmatprep.subr.mxu0 0.0
        %2261 = vmatpush1.msra.mxu0 0.0
        %2262 = vmatprep.subr.mxu0 0.0
        %2263 = vmatpush1.msra.mxu0 0.0
        %2264 = vmatprep.subr.mxu0 0.0
        %2265 = vmatpush1.msra.mxu0 0.0
        %2266 = vmatprep.subr.mxu0 0.0
        %2267 = vmatpush1.msra.mxu0 0.0
        %2268 = vmatprep.subr.mxu0 0.0
        %2269 = vmatpush1.msra.mxu0 0.0
        %2270 = vmatprep.subr.mxu0 0.0
        %2271 = vmatpush1.msra.mxu0 0.0
        %2272 = vmatprep.subr.mxu0 0.0
        %2273 = vmatpush1.msra.mxu0 0.0
        %2274 = vmatprep.subr.mxu0 0.0
        %2275 = vmatpush1.msra.mxu0 0.0
        %2276 = vmatprep.subr.mxu0 0.0
        %2277 = vmatpush1.msra.mxu0 0.0
        %2278 = vmatprep.subr.mxu0 0.0
        %2279 = vmatpush1.msra.mxu0 0.0
        %2280 = vmatprep.mubr.f32.mxu0 0.0
        %2281 = vmatmul.mubr.f32.gmra.mrb[0].mxu0 %v2211
        %v2282 = vpop.f32.mrb[0].mxu0
        %v2283 = vadd.f32 %v2209, %v2282
        %v2284 = vpop.f32.mrb[0].mxu0
        %2285 = vmatprep.mubr.f32.mxu0 0.0
        %2286 = vmatmul.mubr.f32.gmra.mrb[0].mxu0 %v2214
        %v2287 = vpop.f32.mrb[0].mxu0
        %v2288 = vadd.f32 %v2209, %v2287
        %v2289 = vpop.f32.mrb[0].mxu0
        %2290 = vdwg.mxu0
        %v2291 = vmul.f32 %v2283, 0.35355338
        %v2292 = vmul.f32 %v2288, 0.35355338
        %2295 = vrot.lane.b32.xlu0 %v2291, 120
        %v2296 = vpop.permute.xlu0 %2295
        %2297 = vrot.lane.b32.xlu0 %v2292, 120
        %v2298 = vpop.permute.xlu0 %2297
        %2299 = vrot.lane.b32.xlu0 %v2291, 112
        %v2300 = vpop.permute.xlu0 %2299
        %2301 = vrot.lane.b32.xlu0 %v2292, 112
        %v2302 = vpop.permute.xlu0 %2301
        %2303 = vrot.lane.b32.xlu0 %v2291, 104
        %v2304 = vpop.permute.xlu0 %2303
        %2305 = vrot.lane.b32.xlu0 %v2292, 104
        %v2306 = vpop.permute.xlu0 %2305
        %2309 = vrot.lane.b32.xlu0 %v2283, 120
        %v2310 = vpop.permute.xlu0 %2309
        %2311 = vrot.lane.b32.xlu0 %v2288, 120
        %v2312 = vpop.permute.xlu0 %2311
        %2313 = vrot.lane.b32.xlu0 %v2283, 112
        %v2314 = vpop.permute.xlu0 %2313
        %2315 = vrot.lane.b32.xlu0 %v2288, 112
        %v2316 = vpop.permute.xlu0 %2315
        %2317 = vrot.lane.b32.xlu0 %v2283, 104
        %v2318 = vpop.permute.xlu0 %2317
        %2319 = vrot.lane.b32.xlu0 %v2288, 104
        %v2320 = vpop.permute.xlu0 %2319
        %2321 = vrot.lane.b32.xlu0 %v2283, 96
        %v2322 = vpop.permute.xlu0 %2321
        %v2323 = vsel %vm447, %v2291, 0
        %v2325 = vsel %vm447, %v2322, 0
        %2327 = vmatprep.subr.mxu0 0.0
        %2328 = vmatpush1.xpose.msra.mxu0 %v2325
        %2329 = vmatprep.subr.mxu0 0.0
        %2330 = vmatpush1.xpose.msra.mxu0 0.0
        %2331 = vmatprep.subr.mxu0 0.0
        %2332 = vmatpush1.xpose.msra.mxu0 0.0
        %2333 = vmatprep.subr.mxu0 0.0
        %2334 = vmatpush1.xpose.msra.mxu0 0.0
        %2335 = vmatprep.subr.mxu0 0.0
        %2336 = vmatpush1.xpose.msra.mxu0 0.0
        %2337 = vmatprep.subr.mxu0 0.0
        %2338 = vmatpush1.xpose.msra.mxu0 0.0
        %2339 = vmatprep.subr.mxu0 0.0
        %2340 = vmatpush1.xpose.msra.mxu0 0.0
        %2341 = vmatprep.subr.mxu0 0.0
        %2342 = vmatpush1.xpose.msra.mxu0 0.0
        %2343 = vmatprep.subr.mxu0 0.0
        %2344 = vmatpush1.xpose.msra.mxu0 0.0
        %2345 = vmatprep.subr.mxu0 0.0
        %2346 = vmatpush1.xpose.msra.mxu0 0.0
        %2347 = vmatprep.subr.mxu0 0.0
        %2348 = vmatpush1.xpose.msra.mxu0 0.0
        %2349 = vmatprep.subr.mxu0 0.0
        %2350 = vmatpush1.xpose.msra.mxu0 0.0
        %2351 = vmatprep.subr.mxu0 0.0
        %2352 = vmatpush1.xpose.msra.mxu0 0.0
        %2353 = vmatprep.subr.mxu0 0.0
        %2354 = vmatpush1.xpose.msra.mxu0 0.0
        %2355 = vmatprep.subr.mxu0 0.0
        %2356 = vmatpush1.xpose.msra.mxu0 0.0
        %2357 = vmatprep.subr.mxu0 0.0
        %2358 = vmatpush1.xpose.msra.mxu0 0.0
        %2359 = vmatprep.subr.mxu0 0.0
        %2360 = vmatpush1.xpose.msra.mxu0 0.0
        %2361 = vmatprep.subr.mxu0 0.0
        %2362 = vmatpush1.xpose.msra.mxu0 0.0
        %2363 = vmatprep.subr.mxu0 0.0
        %2364 = vmatpush1.xpose.msra.mxu0 0.0
        %2365 = vmatprep.subr.mxu0 0.0
        %2366 = vmatpush1.xpose.msra.mxu0 0.0
        %2367 = vmatprep.subr.mxu0 0.0
        %2368 = vmatpush1.xpose.msra.mxu0 0.0
        %2369 = vmatprep.subr.mxu0 0.0
        %2370 = vmatpush1.xpose.msra.mxu0 0.0
        %2371 = vmatprep.subr.mxu0 0.0
        %2372 = vmatpush1.xpose.msra.mxu0 0.0
        %2373 = vmatprep.subr.mxu0 0.0
        %2374 = vmatpush1.xpose.msra.mxu0 0.0
        %2375 = vmatprep.subr.mxu0 0.0
        %2376 = vmatpush1.xpose.msra.mxu0 0.0
        %2377 = vmatprep.subr.mxu0 0.0
        %2378 = vmatpush1.xpose.msra.mxu0 0.0
        %2379 = vmatprep.subr.mxu0 0.0
        %2380 = vmatpush1.xpose.msra.mxu0 0.0
        %2381 = vmatprep.subr.mxu0 0.0
        %2382 = vmatpush1.xpose.msra.mxu0 0.0
        %2383 = vmatprep.subr.mxu0 0.0
        %2384 = vmatpush1.xpose.msra.mxu0 0.0
        %2385 = vmatprep.subr.mxu0 0.0
        %2386 = vmatpush1.xpose.msra.mxu0 0.0
        %2387 = vmatprep.subr.mxu0 0.0
        %2388 = vmatpush1.xpose.msra.mxu0 0.0
        %2389 = vmatprep.subr.mxu0 0.0
        %2390 = vmatpush1.xpose.msra.mxu0 0.0
        %2391 = vmatprep.mubr.f32.mxu0 0.0
        %2392 = vmatmul.mubr.f32.gmra.mrb[0].mxu0 %v2323
        %v2393 = vpop.f32.mrb[0].mxu0
        %v2394 = vadd.f32 %v303, %v2393
        %v2395 = vpop.f32.mrb[0].mxu0
        %2396 = vdwg.mxu0
        %2397 = vrot.lane.b32.xlu0 %v2288, 96
        %v2398 = vpop.permute.xlu0 %2397
        %v2399 = vsel %vm447, %v2292, 0
        %v2401 = vsel %vm447, %v2398, 0
        %2403 = vmatprep.subr.mxu0 0.0
        %2404 = vmatpush1.xpose.msra.mxu0 %v2401
        %2405 = vmatprep.subr.mxu0 0.0
        %2406 = vmatpush1.xpose.msra.mxu0 0.0
        %2407 = vmatprep.subr.mxu0 0.0
        %2408 = vmatpush1.xpose.msra.mxu0 0.0
        %2409 = vmatprep.subr.mxu0 0.0
        %2410 = vmatpush1.xpose.msra.mxu0 0.0
        %2411 = vmatprep.subr.mxu0 0.0
        %2412 = vmatpush1.xpose.msra.mxu0 0.0
        %2413 = vmatprep.subr.mxu0 0.0
        %2414 = vmatpush1.xpose.msra.mxu0 0.0
        %2415 = vmatprep.subr.mxu0 0.0
        %2416 = vmatpush1.xpose.msra.mxu0 0.0
        %2417 = vmatprep.subr.mxu0 0.0
        %2418 = vmatpush1.xpose.msra.mxu0 0.0
        %2419 = vmatprep.subr.mxu0 0.0
        %2420 = vmatpush1.xpose.msra.mxu0 0.0
        %2421 = vmatprep.subr.mxu0 0.0
        %2422 = vmatpush1.xpose.msra.mxu0 0.0
        %2423 = vmatprep.subr.mxu0 0.0
        %2424 = vmatpush1.xpose.msra.mxu0 0.0
        %2425 = vmatprep.subr.mxu0 0.0
        %2426 = vmatpush1.xpose.msra.mxu0 0.0
        %2427 = vmatprep.subr.mxu0 0.0
        %2428 = vmatpush1.xpose.msra.mxu0 0.0
        %2429 = vmatprep.subr.mxu0 0.0
        %2430 = vmatpush1.xpose.msra.mxu0 0.0
        %2431 = vmatprep.subr.mxu0 0.0
        %2432 = vmatpush1.xpose.msra.mxu0 0.0
        %2433 = vmatprep.subr.mxu0 0.0
        %2434 = vmatpush1.xpose.msra.mxu0 0.0
        %2435 = vmatprep.subr.mxu0 0.0
        %2436 = vmatpush1.xpose.msra.mxu0 0.0
        %2437 = vmatprep.subr.mxu0 0.0
        %2438 = vmatpush1.xpose.msra.mxu0 0.0
        %2439 = vmatprep.subr.mxu0 0.0
        %2440 = vmatpush1.xpose.msra.mxu0 0.0
        %2441 = vmatprep.subr.mxu0 0.0
        %2442 = vmatpush1.xpose.msra.mxu0 0.0
        %2443 = vmatprep.subr.mxu0 0.0
        %2444 = vmatpush1.xpose.msra.mxu0 0.0
        %2445 = vmatprep.subr.mxu0 0.0
        %2446 = vmatpush1.xpose.msra.mxu0 0.0
        %2447 = vmatprep.subr.mxu0 0.0
        %2448 = vmatpush1.xpose.msra.mxu0 0.0
        %2449 = vmatprep.subr.mxu0 0.0
        %2450 = vmatpush1.xpose.msra.mxu0 0.0
        %2451 = vmatprep.subr.mxu0 0.0
        %2452 = vmatpush1.xpose.msra.mxu0 0.0
        %2453 = vmatprep.subr.mxu0 0.0
        %2454 = vmatpush1.xpose.msra.mxu0 0.0
        %2455 = vmatprep.subr.mxu0 0.0
        %2456 = vmatpush1.xpose.msra.mxu0 0.0
        %2457 = vmatprep.subr.mxu0 0.0
        %2458 = vmatpush1.xpose.msra.mxu0 0.0
        %2459 = vmatprep.subr.mxu0 0.0
        %2460 = vmatpush1.xpose.msra.mxu0 0.0
        %2461 = vmatprep.subr.mxu0 0.0
        %2462 = vmatpush1.xpose.msra.mxu0 0.0
        %2463 = vmatprep.subr.mxu0 0.0
        %2464 = vmatpush1.xpose.msra.mxu0 0.0
        %2465 = vmatprep.subr.mxu0 0.0
        %2466 = vmatpush1.xpose.msra.mxu0 0.0
        %2467 = vmatprep.mubr.f32.mxu0 0.0
        %2468 = vmatmul.mubr.f32.gmra.mrb[0].mxu0 %v2399
        %v2469 = vpop.f32.mrb[0].mxu0
        %v2470 = vadd.f32 %v307, %v2469
        %v2471 = vpop.f32.mrb[0].mxu0
        %2472 = vdwg.mxu0
        %2473 = vrot.lane.b32.xlu0 %v2310, 96
        %v2474 = vpop.permute.xlu0 %2473
        %v2475 = vsel %vm447, %v2296, 0
        %v2477 = vsel %vm447, %v2474, 0
        %2479 = vmatprep.subr.mxu0 0.0
        %2480 = vmatpush1.xpose.msra.mxu0 %v2477
        %2481 = vmatprep.subr.mxu0 0.0
        %2482 = vmatpush1.xpose.msra.mxu0 0.0
        %2483 = vmatprep.subr.mxu0 0.0
        %2484 = vmatpush1.xpose.msra.mxu0 0.0
        %2485 = vmatprep.subr.mxu0 0.0
        %2486 = vmatpush1.xpose.msra.mxu0 0.0
        %2487 = vmatprep.subr.mxu0 0.0
        %2488 = vmatpush1.xpose.msra.mxu0 0.0
        %2489 = vmatprep.subr.mxu0 0.0
        %2490 = vmatpush1.xpose.msra.mxu0 0.0
        %2491 = vmatprep.subr.mxu0 0.0
        %2492 = vmatpush1.xpose.msra.mxu0 0.0
        %2493 = vmatprep.subr.mxu0 0.0
        %2494 = vmatpush1.xpose.msra.mxu0 0.0
        %2495 = vmatprep.subr.mxu0 0.0
        %2496 = vmatpush1.xpose.msra.mxu0 0.0
        %2497 = vmatprep.subr.mxu0 0.0
        %2498 = vmatpush1.xpose.msra.mxu0 0.0
        %2499 = vmatprep.subr.mxu0 0.0
        %2500 = vmatpush1.xpose.msra.mxu0 0.0
        %2501 = vmatprep.subr.mxu0 0.0
        %2502 = vmatpush1.xpose.msra.mxu0 0.0
        %2503 = vmatprep.subr.mxu0 0.0
        %2504 = vmatpush1.xpose.msra.mxu0 0.0
        %2505 = vmatprep.subr.mxu0 0.0
        %2506 = vmatpush1.xpose.msra.mxu0 0.0
        %2507 = vmatprep.subr.mxu0 0.0
        %2508 = vmatpush1.xpose.msra.mxu0 0.0
        %2509 = vmatprep.subr.mxu0 0.0
        %2510 = vmatpush1.xpose.msra.mxu0 0.0
        %2511 = vmatprep.subr.mxu0 0.0
        %2512 = vmatpush1.xpose.msra.mxu0 0.0
        %2513 = vmatprep.subr.mxu0 0.0
        %2514 = vmatpush1.xpose.msra.mxu0 0.0
        %2515 = vmatprep.subr.mxu0 0.0
        %2516 = vmatpush1.xpose.msra.mxu0 0.0
        %2517 = vmatprep.subr.mxu0 0.0
        %2518 = vmatpush1.xpose.msra.mxu0 0.0
        %2519 = vmatprep.subr.mxu0 0.0
        %2520 = vmatpush1.xpose.msra.mxu0 0.0
        %2521 = vmatprep.subr.mxu0 0.0
        %2522 = vmatpush1.xpose.msra.mxu0 0.0
        %2523 = vmatprep.subr.mxu0 0.0
        %2524 = vmatpush1.xpose.msra.mxu0 0.0
        %2525 = vmatprep.subr.mxu0 0.0
        %2526 = vmatpush1.xpose.msra.mxu0 0.0
        %2527 = vmatprep.subr.mxu0 0.0
        %2528 = vmatpush1.xpose.msra.mxu0 0.0
        %2529 = vmatprep.subr.mxu0 0.0
        %2530 = vmatpush1.xpose.msra.mxu0 0.0
        %2531 = vmatprep.subr.mxu0 0.0
        %2532 = vmatpush1.xpose.msra.mxu0 0.0
        %2533 = vmatprep.subr.mxu0 0.0
        %2534 = vmatpush1.xpose.msra.mxu0 0.0
        %2535 = vmatprep.subr.mxu0 0.0
        %2536 = vmatpush1.xpose.msra.mxu0 0.0
        %2537 = vmatprep.subr.mxu0 0.0
        %2538 = vmatpush1.xpose.msra.mxu0 0.0
        %2539 = vmatprep.subr.mxu0 0.0
        %2540 = vmatpush1.xpose.msra.mxu0 0.0
        %2541 = vmatprep.subr.mxu0 0.0
        %2542 = vmatpush1.xpose.msra.mxu0 0.0
        %2543 = vmatprep.mubr.f32.mxu0 0.0
        %2544 = vmatmul.mubr.f32.gmra.mrb[0].mxu0 %v2475
        %v2545 = vpop.f32.mrb[0].mxu0
        %v2546 = vadd.f32 %v303, %v2545
        %v2547 = vpop.f32.mrb[0].mxu0
        %2548 = vdwg.mxu0
        %2549 = vrot.lane.b32.xlu0 %v2312, 96
        %v2550 = vpop.permute.xlu0 %2549
        %v2551 = vsel %vm447, %v2298, 0
        %v2553 = vsel %vm447, %v2550, 0
        %2555 = vmatprep.subr.mxu0 0.0
        %2556 = vmatpush1.xpose.msra.mxu0 %v2553
        %2557 = vmatprep.subr.mxu0 0.0
        %2558 = vmatpush1.xpose.msra.mxu0 0.0
        %2559 = vmatprep.subr.mxu0 0.0
        %2560 = vmatpush1.xpose.msra.mxu0 0.0
        %2561 = vmatprep.subr.mxu0 0.0
        %2562 = vmatpush1.xpose.msra.mxu0 0.0
        %2563 = vmatprep.subr.mxu0 0.0
        %2564 = vmatpush1.xpose.msra.mxu0 0.0
        %2565 = vmatprep.subr.mxu0 0.0
        %2566 = vmatpush1.xpose.msra.mxu0 0.0
        %2567 = vmatprep.subr.mxu0 0.0
        %2568 = vmatpush1.xpose.msra.mxu0 0.0
        %2569 = vmatprep.subr.mxu0 0.0
        %2570 = vmatpush1.xpose.msra.mxu0 0.0
        %2571 = vmatprep.subr.mxu0 0.0
        %2572 = vmatpush1.xpose.msra.mxu0 0.0
        %2573 = vmatprep.subr.mxu0 0.0
        %2574 = vmatpush1.xpose.msra.mxu0 0.0
        %2575 = vmatprep.subr.mxu0 0.0
        %2576 = vmatpush1.xpose.msra.mxu0 0.0
        %2577 = vmatprep.subr.mxu0 0.0
        %2578 = vmatpush1.xpose.msra.mxu0 0.0
        %2579 = vmatprep.subr.mxu0 0.0
        %2580 = vmatpush1.xpose.msra.mxu0 0.0
        %2581 = vmatprep.subr.mxu0 0.0
        %2582 = vmatpush1.xpose.msra.mxu0 0.0
        %2583 = vmatprep.subr.mxu0 0.0
        %2584 = vmatpush1.xpose.msra.mxu0 0.0
        %2585 = vmatprep.subr.mxu0 0.0
        %2586 = vmatpush1.xpose.msra.mxu0 0.0
        %2587 = vmatprep.subr.mxu0 0.0
        %2588 = vmatpush1.xpose.msra.mxu0 0.0
        %2589 = vmatprep.subr.mxu0 0.0
        %2590 = vmatpush1.xpose.msra.mxu0 0.0
        %2591 = vmatprep.subr.mxu0 0.0
        %2592 = vmatpush1.xpose.msra.mxu0 0.0
        %2593 = vmatprep.subr.mxu0 0.0
        %2594 = vmatpush1.xpose.msra.mxu0 0.0
        %2595 = vmatprep.subr.mxu0 0.0
        %2596 = vmatpush1.xpose.msra.mxu0 0.0
        %2597 = vmatprep.subr.mxu0 0.0
        %2598 = vmatpush1.xpose.msra.mxu0 0.0
        %2599 = vmatprep.subr.mxu0 0.0
        %2600 = vmatpush1.xpose.msra.mxu0 0.0
        %2601 = vmatprep.subr.mxu0 0.0
        %2602 = vmatpush1.xpose.msra.mxu0 0.0
        %2603 = vmatprep.subr.mxu0 0.0
        %2604 = vmatpush1.xpose.msra.mxu0 0.0
        %2605 = vmatprep.subr.mxu0 0.0
        %2606 = vmatpush1.xpose.msra.mxu0 0.0
        %2607 = vmatprep.subr.mxu0 0.0
        %2608 = vmatpush1.xpose.msra.mxu0 0.0
        %2609 = vmatprep.subr.mxu0 0.0
        %2610 = vmatpush1.xpose.msra.mxu0 0.0
        %2611 = vmatprep.subr.mxu0 0.0
        %2612 = vmatpush1.xpose.msra.mxu0 0.0
        %2613 = vmatprep.subr.mxu0 0.0
        %2614 = vmatpush1.xpose.msra.mxu0 0.0
        %2615 = vmatprep.subr.mxu0 0.0
        %2616 = vmatpush1.xpose.msra.mxu0 0.0
        %2617 = vmatprep.subr.mxu0 0.0
        %2618 = vmatpush1.xpose.msra.mxu0 0.0
        %2619 = vmatprep.mubr.f32.mxu0 0.0
        %2620 = vmatmul.mubr.f32.gmra.mrb[0].mxu0 %v2551
        %v2621 = vpop.f32.mrb[0].mxu0
        %v2622 = vadd.f32 %v307, %v2621
        %v2623 = vpop.f32.mrb[0].mxu0
        %2624 = vdwg.mxu0
        %2625 = vrot.lane.b32.xlu0 %v2314, 96
        %v2626 = vpop.permute.xlu0 %2625
        %v2627 = vsel %vm447, %v2300, 0
        %v2629 = vsel %vm447, %v2626, 0
        %2631 = vmatprep.subr.mxu0 0.0
        %2632 = vmatpush1.xpose.msra.mxu0 %v2629
        %2633 = vmatprep.subr.mxu0 0.0
        %2634 = vmatpush1.xpose.msra.mxu0 0.0
        %2635 = vmatprep.subr.mxu0 0.0
        %2636 = vmatpush1.xpose.msra.mxu0 0.0
        %2637 = vmatprep.subr.mxu0 0.0
        %2638 = vmatpush1.xpose.msra.mxu0 0.0
        %2639 = vmatprep.subr.mxu0 0.0
        %2640 = vmatpush1.xpose.msra.mxu0 0.0
        %2641 = vmatprep.subr.mxu0 0.0
        %2642 = vmatpush1.xpose.msra.mxu0 0.0
        %2643 = vmatprep.subr.mxu0 0.0
        %2644 = vmatpush1.xpose.msra.mxu0 0.0
        %2645 = vmatprep.subr.mxu0 0.0
        %2646 = vmatpush1.xpose.msra.mxu0 0.0
        %2647 = vmatprep.subr.mxu0 0.0
        %2648 = vmatpush1.xpose.msra.mxu0 0.0
        %2649 = vmatprep.subr.mxu0 0.0
        %2650 = vmatpush1.xpose.msra.mxu0 0.0
        %2651 = vmatprep.subr.mxu0 0.0
        %2652 = vmatpush1.xpose.msra.mxu0 0.0
        %2653 = vmatprep.subr.mxu0 0.0
        %2654 = vmatpush1.xpose.msra.mxu0 0.0
        %2655 = vmatprep.subr.mxu0 0.0
        %2656 = vmatpush1.xpose.msra.mxu0 0.0
        %2657 = vmatprep.subr.mxu0 0.0
        %2658 = vmatpush1.xpose.msra.mxu0 0.0
        %2659 = vmatprep.subr.mxu0 0.0
        %2660 = vmatpush1.xpose.msra.mxu0 0.0
        %2661 = vmatprep.subr.mxu0 0.0
        %2662 = vmatpush1.xpose.msra.mxu0 0.0
        %2663 = vmatprep.subr.mxu0 0.0
        %2664 = vmatpush1.xpose.msra.mxu0 0.0
        %2665 = vmatprep.subr.mxu0 0.0
        %2666 = vmatpush1.xpose.msra.mxu0 0.0
        %2667 = vmatprep.subr.mxu0 0.0
        %2668 = vmatpush1.xpose.msra.mxu0 0.0
        %2669 = vmatprep.subr.mxu0 0.0
        %2670 = vmatpush1.xpose.msra.mxu0 0.0
        %2671 = vmatprep.subr.mxu0 0.0
        %2672 = vmatpush1.xpose.msra.mxu0 0.0
        %2673 = vmatprep.subr.mxu0 0.0
        %2674 = vmatpush1.xpose.msra.mxu0 0.0
        %2675 = vmatprep.subr.mxu0 0.0
        %2676 = vmatpush1.xpose.msra.mxu0 0.0
        %2677 = vmatprep.subr.mxu0 0.0
        %2678 = vmatpush1.xpose.msra.mxu0 0.0
        %2679 = vmatprep.subr.mxu0 0.0
        %2680 = vmatpush1.xpose.msra.mxu0 0.0
        %2681 = vmatprep.subr.mxu0 0.0
        %2682 = vmatpush1.xpose.msra.mxu0 0.0
        %2683 = vmatprep.subr.mxu0 0.0
        %2684 = vmatpush1.xpose.msra.mxu0 0.0
        %2685 = vmatprep.subr.mxu0 0.0
        %2686 = vmatpush1.xpose.msra.mxu0 0.0
        %2687 = vmatprep.subr.mxu0 0.0
        %2688 = vmatpush1.xpose.msra.mxu0 0.0
        %2689 = vmatprep.subr.mxu0 0.0
        %2690 = vmatpush1.xpose.msra.mxu0 0.0
        %2691 = vmatprep.subr.mxu0 0.0
        %2692 = vmatpush1.xpose.msra.mxu0 0.0
        %2693 = vmatprep.subr.mxu0 0.0
        %2694 = vmatpush1.xpose.msra.mxu0 0.0
        %2695 = vmatprep.mubr.f32.mxu0 0.0
        %2696 = vmatmul.mubr.f32.gmra.mrb[0].mxu0 %v2627
        %v2697 = vpop.f32.mrb[0].mxu0
        %v2698 = vadd.f32 %v303, %v2697
        %v2699 = vpop.f32.mrb[0].mxu0
        %2700 = vdwg.mxu0
        %2701 = vrot.lane.b32.xlu0 %v2316, 96
        %v2702 = vpop.permute.xlu0 %2701
        %v2703 = vsel %vm447, %v2302, 0
        %v2705 = vsel %vm447, %v2702, 0
        %2707 = vmatprep.subr.mxu0 0.0
        %2708 = vmatpush1.xpose.msra.mxu0 %v2705
        %2709 = vmatprep.subr.mxu0 0.0
        %2710 = vmatpush1.xpose.msra.mxu0 0.0
        %2711 = vmatprep.subr.mxu0 0.0
        %2712 = vmatpush1.xpose.msra.mxu0 0.0
        %2713 = vmatprep.subr.mxu0 0.0
        %2714 = vmatpush1.xpose.msra.mxu0 0.0
        %2715 = vmatprep.subr.mxu0 0.0
        %2716 = vmatpush1.xpose.msra.mxu0 0.0
        %2717 = vmatprep.subr.mxu0 0.0
        %2718 = vmatpush1.xpose.msra.mxu0 0.0
        %2719 = vmatprep.subr.mxu0 0.0
        %2720 = vmatpush1.xpose.msra.mxu0 0.0
        %2721 = vmatprep.subr.mxu0 0.0
        %2722 = vmatpush1.xpose.msra.mxu0 0.0
        %2723 = vmatprep.subr.mxu0 0.0
        %2724 = vmatpush1.xpose.msra.mxu0 0.0
        %2725 = vmatprep.subr.mxu0 0.0
        %2726 = vmatpush1.xpose.msra.mxu0 0.0
        %2727 = vmatprep.subr.mxu0 0.0
        %2728 = vmatpush1.xpose.msra.mxu0 0.0
        %2729 = vmatprep.subr.mxu0 0.0
        %2730 = vmatpush1.xpose.msra.mxu0 0.0
        %2731 = vmatprep.subr.mxu0 0.0
        %2732 = vmatpush1.xpose.msra.mxu0 0.0
        %2733 = vmatprep.subr.mxu0 0.0
        %2734 = vmatpush1.xpose.msra.mxu0 0.0
        %2735 = vmatprep.subr.mxu0 0.0
        %2736 = vmatpush1.xpose.msra.mxu0 0.0
        %2737 = vmatprep.subr.mxu0 0.0
        %2738 = vmatpush1.xpose.msra.mxu0 0.0
        %2739 = vmatprep.subr.mxu0 0.0
        %2740 = vmatpush1.xpose.msra.mxu0 0.0
        %2741 = vmatprep.subr.mxu0 0.0
        %2742 = vmatpush1.xpose.msra.mxu0 0.0
        %2743 = vmatprep.subr.mxu0 0.0
        %2744 = vmatpush1.xpose.msra.mxu0 0.0
        %2745 = vmatprep.subr.mxu0 0.0
        %2746 = vmatpush1.xpose.msra.mxu0 0.0
        %2747 = vmatprep.subr.mxu0 0.0
        %2748 = vmatpush1.xpose.msra.mxu0 0.0
        %2749 = vmatprep.subr.mxu0 0.0
        %2750 = vmatpush1.xpose.msra.mxu0 0.0
        %2751 = vmatprep.subr.mxu0 0.0
        %2752 = vmatpush1.xpose.msra.mxu0 0.0
        %2753 = vmatprep.subr.mxu0 0.0
        %2754 = vmatpush1.xpose.msra.mxu0 0.0
        %2755 = vmatprep.subr.mxu0 0.0
        %2756 = vmatpush1.xpose.msra.mxu0 0.0
        %2757 = vmatprep.subr.mxu0 0.0
        %2758 = vmatpush1.xpose.msra.mxu0 0.0
        %2759 = vmatprep.subr.mxu0 0.0
        %2760 = vmatpush1.xpose.msra.mxu0 0.0
        %2761 = vmatprep.subr.mxu0 0.0
        %2762 = vmatpush1.xpose.msra.mxu0 0.0
        %2763 = vmatprep.subr.mxu0 0.0
        %2764 = vmatpush1.xpose.msra.mxu0 0.0
        %2765 = vmatprep.subr.mxu0 0.0
        %2766 = vmatpush1.xpose.msra.mxu0 0.0
        %2767 = vmatprep.subr.mxu0 0.0
        %2768 = vmatpush1.xpose.msra.mxu0 0.0
        %2769 = vmatprep.subr.mxu0 0.0
        %2770 = vmatpush1.xpose.msra.mxu0 0.0
        %2771 = vmatprep.mubr.f32.mxu0 0.0
        %2772 = vmatmul.mubr.f32.gmra.mrb[0].mxu0 %v2703
        %v2773 = vpop.f32.mrb[0].mxu0
        %v2774 = vadd.f32 %v307, %v2773
        %v2775 = vpop.f32.mrb[0].mxu0
        %2776 = vdwg.mxu0
        %2777 = vrot.lane.b32.xlu0 %v2318, 96
        %v2778 = vpop.permute.xlu0 %2777
        %v2779 = vsel %vm447, %v2304, 0
        %v2781 = vsel %vm447, %v2778, 0
        %2783 = vmatprep.subr.mxu0 0.0
        %2784 = vmatpush1.xpose.msra.mxu0 %v2781
        %2785 = vmatprep.subr.mxu0 0.0
        %2786 = vmatpush1.xpose.msra.mxu0 0.0
        %2787 = vmatprep.subr.mxu0 0.0
        %2788 = vmatpush1.xpose.msra.mxu0 0.0
        %2789 = vmatprep.subr.mxu0 0.0
        %2790 = vmatpush1.xpose.msra.mxu0 0.0
        %2791 = vmatprep.subr.mxu0 0.0
        %2792 = vmatpush1.xpose.msra.mxu0 0.0
        %2793 = vmatprep.subr.mxu0 0.0
        %2794 = vmatpush1.xpose.msra.mxu0 0.0
        %2795 = vmatprep.subr.mxu0 0.0
        %2796 = vmatpush1.xpose.msra.mxu0 0.0
        %2797 = vmatprep.subr.mxu0 0.0
        %2798 = vmatpush1.xpose.msra.mxu0 0.0
        %2799 = vmatprep.subr.mxu0 0.0
        %2800 = vmatpush1.xpose.msra.mxu0 0.0
        %2801 = vmatprep.subr.mxu0 0.0
        %2802 = vmatpush1.xpose.msra.mxu0 0.0
        %2803 = vmatprep.subr.mxu0 0.0
        %2804 = vmatpush1.xpose.msra.mxu0 0.0
        %2805 = vmatprep.subr.mxu0 0.0
        %2806 = vmatpush1.xpose.msra.mxu0 0.0
        %2807 = vmatprep.subr.mxu0 0.0
        %2808 = vmatpush1.xpose.msra.mxu0 0.0
        %2809 = vmatprep.subr.mxu0 0.0
        %2810 = vmatpush1.xpose.msra.mxu0 0.0
        %2811 = vmatprep.subr.mxu0 0.0
        %2812 = vmatpush1.xpose.msra.mxu0 0.0
        %2813 = vmatprep.subr.mxu0 0.0
        %2814 = vmatpush1.xpose.msra.mxu0 0.0
        %2815 = vmatprep.subr.mxu0 0.0
        %2816 = vmatpush1.xpose.msra.mxu0 0.0
        %2817 = vmatprep.subr.mxu0 0.0
        %2818 = vmatpush1.xpose.msra.mxu0 0.0
        %2819 = vmatprep.subr.mxu0 0.0
        %2820 = vmatpush1.xpose.msra.mxu0 0.0
        %2821 = vmatprep.subr.mxu0 0.0
        %2822 = vmatpush1.xpose.msra.mxu0 0.0
        %2823 = vmatprep.subr.mxu0 0.0
        %2824 = vmatpush1.xpose.msra.mxu0 0.0
        %2825 = vmatprep.subr.mxu0 0.0
        %2826 = vmatpush1.xpose.msra.mxu0 0.0
        %2827 = vmatprep.subr.mxu0 0.0
        %2828 = vmatpush1.xpose.msra.mxu0 0.0
        %2829 = vmatprep.subr.mxu0 0.0
        %2830 = vmatpush1.xpose.msra.mxu0 0.0
        %2831 = vmatprep.subr.mxu0 0.0
        %2832 = vmatpush1.xpose.msra.mxu0 0.0
        %2833 = vmatprep.subr.mxu0 0.0
        %2834 = vmatpush1.xpose.msra.mxu0 0.0
        %2835 = vmatprep.subr.mxu0 0.0
        %2836 = vmatpush1.xpose.msra.mxu0 0.0
        %2837 = vmatprep.subr.mxu0 0.0
        %2838 = vmatpush1.xpose.msra.mxu0 0.0
        %2839 = vmatprep.subr.mxu0 0.0
        %2840 = vmatpush1.xpose.msra.mxu0 0.0
        %2841 = vmatprep.subr.mxu0 0.0
        %2842 = vmatpush1.xpose.msra.mxu0 0.0
        %2843 = vmatprep.subr.mxu0 0.0
        %2844 = vmatpush1.xpose.msra.mxu0 0.0
        %2845 = vmatprep.subr.mxu0 0.0
        %2846 = vmatpush1.xpose.msra.mxu0 0.0
        %2847 = vmatprep.mubr.f32.mxu0 0.0
        %2848 = vmatmul.mubr.f32.gmra.mrb[0].mxu0 %v2779
        %v2849 = vpop.f32.mrb[0].mxu0
        %v2850 = vadd.f32 %v303, %v2849
        %v2851 = vpop.f32.mrb[0].mxu0
        %2852 = vdwg.mxu0
        %2853 = vrot.lane.b32.xlu0 %v2320, 96
        %v2854 = vpop.permute.xlu0 %2853
        %v2855 = vsel %vm447, %v2306, 0
        %v2857 = vsel %vm447, %v2854, 0
        %2859 = vmatprep.subr.mxu0 0.0
        %2860 = vmatpush1.xpose.msra.mxu0 %v2857
        %2861 = vmatprep.subr.mxu0 0.0
        %2862 = vmatpush1.xpose.msra.mxu0 0.0
        %2863 = vmatprep.subr.mxu0 0.0
        %2864 = vmatpush1.xpose.msra.mxu0 0.0
        %2865 = vmatprep.subr.mxu0 0.0
        %2866 = vmatpush1.xpose.msra.mxu0 0.0
        %2867 = vmatprep.subr.mxu0 0.0
        %2868 = vmatpush1.xpose.msra.mxu0 0.0
        %2869 = vmatprep.subr.mxu0 0.0
        %2870 = vmatpush1.xpose.msra.mxu0 0.0
        %2871 = vmatprep.subr.mxu0 0.0
        %2872 = vmatpush1.xpose.msra.mxu0 0.0
        %2873 = vmatprep.subr.mxu0 0.0
        %2874 = vmatpush1.xpose.msra.mxu0 0.0
        %2875 = vmatprep.subr.mxu0 0.0
        %2876 = vmatpush1.xpose.msra.mxu0 0.0
        %2877 = vmatprep.subr.mxu0 0.0
        %2878 = vmatpush1.xpose.msra.mxu0 0.0
        %2879 = vmatprep.subr.mxu0 0.0
        %2880 = vmatpush1.xpose.msra.mxu0 0.0
        %2881 = vmatprep.subr.mxu0 0.0
        %2882 = vmatpush1.xpose.msra.mxu0 0.0
        %2883 = vmatprep.subr.mxu0 0.0
        %2884 = vmatpush1.xpose.msra.mxu0 0.0
        %2885 = vmatprep.subr.mxu0 0.0
        %2886 = vmatpush1.xpose.msra.mxu0 0.0
        %2887 = vmatprep.subr.mxu0 0.0
        %2888 = vmatpush1.xpose.msra.mxu0 0.0
        %2889 = vmatprep.subr.mxu0 0.0
        %2890 = vmatpush1.xpose.msra.mxu0 0.0
        %2891 = vmatprep.subr.mxu0 0.0
        %2892 = vmatpush1.xpose.msra.mxu0 0.0
        %2893 = vmatprep.subr.mxu0 0.0
        %2894 = vmatpush1.xpose.msra.mxu0 0.0
        %2895 = vmatprep.subr.mxu0 0.0
        %2896 = vmatpush1.xpose.msra.mxu0 0.0
        %2897 = vmatprep.subr.mxu0 0.0
        %2898 = vmatpush1.xpose.msra.mxu0 0.0
        %2899 = vmatprep.subr.mxu0 0.0
        %2900 = vmatpush1.xpose.msra.mxu0 0.0
        %2901 = vmatprep.subr.mxu0 0.0
        %2902 = vmatpush1.xpose.msra.mxu0 0.0
        %2903 = vmatprep.subr.mxu0 0.0
        %2904 = vmatpush1.xpose.msra.mxu0 0.0
        %2905 = vmatprep.subr.mxu0 0.0
        %2906 = vmatpush1.xpose.msra.mxu0 0.0
        %2907 = vmatprep.subr.mxu0 0.0
        %2908 = vmatpush1.xpose.msra.mxu0 0.0
        %2909 = vmatprep.subr.mxu0 0.0
        %2910 = vmatpush1.xpose.msra.mxu0 0.0
        %2911 = vmatprep.subr.mxu0 0.0
        %2912 = vmatpush1.xpose.msra.mxu0 0.0
        %2913 = vmatprep.subr.mxu0 0.0
        %2914 = vmatpush1.xpose.msra.mxu0 0.0
        %2915 = vmatprep.subr.mxu0 0.0
        %2916 = vmatpush1.xpose.msra.mxu0 0.0
        %2917 = vmatprep.subr.mxu0 0.0
        %2918 = vmatpush1.xpose.msra.mxu0 0.0
        %2919 = vmatprep.subr.mxu0 0.0
        %2920 = vmatpush1.xpose.msra.mxu0 0.0
        %2921 = vmatprep.subr.mxu0 0.0
        %2922 = vmatpush1.xpose.msra.mxu0 0.0
        %2923 = vmatprep.mubr.f32.mxu0 0.0
        %2924 = vmatmul.mubr.f32.gmra.mrb[0].mxu0 %v2855
        %v2925 = vpop.f32.mrb[0].mxu0
        %v2926 = vadd.f32 %v307, %v2925
        %v2927 = vpop.f32.mrb[0].mxu0
        %2928 = vdwg.mxu0
        %v2929 = vsel %vm447, %v2394, -inf
        %2930 = vmax.xlane.f32.xlu0 %v2929
        %v2931 = vpop.xlane.xlu0 %2930
        %v2932 = vsel %vm447, %v2470, -inf
        %2933 = vmax.xlane.f32.xlu0 %v2932
        %v2934 = vpop.xlane.xlu0 %2933
        %v2935 = vsel %vm447, %v2546, -inf
        %2936 = vmax.xlane.f32.xlu0 %v2935
        %v2937 = vpop.xlane.xlu0 %2936
        %v2938 = vsel %vm447, %v2622, -inf
        %2939 = vmax.xlane.f32.xlu0 %v2938
        %v2940 = vpop.xlane.xlu0 %2939
        %v2941 = vsel %vm447, %v2698, -inf
        %2942 = vmax.xlane.f32.xlu0 %v2941
        %v2943 = vpop.xlane.xlu0 %2942
        %v2944 = vsel %vm447, %v2774, -inf
        %2945 = vmax.xlane.f32.xlu0 %v2944
        %v2946 = vpop.xlane.xlu0 %2945
        %v2947 = vsel %vm447, %v2850, -inf
        %2948 = vmax.xlane.f32.xlu0 %v2947
        %v2949 = vpop.xlane.xlu0 %2948
        %v2950 = vsel %vm447, %v2926, -inf
        %2951 = vmax.xlane.f32.xlu0 %v2950
        %v2952 = vpop.xlane.xlu0 %2951
        %v2953 = vsub.f32 %v2394, %v2931
        %v2954 = vsub.f32 %v2470, %v2934
        %v2955 = vsub.f32 %v2546, %v2937
        %v2956 = vsub.f32 %v2622, %v2940
        %v2957 = vsub.f32 %v2698, %v2943
        %v2958 = vsub.f32 %v2774, %v2946
        %v2959 = vsub.f32 %v2850, %v2949
        %v2960 = vsub.f32 %v2926, %v2952
        %v2961 = vmul.f32 %v2953, 1.442695
        %v2962 = vpow.pop %v2961
        %v2963 = vmul.f32 %v2954, 1.442695
        %v2964 = vpow.pop %v2963
        %v2965 = vmul.f32 %v2955, 1.442695
        %v2966 = vpow.pop %v2965
        %v2967 = vmul.f32 %v2956, 1.442695
        %v2968 = vpow.pop %v2967
        %v2969 = vmul.f32 %v2957, 1.442695
        %v2970 = vpow.pop %v2969
        %v2971 = vmul.f32 %v2958, 1.442695
        %v2972 = vpow.pop %v2971
        %v2973 = vmul.f32 %v2959, 1.442695
        %v2974 = vpow.pop %v2973
        %v2975 = vmul.f32 %v2960, 1.442695
        %v2976 = vpow.pop %v2975
        %v2977 = vsel %vm447, %v2962, 0.0
        %2978 = vadd.xlane.f32.xlu0 %v2977
        %v2979 = vpop.xlane.xlu0 %2978
        %v2980 = vsel %vm447, %v2964, 0.0
        %2981 = vadd.xlane.f32.xlu0 %v2980
        %v2982 = vpop.xlane.xlu0 %2981
        %v2983 = vsel %vm447, %v2966, 0.0
        %2984 = vadd.xlane.f32.xlu0 %v2983
        %v2985 = vpop.xlane.xlu0 %2984
        %v2986 = vsel %vm447, %v2968, 0.0
        %2987 = vadd.xlane.f32.xlu0 %v2986
        %v2988 = vpop.xlane.xlu0 %2987
        %v2989 = vsel %vm447, %v2970, 0.0
        %2990 = vadd.xlane.f32.xlu0 %v2989
        %v2991 = vpop.xlane.xlu0 %2990
        %v2992 = vsel %vm447, %v2972, 0.0
        %2993 = vadd.xlane.f32.xlu0 %v2992
        %v2994 = vpop.xlane.xlu0 %2993
        %v2995 = vsel %vm447, %v2974, 0.0
        %2996 = vadd.xlane.f32.xlu0 %v2995
        %v2997 = vpop.xlane.xlu0 %2996
        %v2998 = vsel %vm447, %v2976, 0.0
        %2999 = vadd.xlane.f32.xlu0 %v2998
        %v3000 = vpop.xlane.xlu0 %2999
        %v3001 = vrcp.pop %v2979
        %v3002 = vrcp.pop %v2982
        %v3003 = vrcp.pop %v2985
        %v3004 = vrcp.pop %v2988
        %v3005 = vrcp.pop %v2991
        %v3006 = vrcp.pop %v2994
        %v3007 = vrcp.pop %v2997
        %v3008 = vrcp.pop %v3000
        %v3009 = vmul.f32 %v2962, %v3001
        %v3010 = vmul.f32 %v2964, %v3002
        %v3011 = vmul.f32 %v2966, %v3003
        %v3012 = vmul.f32 %v2968, %v3004
        %v3013 = vmul.f32 %v2970, %v3005
        %v3014 = vmul.f32 %v2972, %v3006
        %v3015 = vmul.f32 %v2974, %v3007
        %v3016 = vmul.f32 %v2976, %v3008
        %3017 = vrot.lane.b32.xlu0 %v2283, 64
        %v3018 = vpop.permute.xlu0 %3017
        %v3021 = vsel %vm447, %v3009, 0
        %3023 = vmatprep.subr.mxu0 0.0
        %3024 = vmatpush1.msra.mxu0 %v3018
        %3025 = vmatprep.subr.mxu0 0.0
        %3026 = vmatpush1.msra.mxu0 0.0
        %3027 = vmatprep.subr.mxu0 0.0
        %3028 = vmatpush1.msra.mxu0 0.0
        %3029 = vmatprep.subr.mxu0 0.0
        %3030 = vmatpush1.msra.mxu0 0.0
        %3031 = vmatprep.subr.mxu0 0.0
        %3032 = vmatpush1.msra.mxu0 0.0
        %3033 = vmatprep.subr.mxu0 0.0
        %3034 = vmatpush1.msra.mxu0 0.0
        %3035 = vmatprep.subr.mxu0 0.0
        %3036 = vmatpush1.msra.mxu0 0.0
        %3037 = vmatprep.subr.mxu0 0.0
        %3038 = vmatpush1.msra.mxu0 0.0
        %3039 = vmatprep.subr.mxu0 0.0
        %3040 = vmatpush1.msra.mxu0 0.0
        %3041 = vmatprep.subr.mxu0 0.0
        %3042 = vmatpush1.msra.mxu0 0.0
        %3043 = vmatprep.subr.mxu0 0.0
        %3044 = vmatpush1.msra.mxu0 0.0
        %3045 = vmatprep.subr.mxu0 0.0
        %3046 = vmatpush1.msra.mxu0 0.0
        %3047 = vmatprep.subr.mxu0 0.0
        %3048 = vmatpush1.msra.mxu0 0.0
        %3049 = vmatprep.subr.mxu0 0.0
        %3050 = vmatpush1.msra.mxu0 0.0
        %3051 = vmatprep.subr.mxu0 0.0
        %3052 = vmatpush1.msra.mxu0 0.0
        %3053 = vmatprep.subr.mxu0 0.0
        %3054 = vmatpush1.msra.mxu0 0.0
        %3055 = vmatprep.subr.mxu0 0.0
        %3056 = vmatpush1.msra.mxu0 0.0
        %3057 = vmatprep.subr.mxu0 0.0
        %3058 = vmatpush1.msra.mxu0 0.0
        %3059 = vmatprep.subr.mxu0 0.0
        %3060 = vmatpush1.msra.mxu0 0.0
        %3061 = vmatprep.subr.mxu0 0.0
        %3062 = vmatpush1.msra.mxu0 0.0
        %3063 = vmatprep.subr.mxu0 0.0
        %3064 = vmatpush1.msra.mxu0 0.0
        %3065 = vmatprep.subr.mxu0 0.0
        %3066 = vmatpush1.msra.mxu0 0.0
        %3067 = vmatprep.subr.mxu0 0.0
        %3068 = vmatpush1.msra.mxu0 0.0
        %3069 = vmatprep.subr.mxu0 0.0
        %3070 = vmatpush1.msra.mxu0 0.0
        %3071 = vmatprep.subr.mxu0 0.0
        %3072 = vmatpush1.msra.mxu0 0.0
        %3073 = vmatprep.subr.mxu0 0.0
        %3074 = vmatpush1.msra.mxu0 0.0
        %3075 = vmatprep.subr.mxu0 0.0
        %3076 = vmatpush1.msra.mxu0 0.0
        %3077 = vmatprep.subr.mxu0 0.0
        %3078 = vmatpush1.msra.mxu0 0.0
        %3079 = vmatprep.subr.mxu0 0.0
        %3080 = vmatpush1.msra.mxu0 0.0
        %3081 = vmatprep.subr.mxu0 0.0
        %3082 = vmatpush1.msra.mxu0 0.0
        %3083 = vmatprep.subr.mxu0 0.0
        %3084 = vmatpush1.msra.mxu0 0.0
        %3085 = vmatprep.subr.mxu0 0.0
        %3086 = vmatpush1.msra.mxu0 0.0
        %3087 = vmatprep.mubr.f32.mxu0 0.0
        %3088 = vmatmul.mubr.f32.gmra.mrb[0].mxu0 %v3021
        %v3089 = vpop.f32.mrb[0].mxu0
        %v3090 = vadd.f32 0.0, %v3089
        %v3091 = vpop.f32.mrb[0].mxu0
        %3092 = vdwg.mxu0
        %3093 = vrot.lane.b32.xlu0 %v2288, 64
        %v3094 = vpop.permute.xlu0 %3093
        %v3097 = vsel %vm447, %v3010, 0
        %3099 = vmatprep.subr.mxu0 0.0
        %3100 = vmatpush1.msra.mxu0 %v3094
        %3101 = vmatprep.subr.mxu0 0.0
        %3102 = vmatpush1.msra.mxu0 0.0
        %3103 = vmatprep.subr.mxu0 0.0
        %3104 = vmatpush1.msra.mxu0 0.0
        %3105 = vmatprep.subr.mxu0 0.0
        %3106 = vmatpush1.msra.mxu0 0.0
        %3107 = vmatprep.subr.mxu0 0.0
        %3108 = vmatpush1.msra.mxu0 0.0
        %3109 = vmatprep.subr.mxu0 0.0
        %3110 = vmatpush1.msra.mxu0 0.0
        %3111 = vmatprep.subr.mxu0 0.0
        %3112 = vmatpush1.msra.mxu0 0.0
        %3113 = vmatprep.subr.mxu0 0.0
        %3114 = vmatpush1.msra.mxu0 0.0
        %3115 = vmatprep.subr.mxu0 0.0
        %3116 = vmatpush1.msra.mxu0 0.0
        %3117 = vmatprep.subr.mxu0 0.0
        %3118 = vmatpush1.msra.mxu0 0.0
        %3119 = vmatprep.subr.mxu0 0.0
        %3120 = vmatpush1.msra.mxu0 0.0
        %3121 = vmatprep.subr.mxu0 0.0
        %3122 = vmatpush1.msra.mxu0 0.0
        %3123 = vmatprep.subr.mxu0 0.0
        %3124 = vmatpush1.msra.mxu0 0.0
        %3125 = vmatprep.subr.mxu0 0.0
        %3126 = vmatpush1.msra.mxu0 0.0
        %3127 = vmatprep.subr.mxu0 0.0
        %3128 = vmatpush1.msra.mxu0 0.0
        %3129 = vmatprep.subr.mxu0 0.0
        %3130 = vmatpush1.msra.mxu0 0.0
        %3131 = vmatprep.subr.mxu0 0.0
        %3132 = vmatpush1.msra.mxu0 0.0
        %3133 = vmatprep.subr.mxu0 0.0
        %3134 = vmatpush1.msra.mxu0 0.0
        %3135 = vmatprep.subr.mxu0 0.0
        %3136 = vmatpush1.msra.mxu0 0.0
        %3137 = vmatprep.subr.mxu0 0.0
        %3138 = vmatpush1.msra.mxu0 0.0
        %3139 = vmatprep.subr.mxu0 0.0
        %3140 = vmatpush1.msra.mxu0 0.0
        %3141 = vmatprep.subr.mxu0 0.0
        %3142 = vmatpush1.msra.mxu0 0.0
        %3143 = vmatprep.subr.mxu0 0.0
        %3144 = vmatpush1.msra.mxu0 0.0
        %3145 = vmatprep.subr.mxu0 0.0
        %3146 = vmatpush1.msra.mxu0 0.0
        %3147 = vmatprep.subr.mxu0 0.0
        %3148 = vmatpush1.msra.mxu0 0.0
        %3149 = vmatprep.subr.mxu0 0.0
        %3150 = vmatpush1.msra.mxu0 0.0
        %3151 = vmatprep.subr.mxu0 0.0
        %3152 = vmatpush1.msra.mxu0 0.0
        %3153 = vmatprep.subr.mxu0 0.0
        %3154 = vmatpush1.msra.mxu0 0.0
        %3155 = vmatprep.subr.mxu0 0.0
        %3156 = vmatpush1.msra.mxu0 0.0
        %3157 = vmatprep.subr.mxu0 0.0
        %3158 = vmatpush1.msra.mxu0 0.0
        %3159 = vmatprep.subr.mxu0 0.0
        %3160 = vmatpush1.msra.mxu0 0.0
        %3161 = vmatprep.subr.mxu0 0.0
        %3162 = vmatpush1.msra.mxu0 0.0
        %3163 = vmatprep.mubr.f32.mxu0 0.0
        %3164 = vmatmul.mubr.f32.gmra.mrb[0].mxu0 %v3097
        %v3165 = vpop.f32.mrb[0].mxu0
        %v3166 = vadd.f32 0.0, %v3165
        %v3167 = vpop.f32.mrb[0].mxu0
        %3168 = vdwg.mxu0
        %3169 = vrot.lane.b32.xlu0 %v2310, 64
        %v3170 = vpop.permute.xlu0 %3169
        %v3173 = vsel %vm447, %v3011, 0
        %3175 = vmatprep.subr.mxu0 0.0
        %3176 = vmatpush1.msra.mxu0 %v3170
        %3177 = vmatprep.subr.mxu0 0.0
        %3178 = vmatpush1.msra.mxu0 0.0
        %3179 = vmatprep.subr.mxu0 0.0
        %3180 = vmatpush1.msra.mxu0 0.0
        %3181 = vmatprep.subr.mxu0 0.0
        %3182 = vmatpush1.msra.mxu0 0.0
        %3183 = vmatprep.subr.mxu0 0.0
        %3184 = vmatpush1.msra.mxu0 0.0
        %3185 = vmatprep.subr.mxu0 0.0
        %3186 = vmatpush1.msra.mxu0 0.0
        %3187 = vmatprep.subr.mxu0 0.0
        %3188 = vmatpush1.msra.mxu0 0.0
        %3189 = vmatprep.subr.mxu0 0.0
        %3190 = vmatpush1.msra.mxu0 0.0
        %3191 = vmatprep.subr.mxu0 0.0
        %3192 = vmatpush1.msra.mxu0 0.0
        %3193 = vmatprep.subr.mxu0 0.0
        %3194 = vmatpush1.msra.mxu0 0.0
        %3195 = vmatprep.subr.mxu0 0.0
        %3196 = vmatpush1.msra.mxu0 0.0
        %3197 = vmatprep.subr.mxu0 0.0
        %3198 = vmatpush1.msra.mxu0 0.0
        %3199 = vmatprep.subr.mxu0 0.0
        %3200 = vmatpush1.msra.mxu0 0.0
        %3201 = vmatprep.subr.mxu0 0.0
        %3202 = vmatpush1.msra.mxu0 0.0
        %3203 = vmatprep.subr.mxu0 0.0
        %3204 = vmatpush1.msra.mxu0 0.0
        %3205 = vmatprep.subr.mxu0 0.0
        %3206 = vmatpush1.msra.mxu0 0.0
        %3207 = vmatprep.subr.mxu0 0.0
        %3208 = vmatpush1.msra.mxu0 0.0
        %3209 = vmatprep.subr.mxu0 0.0
        %3210 = vmatpush1.msra.mxu0 0.0
        %3211 = vmatprep.subr.mxu0 0.0
        %3212 = vmatpush1.msra.mxu0 0.0
        %3213 = vmatprep.subr.mxu0 0.0
        %3214 = vmatpush1.msra.mxu0 0.0
        %3215 = vmatprep.subr.mxu0 0.0
        %3216 = vmatpush1.msra.mxu0 0.0
        %3217 = vmatprep.subr.mxu0 0.0
        %3218 = vmatpush1.msra.mxu0 0.0
        %3219 = vmatprep.subr.mxu0 0.0
        %3220 = vmatpush1.msra.mxu0 0.0
        %3221 = vmatprep.subr.mxu0 0.0
        %3222 = vmatpush1.msra.mxu0 0.0
        %3223 = vmatprep.subr.mxu0 0.0
        %3224 = vmatpush1.msra.mxu0 0.0
        %3225 = vmatprep.subr.mxu0 0.0
        %3226 = vmatpush1.msra.mxu0 0.0
        %3227 = vmatprep.subr.mxu0 0.0
        %3228 = vmatpush1.msra.mxu0 0.0
        %3229 = vmatprep.subr.mxu0 0.0
        %3230 = vmatpush1.msra.mxu0 0.0
        %3231 = vmatprep.subr.mxu0 0.0
        %3232 = vmatpush1.msra.mxu0 0.0
        %3233 = vmatprep.subr.mxu0 0.0
        %3234 = vmatpush1.msra.mxu0 0.0
        %3235 = vmatprep.subr.mxu0 0.0
        %3236 = vmatpush1.msra.mxu0 0.0
        %3237 = vmatprep.subr.mxu0 0.0
        %3238 = vmatpush1.msra.mxu0 0.0
        %3239 = vmatprep.mubr.f32.mxu0 0.0
        %3240 = vmatmul.mubr.f32.gmra.mrb[0].mxu0 %v3173
        %v3241 = vpop.f32.mrb[0].mxu0
        %v3242 = vadd.f32 0.0, %v3241
        %v3243 = vpop.f32.mrb[0].mxu0
        %3244 = vdwg.mxu0
        %3245 = vrot.lane.b32.xlu0 %v2312, 64
        %v3246 = vpop.permute.xlu0 %3245
        %v3249 = vsel %vm447, %v3012, 0
        %3251 = vmatprep.subr.mxu0 0.0
        %3252 = vmatpush1.msra.mxu0 %v3246
        %3253 = vmatprep.subr.mxu0 0.0
        %3254 = vmatpush1.msra.mxu0 0.0
        %3255 = vmatprep.subr.mxu0 0.0
        %3256 = vmatpush1.msra.mxu0 0.0
        %3257 = vmatprep.subr.mxu0 0.0
        %3258 = vmatpush1.msra.mxu0 0.0
        %3259 = vmatprep.subr.mxu0 0.0
        %3260 = vmatpush1.msra.mxu0 0.0
        %3261 = vmatprep.subr.mxu0 0.0
        %3262 = vmatpush1.msra.mxu0 0.0
        %3263 = vmatprep.subr.mxu0 0.0
        %3264 = vmatpush1.msra.mxu0 0.0
        %3265 = vmatprep.subr.mxu0 0.0
        %3266 = vmatpush1.msra.mxu0 0.0
        %3267 = vmatprep.subr.mxu0 0.0
        %3268 = vmatpush1.msra.mxu0 0.0
        %3269 = vmatprep.subr.mxu0 0.0
        %3270 = vmatpush1.msra.mxu0 0.0
        %3271 = vmatprep.subr.mxu0 0.0
        %3272 = vmatpush1.msra.mxu0 0.0
        %3273 = vmatprep.subr.mxu0 0.0
        %3274 = vmatpush1.msra.mxu0 0.0
        %3275 = vmatprep.subr.mxu0 0.0
        %3276 = vmatpush1.msra.mxu0 0.0
        %3277 = vmatprep.subr.mxu0 0.0
        %3278 = vmatpush1.msra.mxu0 0.0
        %3279 = vmatprep.subr.mxu0 0.0
        %3280 = vmatpush1.msra.mxu0 0.0
        %3281 = vmatprep.subr.mxu0 0.0
        %3282 = vmatpush1.msra.mxu0 0.0
        %3283 = vmatprep.subr.mxu0 0.0
        %3284 = vmatpush1.msra.mxu0 0.0
        %3285 = vmatprep.subr.mxu0 0.0
        %3286 = vmatpush1.msra.mxu0 0.0
        %3287 = vmatprep.subr.mxu0 0.0
        %3288 = vmatpush1.msra.mxu0 0.0
        %3289 = vmatprep.subr.mxu0 0.0
        %3290 = vmatpush1.msra.mxu0 0.0
        %3291 = vmatprep.subr.mxu0 0.0
        %3292 = vmatpush1.msra.mxu0 0.0
        %3293 = vmatprep.subr.mxu0 0.0
        %3294 = vmatpush1.msra.mxu0 0.0
        %3295 = vmatprep.subr.mxu0 0.0
        %3296 = vmatpush1.msra.mxu0 0.0
        %3297 = vmatprep.subr.mxu0 0.0
        %3298 = vmatpush1.msra.mxu0 0.0
        %3299 = vmatprep.subr.mxu0 0.0
        %3300 = vmatpush1.msra.mxu0 0.0
        %3301 = vmatprep.subr.mxu0 0.0
        %3302 = vmatpush1.msra.mxu0 0.0
        %3303 = vmatprep.subr.mxu0 0.0
        %3304 = vmatpush1.msra.mxu0 0.0
        %3305 = vmatprep.subr.mxu0 0.0
        %3306 = vmatpush1.msra.mxu0 0.0
        %3307 = vmatprep.subr.mxu0 0.0
        %3308 = vmatpush1.msra.mxu0 0.0
        %3309 = vmatprep.subr.mxu0 0.0
        %3310 = vmatpush1.msra.mxu0 0.0
        %3311 = vmatprep.subr.mxu0 0.0
        %3312 = vmatpush1.msra.mxu0 0.0
        %3313 = vmatprep.subr.mxu0 0.0
        %3314 = vmatpush1.msra.mxu0 0.0
        %3315 = vmatprep.mubr.f32.mxu0 0.0
        %3316 = vmatmul.mubr.f32.gmra.mrb[0].mxu0 %v3249
        %v3317 = vpop.f32.mrb[0].mxu0
        %v3318 = vadd.f32 0.0, %v3317
        %v3319 = vpop.f32.mrb[0].mxu0
        %3320 = vdwg.mxu0
        %3321 = vrot.lane.b32.xlu0 %v2314, 64
        %v3322 = vpop.permute.xlu0 %3321
        %v3325 = vsel %vm447, %v3013, 0
        %3327 = vmatprep.subr.mxu0 0.0
        %3328 = vmatpush1.msra.mxu0 %v3322
        %3329 = vmatprep.subr.mxu0 0.0
        %3330 = vmatpush1.msra.mxu0 0.0
        %3331 = vmatprep.subr.mxu0 0.0
        %3332 = vmatpush1.msra.mxu0 0.0
        %3333 = vmatprep.subr.mxu0 0.0
        %3334 = vmatpush1.msra.mxu0 0.0
        %3335 = vmatprep.subr.mxu0 0.0
        %3336 = vmatpush1.msra.mxu0 0.0
        %3337 = vmatprep.subr.mxu0 0.0
        %3338 = vmatpush1.msra.mxu0 0.0
        %3339 = vmatprep.subr.mxu0 0.0
        %3340 = vmatpush1.msra.mxu0 0.0
        %3341 = vmatprep.subr.mxu0 0.0
        %3342 = vmatpush1.msra.mxu0 0.0
        %3343 = vmatprep.subr.mxu0 0.0
        %3344 = vmatpush1.msra.mxu0 0.0
        %3345 = vmatprep.subr.mxu0 0.0
        %3346 = vmatpush1.msra.mxu0 0.0
        %3347 = vmatprep.subr.mxu0 0.0
        %3348 = vmatpush1.msra.mxu0 0.0
        %3349 = vmatprep.subr.mxu0 0.0
        %3350 = vmatpush1.msra.mxu0 0.0
        %3351 = vmatprep.subr.mxu0 0.0
        %3352 = vmatpush1.msra.mxu0 0.0
        %3353 = vmatprep.subr.mxu0 0.0
        %3354 = vmatpush1.msra.mxu0 0.0
        %3355 = vmatprep.subr.mxu0 0.0
        %3356 = vmatpush1.msra.mxu0 0.0
        %3357 = vmatprep.subr.mxu0 0.0
        %3358 = vmatpush1.msra.mxu0 0.0
        %3359 = vmatprep.subr.mxu0 0.0
        %3360 = vmatpush1.msra.mxu0 0.0
        %3361 = vmatprep.subr.mxu0 0.0
        %3362 = vmatpush1.msra.mxu0 0.0
        %3363 = vmatprep.subr.mxu0 0.0
        %3364 = vmatpush1.msra.mxu0 0.0
        %3365 = vmatprep.subr.mxu0 0.0
        %3366 = vmatpush1.msra.mxu0 0.0
        %3367 = vmatprep.subr.mxu0 0.0
        %3368 = vmatpush1.msra.mxu0 0.0
        %3369 = vmatprep.subr.mxu0 0.0
        %3370 = vmatpush1.msra.mxu0 0.0
        %3371 = vmatprep.subr.mxu0 0.0
        %3372 = vmatpush1.msra.mxu0 0.0
        %3373 = vmatprep.subr.mxu0 0.0
        %3374 = vmatpush1.msra.mxu0 0.0
        %3375 = vmatprep.subr.mxu0 0.0
        %3376 = vmatpush1.msra.mxu0 0.0
        %3377 = vmatprep.subr.mxu0 0.0
        %3378 = vmatpush1.msra.mxu0 0.0
        %3379 = vmatprep.subr.mxu0 0.0
        %3380 = vmatpush1.msra.mxu0 0.0
        %3381 = vmatprep.subr.mxu0 0.0
        %3382 = vmatpush1.msra.mxu0 0.0
        %3383 = vmatprep.subr.mxu0 0.0
        %3384 = vmatpush1.msra.mxu0 0.0
        %3385 = vmatprep.subr.mxu0 0.0
        %3386 = vmatpush1.msra.mxu0 0.0
        %3387 = vmatprep.subr.mxu0 0.0
        %3388 = vmatpush1.msra.mxu0 0.0
        %3389 = vmatprep.subr.mxu0 0.0
        %3390 = vmatpush1.msra.mxu0 0.0
        %3391 = vmatprep.mubr.f32.mxu0 0.0
        %3392 = vmatmul.mubr.f32.gmra.mrb[0].mxu0 %v3325
        %v3393 = vpop.f32.mrb[0].mxu0
        %v3394 = vadd.f32 0.0, %v3393
        %v3395 = vpop.f32.mrb[0].mxu0
        %3396 = vdwg.mxu0
        %3397 = vrot.lane.b32.xlu0 %v2316, 64
        %v3398 = vpop.permute.xlu0 %3397
        %v3401 = vsel %vm447, %v3014, 0
        %3403 = vmatprep.subr.mxu0 0.0
        %3404 = vmatpush1.msra.mxu0 %v3398
        %3405 = vmatprep.subr.mxu0 0.0
        %3406 = vmatpush1.msra.mxu0 0.0
        %3407 = vmatprep.subr.mxu0 0.0
        %3408 = vmatpush1.msra.mxu0 0.0
        %3409 = vmatprep.subr.mxu0 0.0
        %3410 = vmatpush1.msra.mxu0 0.0
        %3411 = vmatprep.subr.mxu0 0.0
        %3412 = vmatpush1.msra.mxu0 0.0
        %3413 = vmatprep.subr.mxu0 0.0
        %3414 = vmatpush1.msra.mxu0 0.0
        %3415 = vmatprep.subr.mxu0 0.0
        %3416 = vmatpush1.msra.mxu0 0.0
        %3417 = vmatprep.subr.mxu0 0.0
        %3418 = vmatpush1.msra.mxu0 0.0
        %3419 = vmatprep.subr.mxu0 0.0
        %3420 = vmatpush1.msra.mxu0 0.0
        %3421 = vmatprep.subr.mxu0 0.0
        %3422 = vmatpush1.msra.mxu0 0.0
        %3423 = vmatprep.subr.mxu0 0.0
        %3424 = vmatpush1.msra.mxu0 0.0
        %3425 = vmatprep.subr.mxu0 0.0
        %3426 = vmatpush1.msra.mxu0 0.0
        %3427 = vmatprep.subr.mxu0 0.0
        %3428 = vmatpush1.msra.mxu0 0.0
        %3429 = vmatprep.subr.mxu0 0.0
        %3430 = vmatpush1.msra.mxu0 0.0
        %3431 = vmatprep.subr.mxu0 0.0
        %3432 = vmatpush1.msra.mxu0 0.0
        %3433 = vmatprep.subr.mxu0 0.0
        %3434 = vmatpush1.msra.mxu0 0.0
        %3435 = vmatprep.subr.mxu0 0.0
        %3436 = vmatpush1.msra.mxu0 0.0
        %3437 = vmatprep.subr.mxu0 0.0
        %3438 = vmatpush1.msra.mxu0 0.0
        %3439 = vmatprep.subr.mxu0 0.0
        %3440 = vmatpush1.msra.mxu0 0.0
        %3441 = vmatprep.subr.mxu0 0.0
        %3442 = vmatpush1.msra.mxu0 0.0
        %3443 = vmatprep.subr.mxu0 0.0
        %3444 = vmatpush1.msra.mxu0 0.0
        %3445 = vmatprep.subr.mxu0 0.0
        %3446 = vmatpush1.msra.mxu0 0.0
        %3447 = vmatprep.subr.mxu0 0.0
        %3448 = vmatpush1.msra.mxu0 0.0
        %3449 = vmatprep.subr.mxu0 0.0
        %3450 = vmatpush1.msra.mxu0 0.0
        %3451 = vmatprep.subr.mxu0 0.0
        %3452 = vmatpush1.msra.mxu0 0.0
        %3453 = vmatprep.subr.mxu0 0.0
        %3454 = vmatpush1.msra.mxu0 0.0
        %3455 = vmatprep.subr.mxu0 0.0
        %3456 = vmatpush1.msra.mxu0 0.0
        %3457 = vmatprep.subr.mxu0 0.0
        %3458 = vmatpush1.msra.mxu0 0.0
        %3459 = vmatprep.subr.mxu0 0.0
        %3460 = vmatpush1.msra.mxu0 0.0
        %3461 = vmatprep.subr.mxu0 0.0
        %3462 = vmatpush1.msra.mxu0 0.0
        %3463 = vmatprep.subr.mxu0 0.0
        %3464 = vmatpush1.msra.mxu0 0.0
        %3465 = vmatprep.subr.mxu0 0.0
        %3466 = vmatpush1.msra.mxu0 0.0
        %3467 = vmatprep.mubr.f32.mxu0 0.0
        %3468 = vmatmul.mubr.f32.gmra.mrb[0].mxu0 %v3401
        %v3469 = vpop.f32.mrb[0].mxu0
        %v3470 = vadd.f32 0.0, %v3469
        %v3471 = vpop.f32.mrb[0].mxu0
        %3472 = vdwg.mxu0
        %3473 = vrot.lane.b32.xlu0 %v2318, 64
        %v3474 = vpop.permute.xlu0 %3473
        %v3477 = vsel %vm447, %v3015, 0
        %3479 = vmatprep.subr.mxu0 0.0
        %3480 = vmatpush1.msra.mxu0 %v3474
        %3481 = vmatprep.subr.mxu0 0.0
        %3482 = vmatpush1.msra.mxu0 0.0
        %3483 = vmatprep.subr.mxu0 0.0
        %3484 = vmatpush1.msra.mxu0 0.0
        %3485 = vmatprep.subr.mxu0 0.0
        %3486 = vmatpush1.msra.mxu0 0.0
        %3487 = vmatprep.subr.mxu0 0.0
        %3488 = vmatpush1.msra.mxu0 0.0
        %3489 = vmatprep.subr.mxu0 0.0
        %3490 = vmatpush1.msra.mxu0 0.0
        %3491 = vmatprep.subr.mxu0 0.0
        %3492 = vmatpush1.msra.mxu0 0.0
        %3493 = vmatprep.subr.mxu0 0.0
        %3494 = vmatpush1.msra.mxu0 0.0
        %3495 = vmatprep.subr.mxu0 0.0
        %3496 = vmatpush1.msra.mxu0 0.0
        %3497 = vmatprep.subr.mxu0 0.0
        %3498 = vmatpush1.msra.mxu0 0.0
        %3499 = vmatprep.subr.mxu0 0.0
        %3500 = vmatpush1.msra.mxu0 0.0
        %3501 = vmatprep.subr.mxu0 0.0
        %3502 = vmatpush1.msra.mxu0 0.0
        %3503 = vmatprep.subr.mxu0 0.0
        %3504 = vmatpush1.msra.mxu0 0.0
        %3505 = vmatprep.subr.mxu0 0.0
        %3506 = vmatpush1.msra.mxu0 0.0
        %3507 = vmatprep.subr.mxu0 0.0
        %3508 = vmatpush1.msra.mxu0 0.0
        %3509 = vmatprep.subr.mxu0 0.0
        %3510 = vmatpush1.msra.mxu0 0.0
        %3511 = vmatprep.subr.mxu0 0.0
        %3512 = vmatpush1.msra.mxu0 0.0
        %3513 = vmatprep.subr.mxu0 0.0
        %3514 = vmatpush1.msra.mxu0 0.0
        %3515 = vmatprep.subr.mxu0 0.0
        %3516 = vmatpush1.msra.mxu0 0.0
        %3517 = vmatprep.subr.mxu0 0.0
        %3518 = vmatpush1.msra.mxu0 0.0
        %3519 = vmatprep.subr.mxu0 0.0
        %3520 = vmatpush1.msra.mxu0 0.0
        %3521 = vmatprep.subr.mxu0 0.0
        %3522 = vmatpush1.msra.mxu0 0.0
        %3523 = vmatprep.subr.mxu0 0.0
        %3524 = vmatpush1.msra.mxu0 0.0
        %3525 = vmatprep.subr.mxu0 0.0
        %3526 = vmatpush1.msra.mxu0 0.0
        %3527 = vmatprep.subr.mxu0 0.0
        %3528 = vmatpush1.msra.mxu0 0.0
        %3529 = vmatprep.subr.mxu0 0.0
        %3530 = vmatpush1.msra.mxu0 0.0
        %3531 = vmatprep.subr.mxu0 0.0
        %3532 = vmatpush1.msra.mxu0 0.0
        %3533 = vmatprep.subr.mxu0 0.0
        %3534 = vmatpush1.msra.mxu0 0.0
        %3535 = vmatprep.subr.mxu0 0.0
        %3536 = vmatpush1.msra.mxu0 0.0
        %3537 = vmatprep.subr.mxu0 0.0
        %3538 = vmatpush1.msra.mxu0 0.0
        %3539 = vmatprep.subr.mxu0 0.0
        %3540 = vmatpush1.msra.mxu0 0.0
        %3541 = vmatprep.subr.mxu0 0.0
        %3542 = vmatpush1.msra.mxu0 0.0
        %3543 = vmatprep.mubr.f32.mxu0 0.0
        %3544 = vmatmul.mubr.f32.gmra.mrb[0].mxu0 %v3477
        %v3545 = vpop.f32.mrb[0].mxu0
        %v3546 = vadd.f32 0.0, %v3545
        %v3547 = vpop.f32.mrb[0].mxu0
        %3548 = vdwg.mxu0
        %3549 = vrot.lane.b32.xlu0 %v2320, 64
        %v3550 = vpop.permute.xlu0 %3549
        %v3553 = vsel %vm447, %v3016, 0
        %3555 = vmatprep.subr.mxu0 0.0
        %3556 = vmatpush1.msra.mxu0 %v3550
        %3557 = vmatprep.subr.mxu0 0.0
        %3558 = vmatpush1.msra.mxu0 0.0
        %3559 = vmatprep.subr.mxu0 0.0
        %3560 = vmatpush1.msra.mxu0 0.0
        %3561 = vmatprep.subr.mxu0 0.0
        %3562 = vmatpush1.msra.mxu0 0.0
        %3563 = vmatprep.subr.mxu0 0.0
        %3564 = vmatpush1.msra.mxu0 0.0
        %3565 = vmatprep.subr.mxu0 0.0
        %3566 = vmatpush1.msra.mxu0 0.0
        %3567 = vmatprep.subr.mxu0 0.0
        %3568 = vmatpush1.msra.mxu0 0.0
        %3569 = vmatprep.subr.mxu0 0.0
        %3570 = vmatpush1.msra.mxu0 0.0
        %3571 = vmatprep.subr.mxu0 0.0
        %3572 = vmatpush1.msra.mxu0 0.0
        %3573 = vmatprep.subr.mxu0 0.0
        %3574 = vmatpush1.msra.mxu0 0.0
        %3575 = vmatprep.subr.mxu0 0.0
        %3576 = vmatpush1.msra.mxu0 0.0
        %3577 = vmatprep.subr.mxu0 0.0
        %3578 = vmatpush1.msra.mxu0 0.0
        %3579 = vmatprep.subr.mxu0 0.0
        %3580 = vmatpush1.msra.mxu0 0.0
        %3581 = vmatprep.subr.mxu0 0.0
        %3582 = vmatpush1.msra.mxu0 0.0
        %3583 = vmatprep.subr.mxu0 0.0
        %3584 = vmatpush1.msra.mxu0 0.0
        %3585 = vmatprep.subr.mxu0 0.0
        %3586 = vmatpush1.msra.mxu0 0.0
        %3587 = vmatprep.subr.mxu0 0.0
        %3588 = vmatpush1.msra.mxu0 0.0
        %3589 = vmatprep.subr.mxu0 0.0
        %3590 = vmatpush1.msra.mxu0 0.0
        %3591 = vmatprep.subr.mxu0 0.0
        %3592 = vmatpush1.msra.mxu0 0.0
        %3593 = vmatprep.subr.mxu0 0.0
        %3594 = vmatpush1.msra.mxu0 0.0
        %3595 = vmatprep.subr.mxu0 0.0
        %3596 = vmatpush1.msra.mxu0 0.0
        %3597 = vmatprep.subr.mxu0 0.0
        %3598 = vmatpush1.msra.mxu0 0.0
        %3599 = vmatprep.subr.mxu0 0.0
        %3600 = vmatpush1.msra.mxu0 0.0
        %3601 = vmatprep.subr.mxu0 0.0
        %3602 = vmatpush1.msra.mxu0 0.0
        %3603 = vmatprep.subr.mxu0 0.0
        %3604 = vmatpush1.msra.mxu0 0.0
        %3605 = vmatprep.subr.mxu0 0.0
        %3606 = vmatpush1.msra.mxu0 0.0
        %3607 = vmatprep.subr.mxu0 0.0
        %3608 = vmatpush1.msra.mxu0 0.0
        %3609 = vmatprep.subr.mxu0 0.0
        %3610 = vmatpush1.msra.mxu0 0.0
        %3611 = vmatprep.subr.mxu0 0.0
        %3612 = vmatpush1.msra.mxu0 0.0
        %3613 = vmatprep.subr.mxu0 0.0
        %3614 = vmatpush1.msra.mxu0 0.0
        %3615 = vmatprep.subr.mxu0 0.0
        %3616 = vmatpush1.msra.mxu0 0.0
        %3617 = vmatprep.subr.mxu0 0.0
        %3618 = vmatpush1.msra.mxu0 0.0
        %3619 = vmatprep.mubr.f32.mxu0 0.0
        %3620 = vmatmul.mubr.f32.gmra.mrb[0].mxu0 %v3553
        %v3621 = vpop.f32.mrb[0].mxu0
        %v3622 = vadd.f32 0.0, %v3621
        %v3623 = vpop.f32.mrb[0].mxu0
        %3624 = vdwg.mxu0
        %3627 = vrot.lane.b32.xlu0 %v3242, 8
        %v3628 = vpop.permute.xlu0 %3627
        %3629 = vrot.lane.b32.xlu0 %v3318, 8
        %v3630 = vpop.permute.xlu0 %3629
        %3635 = vrot.lane.b32.xlu0 %v3394, 16
        %v3636 = vpop.permute.xlu0 %3635
        %3637 = vrot.lane.b32.xlu0 %v3470, 16
        %v3638 = vpop.permute.xlu0 %3637
        %3643 = vrot.lane.b32.xlu0 %v3546, 24
        %v3644 = vpop.permute.xlu0 %3643
        %3645 = vrot.lane.b32.xlu0 %v3622, 24
        %v3646 = vpop.permute.xlu0 %3645
        %v3649 = vsel %vm447, %v3090, %v3628
        %v3650 = vsel %vm447, %v3166, %v3630
        %v3651 = vsel %vm1776, %v3649, %v3636
        %v3652 = vsel %vm1776, %v3650, %v3638
        %v3653 = vsel %vm1779, %v3651, %v3644
        %v3654 = vsel %vm1779, %v3652, %v3646
        %v3655 = vlaneseq
        %v3656 = vshrl.u32 %v3655, 7
        %v3657 = vsub.s32 0, %v3656
        %v3658 = vrot.slane %v2199, %v3657
        %3663 = vrot.lane.b32.xlu0 %v2185, 32
        %v3664 = vpop.permute.xlu0 %3663
        %3665 = vrot.lane.b32.xlu0 %v2186, 32
        %v3666 = vpop.permute.xlu0 %3665
        %3667 = vrot.lane.b32.xlu0 %v2187, 32
        %v3668 = vpop.permute.xlu0 %3667
        %3669 = vrot.lane.b32.xlu0 %v2188, 32
        %v3670 = vpop.permute.xlu0 %3669
        %v3676 = vsel %vm252, %v3653, 0
        %v3679 = vsel %vm252, %v3654, 0
        %3681 = vmatprep.subr.mxu0 0.0
        %3682 = vmatpush1.msra.mxu0 %v3664
        %3683 = vmatprep.subr.mxu0 0.0
        %3684 = vmatpush1.msra.mxu0 %v3666
        %3685 = vmatprep.subr.mxu0 0.0
        %3686 = vmatpush1.msra.mxu0 %v3668
        %3687 = vmatprep.subr.mxu0 0.0
        %3688 = vmatpush1.msra.mxu0 %v3670
        %3689 = vmatprep.subr.mxu0 0.0
        %3690 = vmatpush1.msra.mxu0 0.0
        %3691 = vmatprep.subr.mxu0 0.0
        %3692 = vmatpush1.msra.mxu0 0.0
        %3693 = vmatprep.subr.mxu0 0.0
        %3694 = vmatpush1.msra.mxu0 0.0
        %3695 = vmatprep.subr.mxu0 0.0
        %3696 = vmatpush1.msra.mxu0 0.0
        %3697 = vmatprep.subr.mxu0 0.0
        %3698 = vmatpush1.msra.mxu0 0.0
        %3699 = vmatprep.subr.mxu0 0.0
        %3700 = vmatpush1.msra.mxu0 0.0
        %3701 = vmatprep.subr.mxu0 0.0
        %3702 = vmatpush1.msra.mxu0 0.0
        %3703 = vmatprep.subr.mxu0 0.0
        %3704 = vmatpush1.msra.mxu0 0.0
        %3705 = vmatprep.subr.mxu0 0.0
        %3706 = vmatpush1.msra.mxu0 0.0
        %3707 = vmatprep.subr.mxu0 0.0
        %3708 = vmatpush1.msra.mxu0 0.0
        %3709 = vmatprep.subr.mxu0 0.0
        %3710 = vmatpush1.msra.mxu0 0.0
        %3711 = vmatprep.subr.mxu0 0.0
        %3712 = vmatpush1.msra.mxu0 0.0
        %3713 = vmatprep.subr.mxu0 0.0
        %3714 = vmatpush1.msra.mxu0 0.0
        %3715 = vmatprep.subr.mxu0 0.0
        %3716 = vmatpush1.msra.mxu0 0.0
        %3717 = vmatprep.subr.mxu0 0.0
        %3718 = vmatpush1.msra.mxu0 0.0
        %3719 = vmatprep.subr.mxu0 0.0
        %3720 = vmatpush1.msra.mxu0 0.0
        %3721 = vmatprep.subr.mxu0 0.0
        %3722 = vmatpush1.msra.mxu0 0.0
        %3723 = vmatprep.subr.mxu0 0.0
        %3724 = vmatpush1.msra.mxu0 0.0
        %3725 = vmatprep.subr.mxu0 0.0
        %3726 = vmatpush1.msra.mxu0 0.0
        %3727 = vmatprep.subr.mxu0 0.0
        %3728 = vmatpush1.msra.mxu0 0.0
        %3729 = vmatprep.subr.mxu0 0.0
        %3730 = vmatpush1.msra.mxu0 0.0
        %3731 = vmatprep.subr.mxu0 0.0
        %3732 = vmatpush1.msra.mxu0 0.0
        %3733 = vmatprep.subr.mxu0 0.0
        %3734 = vmatpush1.msra.mxu0 0.0
        %3735 = vmatprep.subr.mxu0 0.0
        %3736 = vmatpush1.msra.mxu0 0.0
        %3737 = vmatprep.subr.mxu0 0.0
        %3738 = vmatpush1.msra.mxu0 0.0
        %3739 = vmatprep.subr.mxu0 0.0
        %3740 = vmatpush1.msra.mxu0 0.0
        %3741 = vmatprep.subr.mxu0 0.0
        %3742 = vmatpush1.msra.mxu0 0.0
        %3743 = vmatprep.subr.mxu0 0.0
        %3744 = vmatpush1.msra.mxu0 0.0
        %3745 = vmatprep.mubr.f32.mxu0 0.0
        %3746 = vmatmul.mubr.f32.gmra.mrb[0].mxu0 %v3676
        %v3747 = vpop.f32.mrb[0].mxu0
        %v3748 = vadd.f32 %v3658, %v3747
        %v3749 = vpop.f32.mrb[0].mxu0
        %3750 = vmatprep.mubr.f32.mxu0 0.0
        %3751 = vmatmul.mubr.f32.gmra.mrb[0].mxu0 %v3679
        %v3752 = vpop.f32.mrb[0].mxu0
        %v3753 = vadd.f32 %v3658, %v3752
        %v3754 = vpop.f32.mrb[0].mxu0
        %3755 = vdwg.mxu0
        %v3756 = vadd.f32 %v3748, %v2182
        %v3757 = vadd.f32 %v3753, %v2183
        %v3758 = vsel %vm252, %v3756, 0.0
        %3759 = vadd.xlane.f32.xlu0 %v3758
        %v3760 = vpop.xlane.xlu0 %3759
        %v3761 = vsel %vm252, %v3757, 0.0
        %3762 = vadd.xlane.f32.xlu0 %v3761
        %v3763 = vpop.xlane.xlu0 %3762
        %v3764 = vmul.f32 %v3760, %v259
        %v3765 = vmul.f32 %v3763, %v259
        %v3766 = vsub.f32 %v3756, %v3764
        %v3767 = vsub.f32 %v3757, %v3765
        %v3768 = vmul.f32 %v3766, %v3766
        %v3769 = vmul.f32 %v3767, %v3767
        %v3770 = vsel %vm252, %v3768, 0.0
        %3771 = vadd.xlane.f32.xlu0 %v3770
        %v3772 = vpop.xlane.xlu0 %3771
        %v3773 = vsel %vm252, %v3769, 0.0
        %3774 = vadd.xlane.f32.xlu0 %v3773
        %v3775 = vpop.xlane.xlu0 %3774
        %v3776 = vmul.f32 %v3772, %v259
        %v3777 = vmul.f32 %v3775, %v259
        %v3778 = vadd.f32 %v3776, 1e-12
        %v3779 = vadd.f32 %v3777, 1e-12
        %v3780 = vrsqrt.pop %v3778
        %v3781 = vrsqrt.pop %v3779
        %v3782 = vmul.f32 %v3766, %v3780
        %v3783 = vmul.f32 %v3767, %v3781
        %v3784 = vlaneseq
        %v3785 = vshrl.u32 %v3784, 7
        %v3786 = vsub.s32 0, %v3785
        %v3787 = vrot.slane %v2200, %v3786
        %v3788 = vmul.f32 %v3782, %v3787
        %v3789 = vmul.f32 %v3783, %v3787
        %v3790 = vlaneseq
        %v3791 = vshrl.u32 %v3790, 7
        %v3792 = vsub.s32 0, %v3791
        %v3793 = vrot.slane %v2201, %v3792
        %v3794 = vadd.f32 %v3788, %v3793
        %v3795 = vadd.f32 %v3789, %v3793
        %v3796 = vlaneseq
        %v3797 = vshrl.u32 %v3796, 7
        %v3798 = vsub.s32 0, %v3797
        %v3799 = vrot.slane %v2202, %v3798
        %v3801 = vsel %vm252, %v3794, 0
        %v3804 = vsel %vm252, %v3795, 0
        %3806 = vmatprep.subr.mxu0 0.0
        %3807 = vmatpush1.msra.mxu0 %v2189
        %3808 = vmatprep.subr.mxu0 0.0
        %3809 = vmatpush1.msra.mxu0 %v2190
        %3810 = vmatprep.subr.mxu0 0.0
        %3811 = vmatpush1.msra.mxu0 %v2191
        %3812 = vmatprep.subr.mxu0 0.0
        %3813 = vmatpush1.msra.mxu0 %v2192
        %3814 = vmatprep.subr.mxu0 0.0
        %3815 = vmatpush1.msra.mxu0 0.0
        %3816 = vmatprep.subr.mxu0 0.0
        %3817 = vmatpush1.msra.mxu0 0.0
        %3818 = vmatprep.subr.mxu0 0.0
        %3819 = vmatpush1.msra.mxu0 0.0
        %3820 = vmatprep.subr.mxu0 0.0
        %3821 = vmatpush1.msra.mxu0 0.0
        %3822 = vmatprep.subr.mxu0 0.0
        %3823 = vmatpush1.msra.mxu0 0.0
        %3824 = vmatprep.subr.mxu0 0.0
        %3825 = vmatpush1.msra.mxu0 0.0
        %3826 = vmatprep.subr.mxu0 0.0
        %3827 = vmatpush1.msra.mxu0 0.0
        %3828 = vmatprep.subr.mxu0 0.0
        %3829 = vmatpush1.msra.mxu0 0.0
        %3830 = vmatprep.subr.mxu0 0.0
        %3831 = vmatpush1.msra.mxu0 0.0
        %3832 = vmatprep.subr.mxu0 0.0
        %3833 = vmatpush1.msra.mxu0 0.0
        %3834 = vmatprep.subr.mxu0 0.0
        %3835 = vmatpush1.msra.mxu0 0.0
        %3836 = vmatprep.subr.mxu0 0.0
        %3837 = vmatpush1.msra.mxu0 0.0
        %3838 = vmatprep.subr.mxu0 0.0
        %3839 = vmatpush1.msra.mxu0 0.0
        %3840 = vmatprep.subr.mxu0 0.0
        %3841 = vmatpush1.msra.mxu0 0.0
        %3842 = vmatprep.subr.mxu0 0.0
        %3843 = vmatpush1.msra.mxu0 0.0
        %3844 = vmatprep.subr.mxu0 0.0
        %3845 = vmatpush1.msra.mxu0 0.0
        %3846 = vmatprep.subr.mxu0 0.0
        %3847 = vmatpush1.msra.mxu0 0.0
        %3848 = vmatprep.subr.mxu0 0.0
        %3849 = vmatpush1.msra.mxu0 0.0
        %3850 = vmatprep.subr.mxu0 0.0
        %3851 = vmatpush1.msra.mxu0 0.0
        %3852 = vmatprep.subr.mxu0 0.0
        %3853 = vmatpush1.msra.mxu0 0.0
        %3854 = vmatprep.subr.mxu0 0.0
        %3855 = vmatpush1.msra.mxu0 0.0
        %3856 = vmatprep.subr.mxu0 0.0
        %3857 = vmatpush1.msra.mxu0 0.0
        %3858 = vmatprep.subr.mxu0 0.0
        %3859 = vmatpush1.msra.mxu0 0.0
        %3860 = vmatprep.subr.mxu0 0.0
        %3861 = vmatpush1.msra.mxu0 0.0
        %3862 = vmatprep.subr.mxu0 0.0
        %3863 = vmatpush1.msra.mxu0 0.0
        %3864 = vmatprep.subr.mxu0 0.0
        %3865 = vmatpush1.msra.mxu0 0.0
        %3866 = vmatprep.subr.mxu0 0.0
        %3867 = vmatpush1.msra.mxu0 0.0
        %3868 = vmatprep.subr.mxu0 0.0
        %3869 = vmatpush1.msra.mxu0 0.0
        %3870 = vmatprep.mubr.f32.mxu0 0.0
        %3871 = vmatmul.mubr.f32.gmra.mrb[0].mxu0 %v3801
        %v3872 = vpop.f32.mrb[0].mxu0
        %v3873 = vadd.f32 %v3799, %v3872
        %v3874 = vpop.f32.mrb[0].mxu0
        %3875 = vmatprep.mubr.f32.mxu0 0.0
        %3876 = vmatmul.mubr.f32.gmra.mrb[0].mxu0 %v3804
        %v3877 = vpop.f32.mrb[0].mxu0
        %v3878 = vadd.f32 %v3799, %v3877
        %v3879 = vpop.f32.mrb[0].mxu0
        %3880 = vdwg.mxu0
        %v3881 = vmul.f32 %v3873, %v3873
        %v3882 = vmul.f32 %v3878, %v3878
        %v3883 = vmul.f32 %v3873, %v3881
        %v3884 = vmul.f32 %v3878, %v3882
        %v3885 = vmul.f32 %v3883, 0.044715
        %v3886 = vmul.f32 %v3884, 0.044715
        %v3887 = vadd.f32 %v3873, %v3885
        %v3888 = vadd.f32 %v3878, %v3886
        %v3889 = vmul.f32 %v3887, 0.7978846
        %v3890 = vmul.f32 %v3888, 0.7978846
        %v3891 = vtanh.pop %v3889
        %v3892 = vtanh.pop %v3890
        %v3893 = vadd.f32 %v3891, 1.0
        %v3894 = vadd.f32 %v3892, 1.0
        %v3895 = vmul.f32 %v3893, 0.5
        %v3896 = vmul.f32 %v3894, 0.5
        %v3897 = vmul.f32 %v3873, %v3895
        %v3898 = vmul.f32 %v3878, %v3896
        %v3899 = vlaneseq
        %v3900 = vshrl.u32 %v3899, 7
        %v3901 = vsub.s32 0, %v3900
        %v3902 = vrot.slane %v2203, %v3901
        %3911 = vrot.lane.b32.xlu0 %v2189, 64
        %v3912 = vpop.permute.xlu0 %3911
        %3913 = vrot.lane.b32.xlu0 %v2190, 64
        %v3914 = vpop.permute.xlu0 %3913
        %3915 = vrot.lane.b32.xlu0 %v2191, 64
        %v3916 = vpop.permute.xlu0 %3915
        %3917 = vrot.lane.b32.xlu0 %v2192, 64
        %v3918 = vpop.permute.xlu0 %3917
        %3919 = vrot.lane.b32.xlu0 %v2193, 64
        %v3920 = vpop.permute.xlu0 %3919
        %3921 = vrot.lane.b32.xlu0 %v2194, 64
        %v3922 = vpop.permute.xlu0 %3921
        %3923 = vrot.lane.b32.xlu0 %v2195, 64
        %v3924 = vpop.permute.xlu0 %3923
        %3925 = vrot.lane.b32.xlu0 %v2196, 64
        %v3926 = vpop.permute.xlu0 %3925
        %v3936 = vsel %vm2062, %v3897, 0
        %v3939 = vsel %vm2062, %v3898, 0
        %3941 = vmatprep.subr.mxu0 0.0
        %3942 = vmatpush1.msra.mxu0 %v3912
        %3943 = vmatprep.subr.mxu0 0.0
        %3944 = vmatpush1.msra.mxu0 %v3914
        %3945 = vmatprep.subr.mxu0 0.0
        %3946 = vmatpush1.msra.mxu0 %v3916
        %3947 = vmatprep.subr.mxu0 0.0
        %3948 = vmatpush1.msra.mxu0 %v3918
        %3949 = vmatprep.subr.mxu0 0.0
        %3950 = vmatpush1.msra.mxu0 %v3920
        %3951 = vmatprep.subr.mxu0 0.0
        %3952 = vmatpush1.msra.mxu0 %v3922
        %3953 = vmatprep.subr.mxu0 0.0
        %3954 = vmatpush1.msra.mxu0 %v3924
        %3955 = vmatprep.subr.mxu0 0.0
        %3956 = vmatpush1.msra.mxu0 %v3926
        %3957 = vmatprep.subr.mxu0 0.0
        %3958 = vmatpush1.msra.mxu0 0.0
        %3959 = vmatprep.subr.mxu0 0.0
        %3960 = vmatpush1.msra.mxu0 0.0
        %3961 = vmatprep.subr.mxu0 0.0
        %3962 = vmatpush1.msra.mxu0 0.0
        %3963 = vmatprep.subr.mxu0 0.0
        %3964 = vmatpush1.msra.mxu0 0.0
        %3965 = vmatprep.subr.mxu0 0.0
        %3966 = vmatpush1.msra.mxu0 0.0
        %3967 = vmatprep.subr.mxu0 0.0
        %3968 = vmatpush1.msra.mxu0 0.0
        %3969 = vmatprep.subr.mxu0 0.0
        %3970 = vmatpush1.msra.mxu0 0.0
        %3971 = vmatprep.subr.mxu0 0.0
        %3972 = vmatpush1.msra.mxu0 0.0
        %3973 = vmatprep.subr.mxu0 0.0
        %3974 = vmatpush1.msra.mxu0 0.0
        %3975 = vmatprep.subr.mxu0 0.0
        %3976 = vmatpush1.msra.mxu0 0.0
        %3977 = vmatprep.subr.mxu0 0.0
        %3978 = vmatpush1.msra.mxu0 0.0
        %3979 = vmatprep.subr.mxu0 0.0
        %3980 = vmatpush1.msra.mxu0 0.0
        %3981 = vmatprep.subr.mxu0 0.0
        %3982 = vmatpush1.msra.mxu0 0.0
        %3983 = vmatprep.subr.mxu0 0.0
        %3984 = vmatpush1.msra.mxu0 0.0
        %3985 = vmatprep.subr.mxu0 0.0
        %3986 = vmatpush1.msra.mxu0 0.0
        %3987 = vmatprep.subr.mxu0 0.0
        %3988 = vmatpush1.msra.mxu0 0.0
        %3989 = vmatprep.subr.mxu0 0.0
        %3990 = vmatpush1.msra.mxu0 0.0
        %3991 = vmatprep.subr.mxu0 0.0
        %3992 = vmatpush1.msra.mxu0 0.0
        %3993 = vmatprep.subr.mxu0 0.0
        %3994 = vmatpush1.msra.mxu0 0.0
        %3995 = vmatprep.subr.mxu0 0.0
        %3996 = vmatpush1.msra.mxu0 0.0
        %3997 = vmatprep.subr.mxu0 0.0
        %3998 = vmatpush1.msra.mxu0 0.0
        %3999 = vmatprep.subr.mxu0 0.0
        %4000 = vmatpush1.msra.mxu0 0.0
        %4001 = vmatprep.subr.mxu0 0.0
        %4002 = vmatpush1.msra.mxu0 0.0
        %4003 = vmatprep.subr.mxu0 0.0
        %4004 = vmatpush1.msra.mxu0 0.0
        %4005 = vmatprep.mubr.f32.mxu0 0.0
        %4006 = vmatmul.mubr.f32.gmra.mrb[0].mxu0 %v3936
        %v4007 = vpop.f32.mrb[0].mxu0
        %v4008 = vadd.f32 %v3902, %v4007
        %v4009 = vpop.f32.mrb[0].mxu0
        %4010 = vmatprep.mubr.f32.mxu0 0.0
        %4011 = vmatmul.mubr.f32.gmra.mrb[0].mxu0 %v3939
        %v4012 = vpop.f32.mrb[0].mxu0
        %v4013 = vadd.f32 %v3902, %v4012
        %v4014 = vpop.f32.mrb[0].mxu0
        %4015 = vdwg.mxu0
        %v4016 = vadd.f32 %v4008, %v3794
        %v4017 = vadd.f32 %v4013, %v3795
        %v4018 = vsel %vm252, %v4016, 0.0
        %4019 = vadd.xlane.f32.xlu0 %v4018
        %v4020 = vpop.xlane.xlu0 %4019
        %v4021 = vsel %vm252, %v4017, 0.0
        %4022 = vadd.xlane.f32.xlu0 %v4021
        %v4023 = vpop.xlane.xlu0 %4022
        %v4024 = vmul.f32 %v4020, %v259
        %v4025 = vmul.f32 %v4023, %v259
        %v4026 = vsub.f32 %v4016, %v4024
        %v4027 = vsub.f32 %v4017, %v4025
        %v4028 = vmul.f32 %v4026, %v4026
        %v4029 = vmul.f32 %v4027, %v4027
        %v4030 = vsel %vm252, %v4028, 0.0
        %4031 = vadd.xlane.f32.xlu0 %v4030
        %v4032 = vpop.xlane.xlu0 %4031
        %v4033 = vsel %vm252, %v4029, 0.0
        %4034 = vadd.xlane.f32.xlu0 %v4033
        %v4035 = vpop.xlane.xlu0 %4034
        %v4036 = vmul.f32 %v4032, %v259
        %v4037 = vmul.f32 %v4035, %v259
        %v4038 = vadd.f32 %v4036, 1e-12
        %v4039 = vadd.f32 %v4037, 1e-12
        %v4040 = vrsqrt.pop %v4038
        %v4041 = vrsqrt.pop %v4039
        %v4042 = vmul.f32 %v4026, %v4040
        %v4043 = vmul.f32 %v4027, %v4041
        %v4044 = vlaneseq
        %v4045 = vshrl.u32 %v4044, 7
        %v4046 = vsub.s32 0, %v4045
        %v4047 = vrot.slane %v2204, %v4046
        %v4048 = vmul.f32 %v4042, %v4047
        %v4049 = vmul.f32 %v4043, %v4047
        %v4050 = vlaneseq
        %v4051 = vshrl.u32 %v4050, 7
        %v4052 = vsub.s32 0, %v4051
        %v4053 = vrot.slane %v2205, %v4052
        %v4054 = vadd.f32 %v4048, %v4053
        %v4055 = vadd.f32 %v4049, %v4053
        %v4056 = vld [vmem:[%s4 + $0x18] sm:$0xff]
        %v4057 = vld [vmem:[%s4 + $0x20] sm:$0xff]
        %v4058 = vld [vmem:[%s4 + $0x28] sm:$0xff]
        %v4059 = vld [vmem:[%s4 + $0x30] sm:$0xff]
        %v4060 = vld [vmem:[%s4 + $0x12] sm:$0x1]
        %v4061 = vlaneseq
        %v4062 = vshrl.u32 %v4061, 7
        %v4063 = vsub.s32 0, %v4062
        %v4064 = vrot.slane %v4060, %v4063
        %v4067 = vrot.slane %v4055, 7
        %vm4068 = vcmask 1041409
        %v4069 = vsel %vm4068, %v4067, %v4054
        %v4070 = vsel %vm252, %v4069, 0
        %4072 = vmatprep.subr.mxu0 0.0
        %4073 = vmatpush1.msra.mxu0 %v4056
        %4074 = vmatprep.subr.mxu0 0.0
        %4075 = vmatpush1.msra.mxu0 %v4057
        %4076 = vmatprep.subr.mxu0 0.0
        %4077 = vmatpush1.msra.mxu0 %v4058
        %4078 = vmatprep.subr.mxu0 0.0
        %4079 = vmatpush1.msra.mxu0 %v4059
        %4080 = vmatprep.subr.mxu0 0.0
        %4081 = vmatpush1.msra.mxu0 0.0
        %4082 = vmatprep.subr.mxu0 0.0
        %4083 = vmatpush1.msra.mxu0 0.0
        %4084 = vmatprep.subr.mxu0 0.0
        %4085 = vmatpush1.msra.mxu0 0.0
        %4086 = vmatprep.subr.mxu0 0.0
        %4087 = vmatpush1.msra.mxu0 0.0
        %4088 = vmatprep.subr.mxu0 0.0
        %4089 = vmatpush1.msra.mxu0 0.0
        %4090 = vmatprep.subr.mxu0 0.0
        %4091 = vmatpush1.msra.mxu0 0.0
        %4092 = vmatprep.subr.mxu0 0.0
        %4093 = vmatpush1.msra.mxu0 0.0
        %4094 = vmatprep.subr.mxu0 0.0
        %4095 = vmatpush1.msra.mxu0 0.0
        %4096 = vmatprep.subr.mxu0 0.0
        %4097 = vmatpush1.msra.mxu0 0.0
        %4098 = vmatprep.subr.mxu0 0.0
        %4099 = vmatpush1.msra.mxu0 0.0
        %4100 = vmatprep.subr.mxu0 0.0
        %4101 = vmatpush1.msra.mxu0 0.0
        %4102 = vmatprep.subr.mxu0 0.0
        %4103 = vmatpush1.msra.mxu0 0.0
        %4104 = vmatprep.subr.mxu0 0.0
        %4105 = vmatpush1.msra.mxu0 0.0
        %4106 = vmatprep.subr.mxu0 0.0
        %4107 = vmatpush1.msra.mxu0 0.0
        %4108 = vmatprep.subr.mxu0 0.0
        %4109 = vmatpush1.msra.mxu0 0.0
        %4110 = vmatprep.subr.mxu0 0.0
        %4111 = vmatpush1.msra.mxu0 0.0
        %4112 = vmatprep.subr.mxu0 0.0
        %4113 = vmatpush1.msra.mxu0 0.0
        %4114 = vmatprep.subr.mxu0 0.0
        %4115 = vmatpush1.msra.mxu0 0.0
        %4116 = vmatprep.subr.mxu0 0.0
        %4117 = vmatpush1.msra.mxu0 0.0
        %4118 = vmatprep.subr.mxu0 0.0
        %4119 = vmatpush1.msra.mxu0 0.0
        %4120 = vmatprep.subr.mxu0 0.0
        %4121 = vmatpush1.msra.mxu0 0.0
        %4122 = vmatprep.subr.mxu0 0.0
        %4123 = vmatpush1.msra.mxu0 0.0
        %4124 = vmatprep.subr.mxu0 0.0
        %4125 = vmatpush1.msra.mxu0 0.0
        %4126 = vmatprep.subr.mxu0 0.0
        %4127 = vmatpush1.msra.mxu0 0.0
        %4128 = vmatprep.subr.mxu0 0.0
        %4129 = vmatpush1.msra.mxu0 0.0
        %4130 = vmatprep.subr.mxu0 0.0
        %4131 = vmatpush1.msra.mxu0 0.0
        %4132 = vmatprep.subr.mxu0 0.0
        %4133 = vmatpush1.msra.mxu0 0.0
        %4134 = vmatprep.subr.mxu0 0.0
        %4135 = vmatpush1.msra.mxu0 0.0
        %4136 = vmatprep.mubr.f32.mxu0 0.0
        %4137 = vmatmul.mubr.f32.gmra.mrb[0].mxu0 %v4070
        %v4138 = vpop.f32.mrb[0].mxu0
        %v4139 = vadd.f32 %v4064, %v4138
        %v4140 = vpop.f32.mrb[0].mxu0
        %4141 = vdwg.mxu0
        %v4144 = vunpack.c.l.s4 1966171168
        %v4145 = vunpack.c.0.s8 %v4144
        %v4146 = vlaneseq
        %v4147 = vshrl.u32 %v4146, 7
        %v4148 = vsub.s32 %v4145, %v4147
        %v4149 = vrot.slane %v4139, %v4148
        %v4150 = vcombine.high %v4149, %v4149
        %v4152 = vunpack.c.l.s4 1966171168
        %v4153 = vunpack.c.0.s8 %v4152
        %v4154 = vlaneseq
        %v4155 = vshrl.u32 %v4154, 7
        %v4156 = vsub.s32 %v4153, %v4155
        %v4157 = vrot.slane %v4149, %v4156
        %v4159 = vunpack.c.l.s4 1966171168
        %v4160 = vunpack.c.0.s8 %v4159
        %v4161 = vlaneseq
        %v4162 = vshrl.u32 %v4161, 7
        %v4163 = vsub.s32 %v4160, %v4162
        %v4164 = vrot.slane %v4150, %v4163
        %4167 = vst [vmem:[%s232] sm:$0x1] %v4157
        %4168 = vst [vmem:[%s232 + $0x1] sm:$0x1] %v4164
        %s4169 = sand.u32 %s142, 1
        %s4170 = scalar_lea.sflag [#allocation3], %s4169
        %s4171 = sand.u32 %s142, 1
        %s4172 = smul.addr %s4171, 2
        %s4173 = scalar_lea.vmem [#allocation2], %s4172
        // Predicated region
        $region41: #{text_encoder_forward.1} parent=39 // pred_check
          %p4174 = pneg %p152
        $region42: #{text_encoder_forward.1} parent=39 // pred_check_branch
          %4176 = sbr.rel (%p4174) target = $region44
        $region43: #{text_encoder_forward.1} parent=39 // pred_region
          %s4177 = smul.u32 2, %s19
          %s4179 = ssub.s32 32, 32
          %4180 = vsyncadd %s4170, %s4179
          %s4181 = smul.addr %s4177, 16
          %s4182 = scalar_lea.hbm %s5, %s4181
          %s4183 = sshll.u32 %s4173, 4
          %s4184 = int_to_ptr.vmem [resolvable:$true] %s4183
          %4189 = dma.vmem_to_hbm [thread:$0]  %s4184, 32, %s4182, %s4170, 16, 16, 1
        $region44: #{text_encoder_forward.1} parent=39 // pred_fallthru
          _
      $region40: #{text_encoder_forward.1} parent=5 // pred_fallthru
        _
      %p4190 = scmp.le.s32.totalorder 2, %s14
      // Predicated region
      $region45: #{text_encoder_forward.1} parent=5 // pred_check
        %p4191 = pneg %p4190
      $region46: #{text_encoder_forward.1} parent=5 // pred_check_branch
        %4193 = sbr.rel (%p4191) target = $region48
      $region47: #{text_encoder_forward.1} parent=5 // pred_region
        %s4194 = ssub.s32 %s14, 2
        // Predicated region
        $region49: #{text_encoder_forward.1} parent=47 // pred_check
          %p4195 = pneg %p158
        $region50: #{text_encoder_forward.1} parent=47 // pred_check_branch
          %4197 = sbr.rel (%p4195) target = $region52
        $region51: #{text_encoder_forward.1} parent=47 // pred_region
          %s4198 = sand.u32 %s143, 1
          %s4199 = scalar_lea.sflag [#allocation3], %s4198
          %s4200 = sand.u32 %s143, 1
          %s4201 = smul.addr %s4200, 2
          %s4202 = scalar_lea.vmem [#allocation2], %s4201
          %4203 = dma.done %s4199, 32
        $region52: #{text_encoder_forward.1} parent=47 // pred_fallthru
          _
      $region48: #{text_encoder_forward.1} parent=5 // pred_fallthru
        _
    $region6: #{text_encoder_forward.1} parent=1 // loop_footer
      %s18 = sadd.s32 1, %s14
    $region7: #{text_encoder_forward.1} parent=1 // loop_footer_branch
      %13 = sbr.rel target = $region3
    $region8: #{text_encoder_forward.1} parent=1 // loop_exit
      _
    %4204 = vsyncpa [#allocation3], 1
    %s4205 = scalar_lea.sflag [#allocation3], 1
    %4206 = vsyncpa %s4205, 1

</llo_original>
